<compile_context>
chip_gen: v7x
topology: tpu7x:2x2x1
jax: 0.10.0
libtpu: 0.0.40
codegen_flags: <defaults>
</compile_context>

<pallas_src>
import math

import jax
import jax.numpy as jnp
from jax.experimental import pallas as pl
from jax.experimental.pallas import tpu as pltpu


def _pick_th(H, B, target_steps=4, row_cap=64):
    """Largest divisor of H (<= row_cap) giving >= target_steps grid steps
    (>= 2 per TensorCore on v7x megacore); falls back to the largest divisor."""
    best = None
    for th in range(min(H, row_cap), 0, -1):
        if H % th == 0:
            if best is None:
                best = th
            if B * (H // th) >= target_steps:
                return th
    return best if best is not None else H


def _vmem_limit(block_bytes):
    # double-buffered blocks + compiler slack, clamped for v7x's 64 MiB/TC VMEM.
    return int(min(48 * 2**20, max(8 * 2**20, 4 * block_bytes)))


# ---------------------------------------------------------------------------
# Fused two-layer kernel: conv3x3 -> [record | hook-relu + mixup blend] -> ReLU
#                          -> conv3x3 -> [record | hook-relu + mixup blend]
# im2col is formed in VMEM from halo'd row windows; the inter-layer activation
# never touches HBM.
# ---------------------------------------------------------------------------
def _make_fused_kernel(*, H, W, Cin, C1, C2, th, record, mix1, mix2,
                       hook_relu, blend_mode):
    assert not (record and (mix1 or mix2))
    TH2 = th + 2

    def conv3x3(src, w_ref, b_ref, rows):
        # src: (rows+2, W+2, C_in) value; returns (rows, W, C_out) float32.
        acc = None
        for dh in range(3):
            for dw in range(3):
                sl = src[dh:dh + rows, dw:dw + W, :]
                sl = sl.reshape(rows * W, sl.shape[-1]).astype(jnp.bfloat16)
                t = jnp.dot(sl, w_ref[dh * 3 + dw],
                            preferred_element_type=jnp.float32)
                acc = t if acc is None else acc + t
        return acc.reshape(rows, W, acc.shape[-1]) + b_ref[...]

    def kernel(*refs):
        i = 0

        def nxt():
            nonlocal i
            ref = refs[i]
            i += 1
            return ref

        x_ref, w1_ref, b1_ref, w2_ref, b2_ref = nxt(), nxt(), nxt(), nxt(), nxt()
        p1_ref = a1_ref = p2_ref = a2_ref = None
        if mix1:
            p1_ref, a1_ref = nxt(), nxt()
        if mix2:
            p2_ref, a2_ref = nxt(), nxt()
        o_ref = nxt()
        r1_ref = r2_ref = None
        if record:
            r1_ref, r2_ref = nxt(), nxt()

        r = pl.program_id(1)
        r0 = pl.multiple_of(r * th, th)

        # ---- layer 1: conv over the halo'd row window [r0-1, r0+th+1) ----
        xwin = x_ref[pl.ds(r0, th + 4), :, :]            # (th+4, W+2, Cin) f32
        f1 = conv3x3(xwin, w1_ref, b1_ref, TH2)          # (TH2, W, C1) pre-ReLU

        if record:                                       # hook: stash raw conv output
            r1_ref[...] = f1[1:th + 1].astype(r1_ref.dtype)

        if mix1:                                         # hook: feature-mixup blend
            if hook_relu:                                # mixup_layer == 'relu'
                f1 = jnp.maximum(f1, 0.0)
            prev1 = p1_ref[pl.ds(r0, TH2), :, :].astype(jnp.float32)
            al1 = a1_ref[...]                            # (1, C1), broadcast
            if blend_mode == 'M':
                f1 = (1.0 - al1) * f1 + al1 * prev1
            else:                                        # 'A'
                f1 = f1 + al1 * prev1

        # model inter-layer ReLU, then zero the out-of-image halo rows so they act
        # as conv2's 'SAME' zero padding.
        h1 = jnp.maximum(f1, 0.0)
        gl_row = r0 - 1 + jax.lax.broadcasted_iota(jnp.int32, (TH2, W, 1), 0)
        h1 = jnp.where(jnp.logical_and(gl_row >= 0, gl_row < H), h1, 0.0)

        zc = jnp.zeros((TH2, 1, C1), jnp.float32)        # zero column padding
        h1p = jnp.concatenate([zc, h1, zc], axis=1)      # (TH2, W+2, C1) in VMEM

        # ---- layer 2 ----
        f2 = conv3x3(h1p, w2_ref, b2_ref, th)            # (th, W, C2)

        if record:
            r2_ref[...] = f2.astype(r2_ref.dtype)
        if mix2:
            if hook_relu:
                f2 = jnp.maximum(f2, 0.0)
            prev2 = p2_ref[...].astype(jnp.float32)      # (th, W, C2)
            al2 = a2_ref[...]
            if blend_mode == 'M':
                f2 = (1.0 - al2) * f2 + al2 * prev2
            else:
                f2 = f2 + al2 * prev2

        # conv2 is the model's last layer -> no trailing ReLU.
        o_ref[...] = f2.astype(o_ref.dtype)

    return kernel


def fused_two_conv(x_nhwc, packed, *, record, mix1=False, mix2=False,
                   prev1=None, a1=None, prev2=None, a2=None,
                   hook_relu=False, blend_mode='M'):
    """Fused 2x (3x3 / stride 1 / 'SAME') conv forward with fused mixup hooks.

    x_nhwc : (B, H, W, Cin) f32
    packed : ((9, Cin, C1) bf16, (1, C1) f32), ((9, C1, C2) bf16, (1, C2) f32)
    prev*  : bf16 recorded features (B, H, W, C*) (already shuffled)
    a*     : f32 (B, 1, C*) mix coefficients (mix-prob gate folded in)
    """
    B, H, W, Cin = x_nhwc.shape
    (w1, b1), (w2, b2) = packed
    C1, C2 = w1.shape[2], w2.shape[2]
    # TODO(synk): assumes W % 8 == 0 (vreg sublane granularity) and H has a small
    # divisor; true for typical CNN feature maps and the synthetic model here.
    assert W % 8 == 0
    th = _pick_th(H, B)
    R = H // th

    # zero 'SAME' padding for the fused receptive field: 2 rows / 1 col per side.
    xp = jnp.pad(x_nhwc.astype(jnp.float32), ((0, 0), (2, 2), (1, 1), (0, 0)))

    kern = _make_fused_kernel(H=H, W=W, Cin=Cin, C1=C1, C2=C2, th=th,
                              record=record, mix1=mix1, mix2=mix2,
                              hook_relu=hook_relu, blend_mode=blend_mode)

    in_specs = [
        pl.BlockSpec((None, H + 4, W + 2, Cin), lambda b, r: (b, 0, 0, 0)),
        pl.BlockSpec((9, Cin, C1), lambda b, r: (0, 0, 0)),
        pl.BlockSpec((1, C1), lambda b, r: (0, 0)),
        pl.BlockSpec((9, C1, C2), lambda b, r: (0, 0, 0)),
        pl.BlockSpec((1, C2), lambda b, r: (0, 0)),
    ]
    args = [xp, w1, b1, w2, b2]
    if mix1:
        # one zero halo row top/bottom so the layer-1 blend can cover halo rows
        prev1p = jnp.pad(prev1, ((0, 0), (1, 1), (0, 0), (0, 0)))
        in_specs += [pl.BlockSpec((None, H + 2, W, C1), lambda b, r: (b, 0, 0, 0)),
                     pl.BlockSpec((None, 1, C1), lambda b, r: (b, 0, 0))]
        args += [prev1p, a1]
    if mix2:
        in_specs += [pl.BlockSpec((None, th, W, C2), lambda b, r: (b, r, 0, 0)),
                     pl.BlockSpec((None, 1, C2), lambda b, r: (b, 0, 0))]
        args += [prev2, a2]

    out_shape = [jax.ShapeDtypeStruct((B, H, W, C2), jnp.float32)]
    out_specs = [pl.BlockSpec((None, th, W, C2), lambda b, r: (b, r, 0, 0))]
    if record:
        out_shape += [jax.ShapeDtypeStruct((B, H, W, C1), jnp.bfloat16),
                      jax.ShapeDtypeStruct((B, H, W, C2), jnp.bfloat16)]
        out_specs += [pl.BlockSpec((None, th, W, C1), lambda b, r: (b, r, 0, 0)),
                      pl.BlockSpec((None, th, W, C2), lambda b, r: (b, r, 0, 0))]

    blk_bytes = ((H + 4) * (W + 2) * Cin * 4
                 + 9 * (Cin * C1 + C1 * C2) * 2 + (C1 + C2) * 4
                 + th * W * C2 * 4
                 + th * W * (C1 + C2) * 2
                 + (H + 2) * W * C1 * 2 + th * W * C2 * 2
                 + (C1 + C2) * 4)
    out_bytes = sum(math.prod(s.shape) * jnp.dtype(s.dtype).itemsize for s in out_shape)
    in_bytes = sum(int(a.size) * a.dtype.itemsize for a in args)
    cost = pl.CostEstimate(flops=2 * B * H * W * 9 * (Cin * C1 + C1 * C2),
                           transcendentals=0,
                           bytes_accessed=int(in_bytes + out_bytes))

    outs = pl.pallas_call(
        kern,
        out_shape=tuple(out_shape),
        grid=(B, R),
        in_specs=in_specs,
        out_specs=tuple(out_specs),
        compiler_params=pltpu.CompilerParams(
            dimension_semantics=("parallel", "parallel"),
            vmem_limit_bytes=_vmem_limit(blk_bytes)),
        cost_estimate=cost,
    )(*args)
    if record:
        return outs                       # (out_f32, rec1_bf16, rec2_bf16)
    return outs[0]


# ---------------------------------------------------------------------------
# FeatureMixup wrapper (JAX port).  The wrapped "model" is the small synthetic
# CNN conv3x3(Cin->C1) -> ReLU -> conv3x3(C1->C2); the forward-hook logic is
# applied at both convs, exactly where register_forward_hook would attach.
# ---------------------------------------------------------------------------
EXP_CONFIG = {
    0: dict(mixup_layer='conv_linear_no_last', channelwise=True,
            mix_upper_bound_feature=0.75, mix_lower_bound_feature=0.5,
            shuffle_image_feature='SelfShuffle', blending_mode_feature='M',
            mixed_image_type_feature='B', divisor=1, every_layer=False),
}


class FeatureMixup:
    # TODO(synk): torch.nn.Linear / BatchNorm hook targets and the recursive
    # module-tree hook discovery are not instantiated (conv-only synthetic model);
    # the hook math is identical for 2-D/4-D outputs.
    def __init__(self, params, config_idx, input_size, mix_prob):
        cfg = EXP_CONFIG[config_idx]
        self.cfg = cfg
        self.mixup_layer = cfg['mixup_layer']
        self.prob = float(mix_prob)
        self.channelwise = cfg['channelwise']
        self.input_size = input_size
        self.layer_num = len(params)
        assert self.layer_num == 2, "fused kernel targets the 2-conv synthetic model"
        self.channels = [(w.shape[1], w.shape[0]) for (w, _) in params]
        # weight re-layout hoisted out of the per-forward jitted path (done once)
        self.packed = tuple(
            (jnp.transpose(w, (2, 3, 1, 0)).reshape(9, w.shape[1], w.shape[0])
             .astype(jnp.bfloat16),
             b.astype(jnp.float32).reshape(1, -1))
            for (w, b) in params)
        self.record = False
        self.outputs = {}
        self._record_fwd = jax.jit(self._record_forward)
        self._mix_fwd = jax.jit(self._mix_forward)

    def start_feature_record(self):
        self.record = True

    def end_feature_record(self):
        self.record = False

    def _hook_applicable(self, layer_idx, out_w):
        cfg = self.cfg
        is_linear = False                    # all hooked leaves here are Conv2d
        if not (is_linear or out_w <= self.input_size // cfg['divisor']):
            return False
        if (self.mixup_layer == 'conv_linear_no_last'
                and layer_idx + 1 == self.layer_num and is_linear):
            return False
        return True

    # ---- record pass: stash (detached) pre-ReLU conv outputs, from the same call
    def _record_forward(self, packed, x_nchw):
        x = jnp.transpose(x_nchw, (0, 2, 3, 1))          # NCHW -> NHWC once
        _, _, _, w_sp = x_nchw.shape
        out, rec1, rec2 = fused_two_conv(
            x, packed, record=True,
            hook_relu=(self.mixup_layer == 'relu'),
            blend_mode=self.cfg['blending_mode_feature'])
        recs = (jax.lax.stop_gradient(rec1) if self._hook_applicable(0, w_sp) else None,
                jax.lax.stop_gradient(rec2) if self._hook_applicable(1, w_sp) else None)
        return jnp.transpose(out, (0, 3, 1, 2)), recs

    # ---- mixup pass: blend fused into the conv epilogues -------------------
    def _mix_forward(self, packed, x_nchw, key, recorded):
        cfg = self.cfg
        x = jnp.transpose(x_nchw, (0, 2, 3, 1))
        B, H, W, _ = x.shape
        lo, hi = cfg['mix_lower_bound_feature'], cfg['mix_upper_bound_feature']

        base_feats = recorded
        if cfg['mixed_image_type_feature'] == 'A':
            # TODO(synk): for type 'A' the true prev of layer 2 depends on layer 1's
            # already-blended output (hook ordering); approximated with the clean
            # features of the current input (dormant under config 0, which uses 'B').
            _, arec1, arec2 = fused_two_conv(
                x, packed, record=True,
                hook_relu=(self.mixup_layer == 'relu'),
                blend_mode=cfg['blending_mode_feature'])
            base_feats = (jax.lax.stop_gradient(arec1), jax.lax.stop_gradient(arec2))

        prevs, alphas, mix_flags = [], [], []
        for i in range(2):
            C = self.channels[i][1]
            key, kc, kperm, ka = jax.random.split(key, 4)
            do = self._hook_applicable(i, W) and (recorded[i] is not None)
            mix_flags.append(do)
            if not do:
                prevs.append(None)
                alphas.append(None)
                continue
            prev = base_feats[i]                                   # (B, H, W, C) bf16
            if cfg['shuffle_image_feature'] == 'SelfShuffle':
                prev = jnp.take(prev, jax.random.permutation(kperm, B), axis=0)
            if self.channelwise:
                a = jax.random.uniform(ka, (B, C)) * (hi - lo) + lo
            else:
                a = jnp.broadcast_to(
                    jax.random.uniform(ka, (B, 1)) * (hi - lo) + lo, (B, C))
            # on-device mix-probability gate (c <= prob), folded into alpha.
            # TODO(synk): with mixup_layer == 'relu' the gated-off branch should also
            # skip the hook ReLU; irrelevant for config 0 ('conv_linear_no_last').
            gate = (jax.random.uniform(kc, ()) <= self.prob).astype(jnp.float32)
            alphas.append((a.astype(jnp.float32) * gate).reshape(B, 1, C))
            prevs.append(prev)

        out = fused_two_conv(
            x, packed, record=False,
            mix1=mix_flags[0], mix2=mix_flags[1],
            prev1=prevs[0], a1=alphas[0], prev2=prevs[1], a2=alphas[1],
            hook_relu=(self.mixup_layer == 'relu'),
            blend_mode=cfg['blending_mode_feature'])
        return jnp.transpose(out, (0, 3, 1, 2))

    # ---- public API ---------------------------------------------------------
    def forward(self, x, key=None):
        if self.record:
            out, recs = self._record_fwd(self.packed, x)
            for i, rcd in enumerate(recs):
                if rcd is not None:
                    self.outputs[i] = rcd
            return out
        recorded = tuple(self.outputs.get(i, None) for i in range(self.layer_num))
        if key is None:
            key = jax.random.PRNGKey(0)
        return self._mix_fwd(self.packed, x, key, recorded)


if __name__ == "__main__":
    key = jax.random.PRNGKey(0)
    B, Cin, H, W = 2, 4, 16, 16
    C1, C2 = 8, 8
    kx, kn, kw1, kb1, kw2, kb2, kfwd = jax.random.split(key, 7)

    x_clean = jax.random.normal(kx, (B, Cin, H, W), jnp.float32)
    x_adv = x_clean + 0.05 * jax.random.normal(kn, (B, Cin, H, W), jnp.float32)
    w1 = 0.1 * jax.random.normal(kw1, (C1, Cin, 3, 3), jnp.float32)
    b1 = 0.01 * jax.random.normal(kb1, (C1,), jnp.float32)
    w2 = 0.1 * jax.random.normal(kw2, (C2, C1, 3, 3), jnp.float32)
    b2 = 0.01 * jax.random.normal(kb2, (C2,), jnp.float32)
    params = [(w1, b1), (w2, b2)]

    # XLA reference (bf16-quantized operands, matching the MXU path)
    def ref_conv(x_nhwc, w, b):
        xq = x_nhwc.astype(jnp.bfloat16).astype(jnp.float32)
        wq = jnp.transpose(w, (2, 3, 1, 0)).astype(jnp.bfloat16).astype(jnp.float32)
        return jax.lax.conv_general_dilated(
            xq, wq, (1, 1), 'SAME',
            dimension_numbers=('NHWC', 'HWIO', 'NHWC')) + b

    def ref_model(x_nchw):
        xh = jnp.transpose(x_nchw, (0, 2, 3, 1))
        y = ref_conv(jnp.maximum(ref_conv(xh, w1, b1), 0.0), w2, b2)
        return jnp.transpose(y, (0, 3, 1, 2))

    fm = FeatureMixup(params, config_idx=0, input_size=W, mix_prob=1.0)

    # pass 1: record clean features (self.record = True branch of the hook)
    fm.start_feature_record()
    rec_out = jax.block_until_ready(fm.forward(x_clean))
    fm.end_feature_record()
    assert jnp.allclose(rec_out, ref_model(x_clean), atol=1e-2, rtol=1e-2), \
        "record/conv mismatch"

    # gated-off mix (prob=0) must reduce to the plain forward
    fm0 = FeatureMixup(params, config_idx=0, input_size=W, mix_prob=0.0)
    fm0.start_feature_record()
    fm0.forward(x_clean)
    fm0.end_feature_record()
    out0 = jax.block_until_ready(fm0.forward(x_adv, kfwd))
    assert jnp.allclose(out0, ref_model(x_adv), atol=1e-2, rtol=1e-2), \
        "gated-off mix mismatch"

    # pass 2: forward with feature mixup against the recorded clean features
    out = jax.block_until_ready(fm.forward(x_adv, kfwd))
    assert out.shape == (B, C2, H, W)
    assert bool(jnp.all(jnp.isfinite(out)))
    print("KERNEL_OK")
</pallas_src>

<mosaic_0001>
module attributes {stable_mosaic.version = 11 : i64} {
  func.func @kernel(%arg0: i32, %arg1: i32, %arg2: memref<1x20x18x4xf32, #tpu.memory_space<vmem>>, %arg3: memref<9x4x8xbf16, #tpu.memory_space<vmem>>, %arg4: memref<1x8xf32, #tpu.memory_space<vmem>>, %arg5: memref<9x8x8xbf16, #tpu.memory_space<vmem>>, %arg6: memref<1x8xf32, #tpu.memory_space<vmem>>, %arg7: memref<1x8x16x8xf32, #tpu.memory_space<vmem>>, %arg8: memref<1x8x16x8xbf16, #tpu.memory_space<vmem>>, %arg9: memref<1x8x16x8xbf16, #tpu.memory_space<vmem>>) attributes {dimension_semantics = [#tpu.dimension_semantics<parallel>, #tpu.dimension_semantics<parallel>], iteration_bounds = array<i64: 2, 2>, scalar_prefetch = 0 : i64, scratch_operands = 0 : i64, tpu.core_type = #tpu.core_type<tc>, window_params = [{transform_indices = @transform_0, window_bounds = array<i64: 1, 20, 18, 4>}, {pipeline_mode = #tpu.pipeline_mode<synchronous>, transform_indices = @transform_1, window_bounds = array<i64: 9, 4, 8>}, {pipeline_mode = #tpu.pipeline_mode<synchronous>, transform_indices = @transform_2, window_bounds = array<i64: 1, 8>}, {pipeline_mode = #tpu.pipeline_mode<synchronous>, transform_indices = @transform_3, window_bounds = array<i64: 9, 8, 8>}, {pipeline_mode = #tpu.pipeline_mode<synchronous>, transform_indices = @transform_4, window_bounds = array<i64: 1, 8>}, {transform_indices = @transform_5, window_bounds = array<i64: 1, 8, 16, 8>}, {transform_indices = @transform_6, window_bounds = array<i64: 1, 8, 16, 8>}, {transform_indices = @transform_7, window_bounds = array<i64: 1, 8, 16, 8>}]} {
    %c8_i32 = arith.constant 8 : i32
    %0 = arith.muli %arg1, %c8_i32 : i32
    %1 = tpu.assume_multiple %0, 8 : i32
    %c0 = arith.constant 0 : index
    %2 = arith.index_cast %1 : i32 to index
    %c0_0 = arith.constant 0 : index
    %c0_1 = arith.constant 0 : index
    %3 = vector.load %arg2[%c0, %2, %c0_0, %c0_1] : memref<1x20x18x4xf32, #tpu.memory_space<vmem>>, vector<1x12x18x4xf32>
    %4 = vector.shape_cast %3 : vector<1x12x18x4xf32> to vector<12x18x4xf32>
    %5 = vector.extract_strided_slice %4 {offsets = [0, 0, 0], sizes = [10, 16, 4], strides = [1, 1, 1]} : vector<12x18x4xf32> to vector<10x16x4xf32>
    %6 = vector.shape_cast %5 : vector<10x16x4xf32> to vector<160x4xf32>
    %7 = arith.truncf %6 : vector<160x4xf32> to vector<160x4xbf16>
    %c0_2 = arith.constant 0 : index
    %c0_3 = arith.constant 0 : index
    %c0_4 = arith.constant 0 : index
    %8 = vector.load %arg3[%c0_2, %c0_3, %c0_4] : memref<9x4x8xbf16, #tpu.memory_space<vmem>>, vector<1x4x8xbf16>
    %9 = vector.shape_cast %8 : vector<1x4x8xbf16> to vector<4x8xbf16>
    %cst = arith.constant dense<0.000000e+00> : vector<160x8xf32>
    %10 = tpu.matmul %7, %9, %cst {dimension_numbers = #tpu.dot_dimension_numbers<[1], [0], [0], [1], [0, 0, 1, 1], [], []>} : vector<160x4xbf16>, vector<4x8xbf16>, vector<160x8xf32> -> vector<160x8xf32>
    %11 = vector.extract_strided_slice %4 {offsets = [0, 1, 0], sizes = [10, 16, 4], strides = [1, 1, 1]} : vector<12x18x4xf32> to vector<10x16x4xf32>
    %12 = vector.shape_cast %11 : vector<10x16x4xf32> to vector<160x4xf32>
    %13 = arith.truncf %12 : vector<160x4xf32> to vector<160x4xbf16>
    %c1 = arith.constant 1 : index
    %c0_5 = arith.constant 0 : index
    %c0_6 = arith.constant 0 : index
    %14 = vector.load %arg3[%c1, %c0_5, %c0_6] : memref<9x4x8xbf16, #tpu.memory_space<vmem>>, vector<1x4x8xbf16>
    %15 = vector.shape_cast %14 : vector<1x4x8xbf16> to vector<4x8xbf16>
    %cst_7 = arith.constant dense<0.000000e+00> : vector<160x8xf32>
    %16 = tpu.matmul %13, %15, %cst_7 {dimension_numbers = #tpu.dot_dimension_numbers<[1], [0], [0], [1], [0, 0, 1, 1], [], []>} : vector<160x4xbf16>, vector<4x8xbf16>, vector<160x8xf32> -> vector<160x8xf32>
    %17 = arith.addf %10, %16 : vector<160x8xf32>
    %18 = vector.extract_strided_slice %4 {offsets = [0, 2, 0], sizes = [10, 16, 4], strides = [1, 1, 1]} : vector<12x18x4xf32> to vector<10x16x4xf32>
    %19 = vector.shape_cast %18 : vector<10x16x4xf32> to vector<160x4xf32>
    %20 = arith.truncf %19 : vector<160x4xf32> to vector<160x4xbf16>
    %c2 = arith.constant 2 : index
    %c0_8 = arith.constant 0 : index
    %c0_9 = arith.constant 0 : index
    %21 = vector.load %arg3[%c2, %c0_8, %c0_9] : memref<9x4x8xbf16, #tpu.memory_space<vmem>>, vector<1x4x8xbf16>
    %22 = vector.shape_cast %21 : vector<1x4x8xbf16> to vector<4x8xbf16>
    %cst_10 = arith.constant dense<0.000000e+00> : vector<160x8xf32>
    %23 = tpu.matmul %20, %22, %cst_10 {dimension_numbers = #tpu.dot_dimension_numbers<[1], [0], [0], [1], [0, 0, 1, 1], [], []>} : vector<160x4xbf16>, vector<4x8xbf16>, vector<160x8xf32> -> vector<160x8xf32>
    %24 = arith.addf %17, %23 : vector<160x8xf32>
    %25 = vector.extract_strided_slice %4 {offsets = [1, 0, 0], sizes = [10, 16, 4], strides = [1, 1, 1]} : vector<12x18x4xf32> to vector<10x16x4xf32>
    %26 = vector.shape_cast %25 : vector<10x16x4xf32> to vector<160x4xf32>
    %27 = arith.truncf %26 : vector<160x4xf32> to vector<160x4xbf16>
    %c3 = arith.constant 3 : index
    %c0_11 = arith.constant 0 : index
    %c0_12 = arith.constant 0 : index
    %28 = vector.load %arg3[%c3, %c0_11, %c0_12] : memref<9x4x8xbf16, #tpu.memory_space<vmem>>, vector<1x4x8xbf16>
    %29 = vector.shape_cast %28 : vector<1x4x8xbf16> to vector<4x8xbf16>
    %cst_13 = arith.constant dense<0.000000e+00> : vector<160x8xf32>
    %30 = tpu.matmul %27, %29, %cst_13 {dimension_numbers = #tpu.dot_dimension_numbers<[1], [0], [0], [1], [0, 0, 1, 1], [], []>} : vector<160x4xbf16>, vector<4x8xbf16>, vector<160x8xf32> -> vector<160x8xf32>
    %31 = arith.addf %24, %30 : vector<160x8xf32>
    %32 = vector.extract_strided_slice %4 {offsets = [1, 1, 0], sizes = [10, 16, 4], strides = [1, 1, 1]} : vector<12x18x4xf32> to vector<10x16x4xf32>
    %33 = vector.shape_cast %32 : vector<10x16x4xf32> to vector<160x4xf32>
    %34 = arith.truncf %33 : vector<160x4xf32> to vector<160x4xbf16>
    %c4 = arith.constant 4 : index
    %c0_14 = arith.constant 0 : index
    %c0_15 = arith.constant 0 : index
    %35 = vector.load %arg3[%c4, %c0_14, %c0_15] : memref<9x4x8xbf16, #tpu.memory_space<vmem>>, vector<1x4x8xbf16>
    %36 = vector.shape_cast %35 : vector<1x4x8xbf16> to vector<4x8xbf16>
    %cst_16 = arith.constant dense<0.000000e+00> : vector<160x8xf32>
    %37 = tpu.matmul %34, %36, %cst_16 {dimension_numbers = #tpu.dot_dimension_numbers<[1], [0], [0], [1], [0, 0, 1, 1], [], []>} : vector<160x4xbf16>, vector<4x8xbf16>, vector<160x8xf32> -> vector<160x8xf32>
    %38 = arith.addf %31, %37 : vector<160x8xf32>
    %39 = vector.extract_strided_slice %4 {offsets = [1, 2, 0], sizes = [10, 16, 4], strides = [1, 1, 1]} : vector<12x18x4xf32> to vector<10x16x4xf32>
    %40 = vector.shape_cast %39 : vector<10x16x4xf32> to vector<160x4xf32>
    %41 = arith.truncf %40 : vector<160x4xf32> to vector<160x4xbf16>
    %c5 = arith.constant 5 : index
    %c0_17 = arith.constant 0 : index
    %c0_18 = arith.constant 0 : index
    %42 = vector.load %arg3[%c5, %c0_17, %c0_18] : memref<9x4x8xbf16, #tpu.memory_space<vmem>>, vector<1x4x8xbf16>
    %43 = vector.shape_cast %42 : vector<1x4x8xbf16> to vector<4x8xbf16>
    %cst_19 = arith.constant dense<0.000000e+00> : vector<160x8xf32>
    %44 = tpu.matmul %41, %43, %cst_19 {dimension_numbers = #tpu.dot_dimension_numbers<[1], [0], [0], [1], [0, 0, 1, 1], [], []>} : vector<160x4xbf16>, vector<4x8xbf16>, vector<160x8xf32> -> vector<160x8xf32>
    %45 = arith.addf %38, %44 : vector<160x8xf32>
    %46 = vector.extract_strided_slice %4 {offsets = [2, 0, 0], sizes = [10, 16, 4], strides = [1, 1, 1]} : vector<12x18x4xf32> to vector<10x16x4xf32>
    %47 = vector.shape_cast %46 : vector<10x16x4xf32> to vector<160x4xf32>
    %48 = arith.truncf %47 : vector<160x4xf32> to vector<160x4xbf16>
    %c6 = arith.constant 6 : index
    %c0_20 = arith.constant 0 : index
    %c0_21 = arith.constant 0 : index
    %49 = vector.load %arg3[%c6, %c0_20, %c0_21] : memref<9x4x8xbf16, #tpu.memory_space<vmem>>, vector<1x4x8xbf16>
    %50 = vector.shape_cast %49 : vector<1x4x8xbf16> to vector<4x8xbf16>
    %cst_22 = arith.constant dense<0.000000e+00> : vector<160x8xf32>
    %51 = tpu.matmul %48, %50, %cst_22 {dimension_numbers = #tpu.dot_dimension_numbers<[1], [0], [0], [1], [0, 0, 1, 1], [], []>} : vector<160x4xbf16>, vector<4x8xbf16>, vector<160x8xf32> -> vector<160x8xf32>
    %52 = arith.addf %45, %51 : vector<160x8xf32>
    %53 = vector.extract_strided_slice %4 {offsets = [2, 1, 0], sizes = [10, 16, 4], strides = [1, 1, 1]} : vector<12x18x4xf32> to vector<10x16x4xf32>
    %54 = vector.shape_cast %53 : vector<10x16x4xf32> to vector<160x4xf32>
    %55 = arith.truncf %54 : vector<160x4xf32> to vector<160x4xbf16>
    %c7 = arith.constant 7 : index
    %c0_23 = arith.constant 0 : index
    %c0_24 = arith.constant 0 : index
    %56 = vector.load %arg3[%c7, %c0_23, %c0_24] : memref<9x4x8xbf16, #tpu.memory_space<vmem>>, vector<1x4x8xbf16>
    %57 = vector.shape_cast %56 : vector<1x4x8xbf16> to vector<4x8xbf16>
    %cst_25 = arith.constant dense<0.000000e+00> : vector<160x8xf32>
    %58 = tpu.matmul %55, %57, %cst_25 {dimension_numbers = #tpu.dot_dimension_numbers<[1], [0], [0], [1], [0, 0, 1, 1], [], []>} : vector<160x4xbf16>, vector<4x8xbf16>, vector<160x8xf32> -> vector<160x8xf32>
    %59 = arith.addf %52, %58 : vector<160x8xf32>
    %60 = vector.extract_strided_slice %4 {offsets = [2, 2, 0], sizes = [10, 16, 4], strides = [1, 1, 1]} : vector<12x18x4xf32> to vector<10x16x4xf32>
    %61 = vector.shape_cast %60 : vector<10x16x4xf32> to vector<160x4xf32>
    %62 = arith.truncf %61 : vector<160x4xf32> to vector<160x4xbf16>
    %c8 = arith.constant 8 : index
    %c0_26 = arith.constant 0 : index
    %c0_27 = arith.constant 0 : index
    %63 = vector.load %arg3[%c8, %c0_26, %c0_27] : memref<9x4x8xbf16, #tpu.memory_space<vmem>>, vector<1x4x8xbf16>
    %64 = vector.shape_cast %63 : vector<1x4x8xbf16> to vector<4x8xbf16>
    %cst_28 = arith.constant dense<0.000000e+00> : vector<160x8xf32>
    %65 = tpu.matmul %62, %64, %cst_28 {dimension_numbers = #tpu.dot_dimension_numbers<[1], [0], [0], [1], [0, 0, 1, 1], [], []>} : vector<160x4xbf16>, vector<4x8xbf16>, vector<160x8xf32> -> vector<160x8xf32>
    %66 = arith.addf %59, %65 : vector<160x8xf32>
    %67 = vector.shape_cast %66 : vector<160x8xf32> to vector<10x16x8xf32>
    %c0_29 = arith.constant 0 : index
    %c0_30 = arith.constant 0 : index
    %68 = vector.load %arg4[%c0_29, %c0_30] : memref<1x8xf32, #tpu.memory_space<vmem>>, vector<1x8xf32>
    %69 = vector.shape_cast %68 : vector<1x8xf32> to vector<1x1x8xf32>
    %70 = vector.broadcast %69 : vector<1x1x8xf32> to vector<10x16x8xf32>
    %71 = arith.addf %67, %70 : vector<10x16x8xf32>
    %72 = vector.extract_strided_slice %71 {offsets = [1, 0, 0], sizes = [8, 16, 8], strides = [1, 1, 1]} : vector<10x16x8xf32> to vector<8x16x8xf32>
    %73 = arith.truncf %72 : vector<8x16x8xf32> to vector<8x16x8xbf16>
    %c0_31 = arith.constant 0 : index
    %c0_32 = arith.constant 0 : index
    %c0_33 = arith.constant 0 : index
    %c0_34 = arith.constant 0 : index
    %74 = vector.load %arg8[%c0_31, %c0_32, %c0_33, %c0_34] : memref<1x8x16x8xbf16, #tpu.memory_space<vmem>>, vector<1x8x16x8xbf16>
    %75 = vector.shape_cast %74 : vector<1x8x16x8xbf16> to vector<8x16x8xbf16>
    %76 = vector.shape_cast %73 : vector<8x16x8xbf16> to vector<1x8x16x8xbf16>
    tpu.vector_store %arg8[%c0_31, %c0_32, %c0_33, %c0_34], %76 {strides = array<i32>} : memref<1x8x16x8xbf16, #tpu.memory_space<vmem>>, vector<1x8x16x8xbf16>,
    %cst_35 = arith.constant 0.000000e+00 : f32
    %77 = vector.broadcast %cst_35 : f32 to vector<10x16x8xf32>
    %78 = arith.maximumf %71, %77 : vector<10x16x8xf32>
    %c1_i32 = arith.constant 1 : i32
    %79 = arith.subi %1, %c1_i32 : i32
    %80 = tpu.iota {dimensions = array<i32: 0>} : vector<10x16x1xi32>
    %81 = vector.broadcast %79 : i32 to vector<10x16x1xi32>
    %82 = arith.addi %81, %80 : vector<10x16x1xi32>
    %c0_i32 = arith.constant 0 : i32
    %83 = vector.broadcast %c0_i32 : i32 to vector<10x16x1xi32>
    %84 = arith.cmpi sge, %82, %83 : vector<10x16x1xi32>
    %c16_i32 = arith.constant 16 : i32
    %85 = vector.broadcast %c16_i32 : i32 to vector<10x16x1xi32>
    %86 = arith.cmpi slt, %82, %85 : vector<10x16x1xi32>
    %87 = arith.andi %84, %86 : vector<10x16x1xi1>
    %cst_36 = arith.constant 0.000000e+00 : f32
    %88 = vector.shape_cast %87 : vector<10x16x1xi1> to vector<10x16x1xi1>
    %89 = vector.broadcast %88 : vector<10x16x1xi1> to vector<10x16x8xi1>
    %90 = vector.broadcast %cst_36 : f32 to vector<10x16x8xf32>
    %91 = arith.select %89, %78, %90 : vector<10x16x8xi1>, vector<10x16x8xf32>
    %cst_37 = arith.constant 0.000000e+00 : f32
    %92 = vector.broadcast %cst_37 : f32 to vector<10x1x8xf32>
    %93 = tpu.concatenate %92, %91, %92 in 1 : vector<10x1x8xf32>, vector<10x16x8xf32>, vector<10x1x8xf32> -> vector<10x18x8xf32>
    %94 = vector.extract_strided_slice %93 {offsets = [0, 0, 0], sizes = [8, 16, 8], strides = [1, 1, 1]} : vector<10x18x8xf32> to vector<8x16x8xf32>
    %95 = vector.shape_cast %94 : vector<8x16x8xf32> to vector<128x8xf32>
    %96 = arith.truncf %95 : vector<128x8xf32> to vector<128x8xbf16>
    %c0_38 = arith.constant 0 : index
    %c0_39 = arith.constant 0 : index
    %c0_40 = arith.constant 0 : index
    %97 = vector.load %arg5[%c0_38, %c0_39, %c0_40] : memref<9x8x8xbf16, #tpu.memory_space<vmem>>, vector<1x8x8xbf16>
    %98 = vector.shape_cast %97 : vector<1x8x8xbf16> to vector<8x8xbf16>
    %cst_41 = arith.constant dense<0.000000e+00> : vector<128x8xf32>
    %99 = tpu.matmul %96, %98, %cst_41 {dimension_numbers = #tpu.dot_dimension_numbers<[1], [0], [0], [1], [0, 0, 1, 1], [], []>} : vector<128x8xbf16>, vector<8x8xbf16>, vector<128x8xf32> -> vector<128x8xf32>
    %100 = vector.extract_strided_slice %93 {offsets = [0, 1, 0], sizes = [8, 16, 8], strides = [1, 1, 1]} : vector<10x18x8xf32> to vector<8x16x8xf32>
    %101 = vector.shape_cast %100 : vector<8x16x8xf32> to vector<128x8xf32>
    %102 = arith.truncf %101 : vector<128x8xf32> to vector<128x8xbf16>
    %c1_42 = arith.constant 1 : index
    %c0_43 = arith.constant 0 : index
    %c0_44 = arith.constant 0 : index
    %103 = vector.load %arg5[%c1_42, %c0_43, %c0_44] : memref<9x8x8xbf16, #tpu.memory_space<vmem>>, vector<1x8x8xbf16>
    %104 = vector.shape_cast %103 : vector<1x8x8xbf16> to vector<8x8xbf16>
    %cst_45 = arith.constant dense<0.000000e+00> : vector<128x8xf32>
    %105 = tpu.matmul %102, %104, %cst_45 {dimension_numbers = #tpu.dot_dimension_numbers<[1], [0], [0], [1], [0, 0, 1, 1], [], []>} : vector<128x8xbf16>, vector<8x8xbf16>, vector<128x8xf32> -> vector<128x8xf32>
    %106 = arith.addf %99, %105 : vector<128x8xf32>
    %107 = vector.extract_strided_slice %93 {offsets = [0, 2, 0], sizes = [8, 16, 8], strides = [1, 1, 1]} : vector<10x18x8xf32> to vector<8x16x8xf32>
    %108 = vector.shape_cast %107 : vector<8x16x8xf32> to vector<128x8xf32>
    %109 = arith.truncf %108 : vector<128x8xf32> to vector<128x8xbf16>
    %c2_46 = arith.constant 2 : index
    %c0_47 = arith.constant 0 : index
    %c0_48 = arith.constant 0 : index
    %110 = vector.load %arg5[%c2_46, %c0_47, %c0_48] : memref<9x8x8xbf16, #tpu.memory_space<vmem>>, vector<1x8x8xbf16>
    %111 = vector.shape_cast %110 : vector<1x8x8xbf16> to vector<8x8xbf16>
    %cst_49 = arith.constant dense<0.000000e+00> : vector<128x8xf32>
    %112 = tpu.matmul %109, %111, %cst_49 {dimension_numbers = #tpu.dot_dimension_numbers<[1], [0], [0], [1], [0, 0, 1, 1], [], []>} : vector<128x8xbf16>, vector<8x8xbf16>, vector<128x8xf32> -> vector<128x8xf32>
    %113 = arith.addf %106, %112 : vector<128x8xf32>
    %114 = vector.extract_strided_slice %93 {offsets = [1, 0, 0], sizes = [8, 16, 8], strides = [1, 1, 1]} : vector<10x18x8xf32> to vector<8x16x8xf32>
    %115 = vector.shape_cast %114 : vector<8x16x8xf32> to vector<128x8xf32>
    %116 = arith.truncf %115 : vector<128x8xf32> to vector<128x8xbf16>
    %c3_50 = arith.constant 3 : index
    %c0_51 = arith.constant 0 : index
    %c0_52 = arith.constant 0 : index
    %117 = vector.load %arg5[%c3_50, %c0_51, %c0_52] : memref<9x8x8xbf16, #tpu.memory_space<vmem>>, vector<1x8x8xbf16>
    %118 = vector.shape_cast %117 : vector<1x8x8xbf16> to vector<8x8xbf16>
    %cst_53 = arith.constant dense<0.000000e+00> : vector<128x8xf32>
    %119 = tpu.matmul %116, %118, %cst_53 {dimension_numbers = #tpu.dot_dimension_numbers<[1], [0], [0], [1], [0, 0, 1, 1], [], []>} : vector<128x8xbf16>, vector<8x8xbf16>, vector<128x8xf32> -> vector<128x8xf32>
    %120 = arith.addf %113, %119 : vector<128x8xf32>
    %121 = vector.extract_strided_slice %93 {offsets = [1, 1, 0], sizes = [8, 16, 8], strides = [1, 1, 1]} : vector<10x18x8xf32> to vector<8x16x8xf32>
    %122 = vector.shape_cast %121 : vector<8x16x8xf32> to vector<128x8xf32>
    %123 = arith.truncf %122 : vector<128x8xf32> to vector<128x8xbf16>
    %c4_54 = arith.constant 4 : index
    %c0_55 = arith.constant 0 : index
    %c0_56 = arith.constant 0 : index
    %124 = vector.load %arg5[%c4_54, %c0_55, %c0_56] : memref<9x8x8xbf16, #tpu.memory_space<vmem>>, vector<1x8x8xbf16>
    %125 = vector.shape_cast %124 : vector<1x8x8xbf16> to vector<8x8xbf16>
    %cst_57 = arith.constant dense<0.000000e+00> : vector<128x8xf32>
    %126 = tpu.matmul %123, %125, %cst_57 {dimension_numbers = #tpu.dot_dimension_numbers<[1], [0], [0], [1], [0, 0, 1, 1], [], []>} : vector<128x8xbf16>, vector<8x8xbf16>, vector<128x8xf32> -> vector<128x8xf32>
    %127 = arith.addf %120, %126 : vector<128x8xf32>
    %128 = vector.extract_strided_slice %93 {offsets = [1, 2, 0], sizes = [8, 16, 8], strides = [1, 1, 1]} : vector<10x18x8xf32> to vector<8x16x8xf32>
    %129 = vector.shape_cast %128 : vector<8x16x8xf32> to vector<128x8xf32>
    %130 = arith.truncf %129 : vector<128x8xf32> to vector<128x8xbf16>
    %c5_58 = arith.constant 5 : index
    %c0_59 = arith.constant 0 : index
    %c0_60 = arith.constant 0 : index
    %131 = vector.load %arg5[%c5_58, %c0_59, %c0_60] : memref<9x8x8xbf16, #tpu.memory_space<vmem>>, vector<1x8x8xbf16>
    %132 = vector.shape_cast %131 : vector<1x8x8xbf16> to vector<8x8xbf16>
    %cst_61 = arith.constant dense<0.000000e+00> : vector<128x8xf32>
    %133 = tpu.matmul %130, %132, %cst_61 {dimension_numbers = #tpu.dot_dimension_numbers<[1], [0], [0], [1], [0, 0, 1, 1], [], []>} : vector<128x8xbf16>, vector<8x8xbf16>, vector<128x8xf32> -> vector<128x8xf32>
    %134 = arith.addf %127, %133 : vector<128x8xf32>
    %135 = vector.extract_strided_slice %93 {offsets = [2, 0, 0], sizes = [8, 16, 8], strides = [1, 1, 1]} : vector<10x18x8xf32> to vector<8x16x8xf32>
    %136 = vector.shape_cast %135 : vector<8x16x8xf32> to vector<128x8xf32>
    %137 = arith.truncf %136 : vector<128x8xf32> to vector<128x8xbf16>
    %c6_62 = arith.constant 6 : index
    %c0_63 = arith.constant 0 : index
    %c0_64 = arith.constant 0 : index
    %138 = vector.load %arg5[%c6_62, %c0_63, %c0_64] : memref<9x8x8xbf16, #tpu.memory_space<vmem>>, vector<1x8x8xbf16>
    %139 = vector.shape_cast %138 : vector<1x8x8xbf16> to vector<8x8xbf16>
    %cst_65 = arith.constant dense<0.000000e+00> : vector<128x8xf32>
    %140 = tpu.matmul %137, %139, %cst_65 {dimension_numbers = #tpu.dot_dimension_numbers<[1], [0], [0], [1], [0, 0, 1, 1], [], []>} : vector<128x8xbf16>, vector<8x8xbf16>, vector<128x8xf32> -> vector<128x8xf32>
    %141 = arith.addf %134, %140 : vector<128x8xf32>
    %142 = vector.extract_strided_slice %93 {offsets = [2, 1, 0], sizes = [8, 16, 8], strides = [1, 1, 1]} : vector<10x18x8xf32> to vector<8x16x8xf32>
    %143 = vector.shape_cast %142 : vector<8x16x8xf32> to vector<128x8xf32>
    %144 = arith.truncf %143 : vector<128x8xf32> to vector<128x8xbf16>
    %c7_66 = arith.constant 7 : index
    %c0_67 = arith.constant 0 : index
    %c0_68 = arith.constant 0 : index
    %145 = vector.load %arg5[%c7_66, %c0_67, %c0_68] : memref<9x8x8xbf16, #tpu.memory_space<vmem>>, vector<1x8x8xbf16>
    %146 = vector.shape_cast %145 : vector<1x8x8xbf16> to vector<8x8xbf16>
    %cst_69 = arith.constant dense<0.000000e+00> : vector<128x8xf32>
    %147 = tpu.matmul %144, %146, %cst_69 {dimension_numbers = #tpu.dot_dimension_numbers<[1], [0], [0], [1], [0, 0, 1, 1], [], []>} : vector<128x8xbf16>, vector<8x8xbf16>, vector<128x8xf32> -> vector<128x8xf32>
    %148 = arith.addf %141, %147 : vector<128x8xf32>
    %149 = vector.extract_strided_slice %93 {offsets = [2, 2, 0], sizes = [8, 16, 8], strides = [1, 1, 1]} : vector<10x18x8xf32> to vector<8x16x8xf32>
    %150 = vector.shape_cast %149 : vector<8x16x8xf32> to vector<128x8xf32>
    %151 = arith.truncf %150 : vector<128x8xf32> to vector<128x8xbf16>
    %c8_70 = arith.constant 8 : index
    %c0_71 = arith.constant 0 : index
    %c0_72 = arith.constant 0 : index
    %152 = vector.load %arg5[%c8_70, %c0_71, %c0_72] : memref<9x8x8xbf16, #tpu.memory_space<vmem>>, vector<1x8x8xbf16>
    %153 = vector.shape_cast %152 : vector<1x8x8xbf16> to vector<8x8xbf16>
    %cst_73 = arith.constant dense<0.000000e+00> : vector<128x8xf32>
    %154 = tpu.matmul %151, %153, %cst_73 {dimension_numbers = #tpu.dot_dimension_numbers<[1], [0], [0], [1], [0, 0, 1, 1], [], []>} : vector<128x8xbf16>, vector<8x8xbf16>, vector<128x8xf32> -> vector<128x8xf32>
    %155 = arith.addf %148, %154 : vector<128x8xf32>
    %156 = vector.shape_cast %155 : vector<128x8xf32> to vector<8x16x8xf32>
    %c0_74 = arith.constant 0 : index
    %c0_75 = arith.constant 0 : index
    %157 = vector.load %arg6[%c0_74, %c0_75] : memref<1x8xf32, #tpu.memory_space<vmem>>, vector<1x8xf32>
    %158 = vector.shape_cast %157 : vector<1x8xf32> to vector<1x1x8xf32>
    %159 = vector.broadcast %158 : vector<1x1x8xf32> to vector<8x16x8xf32>
    %160 = arith.addf %156, %159 : vector<8x16x8xf32>
    %161 = arith.truncf %160 : vector<8x16x8xf32> to vector<8x16x8xbf16>
    %c0_76 = arith.constant 0 : index
    %c0_77 = arith.constant 0 : index
    %c0_78 = arith.constant 0 : index
    %c0_79 = arith.constant 0 : index
    %162 = vector.load %arg9[%c0_76, %c0_77, %c0_78, %c0_79] : memref<1x8x16x8xbf16, #tpu.memory_space<vmem>>, vector<1x8x16x8xbf16>
    %163 = vector.shape_cast %162 : vector<1x8x16x8xbf16> to vector<8x16x8xbf16>
    %164 = vector.shape_cast %161 : vector<8x16x8xbf16> to vector<1x8x16x8xbf16>
    tpu.vector_store %arg9[%c0_76, %c0_77, %c0_78, %c0_79], %164 {strides = array<i32>} : memref<1x8x16x8xbf16, #tpu.memory_space<vmem>>, vector<1x8x16x8xbf16>,
    %c0_80 = arith.constant 0 : index
    %c0_81 = arith.constant 0 : index
    %c0_82 = arith.constant 0 : index
    %c0_83 = arith.constant 0 : index
    %165 = vector.load %arg7[%c0_80, %c0_81, %c0_82, %c0_83] : memref<1x8x16x8xf32, #tpu.memory_space<vmem>>, vector<1x8x16x8xf32>
    %166 = vector.shape_cast %165 : vector<1x8x16x8xf32> to vector<8x16x8xf32>
    %167 = vector.shape_cast %160 : vector<8x16x8xf32> to vector<1x8x16x8xf32>
    tpu.vector_store %arg7[%c0_80, %c0_81, %c0_82, %c0_83], %167 {strides = array<i32>} : memref<1x8x16x8xf32, #tpu.memory_space<vmem>>, vector<1x8x16x8xf32>,
    return
  }
  func.func @transform_0(%arg0: i32, %arg1: i32) -> (i32, i32, i32, i32) {
    %c0_i32 = arith.constant 0 : i32
    %c0_i32_0 = arith.constant 0 : i32
    %c0_i32_1 = arith.constant 0 : i32
    %c0_i32_2 = arith.constant 0 : i32
    return %arg0, %c0_i32, %c0_i32_0, %c0_i32_1 : i32, i32, i32, i32
  }
  func.func @transform_1(%arg0: i32, %arg1: i32) -> (i32, i32, i32) {
    %c0_i32 = arith.constant 0 : i32
    %c0_i32_0 = arith.constant 0 : i32
    %c0_i32_1 = arith.constant 0 : i32
    %c0_i32_2 = arith.constant 0 : i32
    return %c0_i32, %c0_i32_0, %c0_i32_1 : i32, i32, i32
  }
  func.func @transform_2(%arg0: i32, %arg1: i32) -> (i32, i32) {
    %c0_i32 = arith.constant 0 : i32
    %c0_i32_0 = arith.constant 0 : i32
    %c0_i32_1 = arith.constant 0 : i32
    return %c0_i32, %c0_i32_0 : i32, i32
  }
  func.func @transform_3(%arg0: i32, %arg1: i32) -> (i32, i32, i32) {
    %c0_i32 = arith.constant 0 : i32
    %c0_i32_0 = arith.constant 0 : i32
    %c0_i32_1 = arith.constant 0 : i32
    %c0_i32_2 = arith.constant 0 : i32
    return %c0_i32, %c0_i32_0, %c0_i32_1 : i32, i32, i32
  }
  func.func @transform_4(%arg0: i32, %arg1: i32) -> (i32, i32) {
    %c0_i32 = arith.constant 0 : i32
    %c0_i32_0 = arith.constant 0 : i32
    %c0_i32_1 = arith.constant 0 : i32
    return %c0_i32, %c0_i32_0 : i32, i32
  }
  func.func @transform_5(%arg0: i32, %arg1: i32) -> (i32, i32, i32, i32) {
    %c0_i32 = arith.constant 0 : i32
    %c0_i32_0 = arith.constant 0 : i32
    %c0_i32_1 = arith.constant 0 : i32
    return %arg0, %arg1, %c0_i32, %c0_i32_0 : i32, i32, i32, i32
  }
  func.func @transform_6(%arg0: i32, %arg1: i32) -> (i32, i32, i32, i32) {
    %c0_i32 = arith.constant 0 : i32
    %c0_i32_0 = arith.constant 0 : i32
    %c0_i32_1 = arith.constant 0 : i32
    return %arg0, %arg1, %c0_i32, %c0_i32_0 : i32, i32, i32, i32
  }
  func.func @transform_7(%arg0: i32, %arg1: i32) -> (i32, i32, i32, i32) {
    %c0_i32 = arith.constant 0 : i32
    %c0_i32_0 = arith.constant 0 : i32
    %c0_i32_1 = arith.constant 0 : i32
    return %arg0, %arg1, %c0_i32, %c0_i32_0 : i32, i32, i32, i32
  }
}

</mosaic_0001>

<llo_original>
// kernel: _record_forward.1
$region0: #{_record_forward.1}
  #allocation0 [shape = 'u32[]', space=smem, size = 0x4, offset = 0x4, fixed_abs, tag = 'smem constant byte address 0x4 - core index']
  #allocation1 [shape = 'u32[144,128]{1,0:T(1,128)}', space=vmem, size = 0x12000, scoped, tag = 'internal scratch']
  %s0 = inlined_call_operand.vmem [shape: f32[2,20,18,4], index: 0, kind: input, shape index: {}]
  %s1 = inlined_call_operand.vmem [shape: bf16[9,4,8], index: 1, kind: input, shape index: {}]
  %s2 = inlined_call_operand.vmem [shape: f32[1,8], index: 2, kind: input, shape index: {}]
  %s3 = inlined_call_operand.vmem [shape: bf16[9,8,8], index: 3, kind: input, shape index: {}]
  %s4 = inlined_call_operand.vmem [shape: f32[1,8], index: 4, kind: input, shape index: {}]
  %s5 = inlined_call_operand.vmem [shape: f32[2,16,16,8], index: 5, kind: output, shape index: {0}]
  %s6 = inlined_call_operand.vmem [shape: bf16[2,16,16,8], index: 6, kind: output, shape index: {1}]
  %s7 = inlined_call_operand.vmem [shape: bf16[2,16,16,8], index: 7, kind: output, shape index: {2}]
  %8 = xla_tuple %s5, %s6, %s7
  %s9 = sld [smem:[#allocation0]]
  $region69: #{_record_forward.1} parent=0
    _
  %s11 = ssub.s32 1, %s9
  %s12 = scalar_select 0, %s11, %s9
  loop: start=0, step=1, limit=6
  $region2: #{_record_forward.1} parent=0 // loop_pre_header
    _
  $region3: #{_record_forward.1} parent=0 // loop_header
    %s14 = sphi 0, %s18
    %p15 = scmp.ge.s32.totalorder %s14, 6
    %s21 = sphi 0, %s33
    %s22 = sphi 0, %s29
    %s23 = sphi 0, %s21
    %s24 = sphi 0, %s22
    %s25 = sphi 0, %s23
    %s26 = sphi 0, %s24
    %s36 = sphi 0, %s38
    %s39 = sphi 0, %s36
    %s40 = sphi 0, %s39
    %s56 = sphi 0, %s40
    %s60 = sphi 0, %s60
    %s62 = sphi 0, %s60
    %s63 = sphi 0, %s62
    %s77 = sphi 0, %s63
    %s81 = sphi 0, %s81
    %s83 = sphi 0, %s81
    %s84 = sphi 0, %s83
    %s98 = sphi 0, %s84
    %s102 = sphi 0, %s102
    %s104 = sphi 0, %s102
    %s105 = sphi 0, %s104
    %s119 = sphi 0, %s105
    %s123 = sphi 0, %s123
    %s125 = sphi 0, %s123
    %s126 = sphi 0, %s125
    %s140 = sphi 0, %s126
    %s148 = sphi 0, %s150
    %s151 = sphi 0, %s148
    %s152 = sphi 0, %s151
    %s168 = sphi 0, %s152
    %s176 = sphi 0, %s178
    %s179 = sphi 0, %s176
    %s180 = sphi 0, %s179
    %s196 = sphi 0, %s180
    %s204 = sphi 0, %s206
    %s207 = sphi 0, %s204
    %s208 = sphi 0, %s207
    %s224 = sphi 0, %s208
  $region4: #{_record_forward.1} parent=0 // loop_header_branch
    %17 = sbr.rel (%p15) target = $region8
  $region5: #{_record_forward.1} parent=0 // loop_body
    %s19 = ssub.s32 %s14, 1
    %s20 = ssub.s32 %s14, 2
    %s27 = sadd.s32 1, %s22
    %p28 = scmp.ge.s32.totalorder %s27, 2
    %s29 = scalar_select %p28, 0, %s27
    %s30 = sadd.s32 1, %s21
    %s31 = scalar_select %p28, %s30, %s21
    %p32 = scmp.ge.s32.totalorder %s31, 2
    %s33 = scalar_select %p32, 0, %s31
    %s34 = ssub.s32 %s21, %s33
    %p35 = scmp.eq.s32.totalorder %s34, 0
    %s37 = sadd.s32 %s36, 1
    %s38 = scalar_select %p35, %s36, %s37
    %p41 = pneg %p35
    %p42 = scmp.eq.s32.totalorder %s14, 3
    %p43 = por %p41, %p42
    %p44 = scmp.ne.s32.totalorder %s36, %s39
    %p45 = scmp.eq.s32.totalorder %s14, 0
    %p46 = por %p44, %p45
    %p47 = scmp.ne.s32.totalorder %s36, %s39
    %p48 = scmp.eq.s32.totalorder %s19, 3
    %p49 = por %p47, %p48
    %p50 = scmp.ne.s32.totalorder %s39, %s40
    %p51 = scmp.eq.s32.totalorder %s19, 0
    %p52 = por %p50, %p51
    %p53 = scmp.ne.s32.totalorder %s39, %s40
    %p54 = scmp.eq.s32.totalorder %s20, 3
    %p55 = por %p53, %p54
    %p57 = scmp.ne.s32.totalorder %s40, %s56
    %p58 = scmp.eq.s32.totalorder %s20, 0
    %p59 = por %p57, %p58
    %s61 = sadd.s32 %s60, 1
    %p64 = scmp.eq.s32.totalorder %s14, 3
    %p65 = scmp.ne.s32.totalorder %s60, %s62
    %p66 = scmp.eq.s32.totalorder %s14, 0
    %p67 = por %p65, %p66
    %p68 = scmp.ne.s32.totalorder %s60, %s62
    %p69 = scmp.eq.s32.totalorder %s19, 3
    %p70 = por %p68, %p69
    %p71 = scmp.ne.s32.totalorder %s62, %s63
    %p72 = scmp.eq.s32.totalorder %s19, 0
    %p73 = por %p71, %p72
    %p74 = scmp.ne.s32.totalorder %s62, %s63
    %p75 = scmp.eq.s32.totalorder %s20, 3
    %p76 = por %p74, %p75
    %p78 = scmp.ne.s32.totalorder %s63, %s77
    %p79 = scmp.eq.s32.totalorder %s20, 0
    %p80 = por %p78, %p79
    %s82 = sadd.s32 %s81, 1
    %p85 = scmp.eq.s32.totalorder %s14, 3
    %p86 = scmp.ne.s32.totalorder %s81, %s83
    %p87 = scmp.eq.s32.totalorder %s14, 0
    %p88 = por %p86, %p87
    %p89 = scmp.ne.s32.totalorder %s81, %s83
    %p90 = scmp.eq.s32.totalorder %s19, 3
    %p91 = por %p89, %p90
    %p92 = scmp.ne.s32.totalorder %s83, %s84
    %p93 = scmp.eq.s32.totalorder %s19, 0
    %p94 = por %p92, %p93
    %p95 = scmp.ne.s32.totalorder %s83, %s84
    %p96 = scmp.eq.s32.totalorder %s20, 3
    %p97 = por %p95, %p96
    %p99 = scmp.ne.s32.totalorder %s84, %s98
    %p100 = scmp.eq.s32.totalorder %s20, 0
    %p101 = por %p99, %p100
    %s103 = sadd.s32 %s102, 1
    %p106 = scmp.eq.s32.totalorder %s14, 3
    %p107 = scmp.ne.s32.totalorder %s102, %s104
    %p108 = scmp.eq.s32.totalorder %s14, 0
    %p109 = por %p107, %p108
    %p110 = scmp.ne.s32.totalorder %s102, %s104
    %p111 = scmp.eq.s32.totalorder %s19, 3
    %p112 = por %p110, %p111
    %p113 = scmp.ne.s32.totalorder %s104, %s105
    %p114 = scmp.eq.s32.totalorder %s19, 0
    %p115 = por %p113, %p114
    %p116 = scmp.ne.s32.totalorder %s104, %s105
    %p117 = scmp.eq.s32.totalorder %s20, 3
    %p118 = por %p116, %p117
    %p120 = scmp.ne.s32.totalorder %s105, %s119
    %p121 = scmp.eq.s32.totalorder %s20, 0
    %p122 = por %p120, %p121
    %s124 = sadd.s32 %s123, 1
    %p127 = scmp.eq.s32.totalorder %s14, 3
    %p128 = scmp.ne.s32.totalorder %s123, %s125
    %p129 = scmp.eq.s32.totalorder %s14, 0
    %p130 = por %p128, %p129
    %p131 = scmp.ne.s32.totalorder %s123, %s125
    %p132 = scmp.eq.s32.totalorder %s19, 3
    %p133 = por %p131, %p132
    %p134 = scmp.ne.s32.totalorder %s125, %s126
    %p135 = scmp.eq.s32.totalorder %s19, 0
    %p136 = por %p134, %p135
    %p137 = scmp.ne.s32.totalorder %s125, %s126
    %p138 = scmp.eq.s32.totalorder %s20, 3
    %p139 = por %p137, %p138
    %p141 = scmp.ne.s32.totalorder %s126, %s140
    %p142 = scmp.eq.s32.totalorder %s20, 0
    %p143 = por %p141, %p142
    %s144 = ssub.s32 %s21, %s33
    %s145 = ssub.s32 %s22, %s29
    %s146 = sor.u32 %s144, %s145
    %p147 = scmp.eq.s32.totalorder %s146, 0
    %s149 = sadd.s32 %s148, 1
    %s150 = scalar_select %p147, %s148, %s149
    %p153 = pneg %p147
    %p154 = scmp.eq.s32.totalorder %s14, 3
    %p155 = por %p153, %p154
    %p156 = scmp.ne.s32.totalorder %s148, %s151
    %p157 = scmp.eq.s32.totalorder %s14, 0
    %p158 = por %p156, %p157
    %p159 = scmp.ne.s32.totalorder %s148, %s151
    %p160 = scmp.eq.s32.totalorder %s19, 3
    %p161 = por %p159, %p160
    %p162 = scmp.ne.s32.totalorder %s151, %s152
    %p163 = scmp.eq.s32.totalorder %s19, 0
    %p164 = por %p162, %p163
    %p165 = scmp.ne.s32.totalorder %s151, %s152
    %p166 = scmp.eq.s32.totalorder %s20, 3
    %p167 = por %p165, %p166
    %p169 = scmp.ne.s32.totalorder %s152, %s168
    %p170 = scmp.eq.s32.totalorder %s20, 0
    %p171 = por %p169, %p170
    %s172 = ssub.s32 %s21, %s33
    %s173 = ssub.s32 %s22, %s29
    %s174 = sor.u32 %s172, %s173
    %p175 = scmp.eq.s32.totalorder %s174, 0
    %s177 = sadd.s32 %s176, 1
    %s178 = scalar_select %p175, %s176, %s177
    %p181 = pneg %p175
    %p182 = scmp.eq.s32.totalorder %s14, 3
    %p183 = por %p181, %p182
    %p184 = scmp.ne.s32.totalorder %s176, %s179
    %p185 = scmp.eq.s32.totalorder %s14, 0
    %p186 = por %p184, %p185
    %p187 = scmp.ne.s32.totalorder %s176, %s179
    %p188 = scmp.eq.s32.totalorder %s19, 3
    %p189 = por %p187, %p188
    %p190 = scmp.ne.s32.totalorder %s179, %s180
    %p191 = scmp.eq.s32.totalorder %s19, 0
    %p192 = por %p190, %p191
    %p193 = scmp.ne.s32.totalorder %s179, %s180
    %p194 = scmp.eq.s32.totalorder %s20, 3
    %p195 = por %p193, %p194
    %p197 = scmp.ne.s32.totalorder %s180, %s196
    %p198 = scmp.eq.s32.totalorder %s20, 0
    %p199 = por %p197, %p198
    %s200 = ssub.s32 %s21, %s33
    %s201 = ssub.s32 %s22, %s29
    %s202 = sor.u32 %s200, %s201
    %p203 = scmp.eq.s32.totalorder %s202, 0
    %s205 = sadd.s32 %s204, 1
    %s206 = scalar_select %p203, %s204, %s205
    %p209 = pneg %p203
    %p210 = scmp.eq.s32.totalorder %s14, 3
    %p211 = por %p209, %p210
    %p212 = scmp.ne.s32.totalorder %s204, %s207
    %p213 = scmp.eq.s32.totalorder %s14, 0
    %p214 = por %p212, %p213
    %p215 = scmp.ne.s32.totalorder %s204, %s207
    %p216 = scmp.eq.s32.totalorder %s19, 3
    %p217 = por %p215, %p216
    %p218 = scmp.ne.s32.totalorder %s207, %s208
    %p219 = scmp.eq.s32.totalorder %s19, 0
    %p220 = por %p218, %p219
    %p221 = scmp.ne.s32.totalorder %s207, %s208
    %p222 = scmp.eq.s32.totalorder %s20, 3
    %p223 = por %p221, %p222
    %p225 = scmp.ne.s32.totalorder %s208, %s224
    %p226 = scmp.eq.s32.totalorder %s20, 0
    %p227 = por %p225, %p226
    %p228 = scmp.le.s32.totalorder 1, %s14
    %p229 = scmp.lt.s32.totalorder %s14, 5
    %p230 = pnand %p228, %p229
    %p231 = pneg %p230
    // Predicated region
    $region9: #{_record_forward.1} parent=5 // pred_check
      _
    $region10: #{_record_forward.1} parent=5 // pred_check_branch
      %233 = sbr.rel (%p230) target = $region12
    $region11: #{_record_forward.1} parent=5 // pred_region
      %s234 = ssub.s32 %s14, 1
      // Predicated region
      $region13: #{_record_forward.1} parent=11 // pred_check
        %p235 = pneg %p73
      $region14: #{_record_forward.1} parent=11 // pred_check_branch
        %237 = sbr.rel (%p235) target = $region16
      $region15: #{_record_forward.1} parent=11 // pred_region
        _
      $region16: #{_record_forward.1} parent=11 // pred_fallthru
        _
      // Predicated region
      $region17: #{_record_forward.1} parent=11 // pred_check
        %p238 = pneg %p94
      $region18: #{_record_forward.1} parent=11 // pred_check_branch
        %240 = sbr.rel (%p238) target = $region20
      $region19: #{_record_forward.1} parent=11 // pred_region
        _
      $region20: #{_record_forward.1} parent=11 // pred_fallthru
        _
      // Predicated region
      $region21: #{_record_forward.1} parent=11 // pred_check
        %p241 = pneg %p115
      $region22: #{_record_forward.1} parent=11 // pred_check_branch
        %243 = sbr.rel (%p241) target = $region24
      $region23: #{_record_forward.1} parent=11 // pred_region
        _
      $region24: #{_record_forward.1} parent=11 // pred_fallthru
        _
      // Predicated region
      $region25: #{_record_forward.1} parent=11 // pred_check
        %p244 = pneg %p136
      $region26: #{_record_forward.1} parent=11 // pred_check_branch
        %246 = sbr.rel (%p244) target = $region28
      $region27: #{_record_forward.1} parent=11 // pred_region
        _
      $region28: #{_record_forward.1} parent=11 // pred_fallthru
        _
    $region12: #{_record_forward.1} parent=5 // pred_fallthru
      _
    %p247 = scmp.lt.s32.totalorder %s14, 4
    // Predicated region
    $region29: #{_record_forward.1} parent=5 // pred_check
      %p248 = pneg %p247
    $region30: #{_record_forward.1} parent=5 // pred_check_branch
      %250 = sbr.rel (%p248) target = $region32
    $region31: #{_record_forward.1} parent=5 // pred_region
      // Predicated region
      $region33: #{_record_forward.1} parent=31 // pred_check
        %p251 = pneg %p46
      $region34: #{_record_forward.1} parent=31 // pred_check_branch
        %253 = sbr.rel (%p251) target = $region36
      $region35: #{_record_forward.1} parent=31 // pred_region
        %p254 = scmp.lt.s32.totalorder %s21, 1
        %s255 = scalar_select %p254, %s21, 1
        %s256 = smul.addr %s255, 60
        %s257 = smul.addr %s256, 8
        %s258 = scalar_lea.vmem %s0, %s257
      $region36: #{_record_forward.1} parent=31 // pred_fallthru
        _
    $region32: #{_record_forward.1} parent=5 // pred_fallthru
      _
    %p259 = scmp.le.s32.totalorder 1, %s14
    %p260 = scmp.lt.s32.totalorder %s14, 5
    %p261 = pnand %p259, %p260
    %p262 = pneg %p261
    // Predicated region
    $region37: #{_record_forward.1} parent=5 // pred_check
      _
    $region38: #{_record_forward.1} parent=5 // pred_check_branch
      %264 = sbr.rel (%p261) target = $region40
    $region39: #{_record_forward.1} parent=5 // pred_region
      %s265 = ssub.s32 %s14, 1
      %p266 = scmp.lt.s32.totalorder %s23, 1
      %s267 = scalar_select %p266, %s23, 1
      %s268 = smul.addr %s267, 60
      %s269 = smul.addr %s268, 8
      %s270 = scalar_lea.vmem %s0, %s269
      %p271 = pneg %p52
      %p272 = pneg %p49
      %p273 = pneg %p73
      %p274 = pneg %p70
      %p275 = pneg %p94
      %p276 = pneg %p91
      %p277 = pneg %p115
      %p278 = pneg %p112
      %p279 = pneg %p136
      %p280 = pneg %p133
      %p281 = pneg %p164
      %p282 = pneg %p161
      %s283 = smul.u32 8, %s24
      %p284 = scmp.lt.s32.totalorder %s23, 1
      %s285 = scalar_select %p284, %s23, 1
      %p286 = scmp.lt.s32.totalorder %s283, 15
      %s287 = scalar_select %p286, %s283, 15
      %s288 = smul.addr %s287, 2
      %s289 = smul.addr %s285, 32
      %s290 = sadd.s32 %s288, %s289
      %s291 = smul.addr %s290, 8
      %s292 = scalar_lea.vmem %s5, %s291
      %p293 = pneg %p192
      %p294 = pneg %p189
      %s295 = smul.u32 8, %s24
      %p296 = scmp.lt.s32.totalorder %s23, 1
      %s297 = scalar_select %p296, %s23, 1
      %p298 = scmp.lt.s32.totalorder %s295, 15
      %s299 = scalar_select %p298, %s295, 15
      %s300 = smul.addr %s299, 2
      %s301 = smul.addr %s297, 32
      %s302 = sadd.s32 %s300, %s301
      %s303 = smul.addr %s302, 4
      %s304 = scalar_lea.vmem %s6, %s303
      %p305 = pneg %p220
      %p306 = pneg %p217
      %s307 = smul.u32 8, %s24
      %p308 = scmp.lt.s32.totalorder %s23, 1
      %s309 = scalar_select %p308, %s23, 1
      %p310 = scmp.lt.s32.totalorder %s307, 15
      %s311 = scalar_select %p310, %s307, 15
      %s312 = smul.addr %s311, 2
      %s313 = smul.addr %s309, 32
      %s314 = sadd.s32 %s312, %s313
      %s315 = smul.addr %s314, 4
      %s316 = scalar_lea.vmem %s7, %s315
      %p317 = scmp.lt.s32.totalorder %s23, 1
      %s318 = scalar_select %p317, %s23, 1
      %s319 = smul.addr %s318, 60
      %s320 = smul.addr %s319, 8
      %s321 = scalar_lea.vmem %s0, %s320
      %s322 = smul.u32 8, %s24
      %p323 = scmp.lt.s32.totalorder %s23, 1
      %s324 = scalar_select %p323, %s23, 1
      %p325 = scmp.lt.s32.totalorder %s322, 15
      %s326 = scalar_select %p325, %s322, 15
      %s327 = smul.addr %s326, 2
      %s328 = smul.addr %s324, 32
      %s329 = sadd.s32 %s327, %s328
      %s330 = smul.addr %s329, 8
      %s331 = scalar_lea.vmem %s5, %s330
      %s332 = smul.u32 8, %s24
      %s333 = smul.u32 8, %s24
      %p334 = scmp.lt.s32.totalorder %s23, 1
      %s335 = scalar_select %p334, %s23, 1
      %p336 = scmp.lt.s32.totalorder %s333, 15
      %s337 = scalar_select %p336, %s333, 15
      %s338 = smul.addr %s337, 2
      %s339 = smul.addr %s335, 32
      %s340 = sadd.s32 %s338, %s339
      %s341 = smul.addr %s340, 4
      %s342 = scalar_lea.vmem %s6, %s341
      %s343 = smul.u32 8, %s24
      %s344 = smul.u32 8, %s24
      %p345 = scmp.lt.s32.totalorder %s23, 1
      %s346 = scalar_select %p345, %s23, 1
      %p347 = scmp.lt.s32.totalorder %s344, 15
      %s348 = scalar_select %p347, %s344, 15
      %s349 = smul.addr %s348, 2
      %s350 = smul.addr %s346, 32
      %s351 = sadd.s32 %s349, %s350
      %s352 = smul.addr %s351, 4
      %s353 = scalar_lea.vmem %s7, %s352
      %s354 = smul.u32 8, %s24
      %s356 = smul.u32 %s24, 8
      %s357 = smul.u32 %s356, 24
      %s358 = scalar_lea.vmem %s321, %s357
      %v359 = vld [vmem:[%s358] sm:$0xff]
      %v360 = vld [vmem:[%s358 + $0x8] sm:$0xff]
      %v361 = vld [vmem:[%s358 + $0x10] sm:$0x3]
      %v362 = vld [vmem:[%s358 + $0x18] sm:$0xff]
      %v363 = vld [vmem:[%s358 + $0x20] sm:$0xff]
      %v364 = vld [vmem:[%s358 + $0x28] sm:$0x3]
      %v365 = vld [vmem:[%s358 + $0x30] sm:$0xff]
      %v366 = vld [vmem:[%s358 + $0x38] sm:$0xff]
      %v367 = vld [vmem:[%s358 + $0x40] sm:$0x3]
      %v368 = vld [vmem:[%s358 + $0x48] sm:$0xff]
      %v369 = vld [vmem:[%s358 + $0x50] sm:$0xff]
      %v370 = vld [vmem:[%s358 + $0x58] sm:$0x3]
      %v371 = vld [vmem:[%s358 + $0x60] sm:$0xff]
      %v372 = vld [vmem:[%s358 + $0x68] sm:$0xff]
      %v373 = vld [vmem:[%s358 + $0x70] sm:$0x3]
      %v374 = vld [vmem:[%s358 + $0x78] sm:$0xff]
      %v375 = vld [vmem:[%s358 + $0x80] sm:$0xff]
      %v376 = vld [vmem:[%s358 + $0x88] sm:$0x3]
      %v377 = vld [vmem:[%s358 + $0x90] sm:$0xff]
      %v378 = vld [vmem:[%s358 + $0x98] sm:$0xff]
      %v379 = vld [vmem:[%s358 + $0xa0] sm:$0x3]
      %v380 = vld [vmem:[%s358 + $0xa8] sm:$0xff]
      %v381 = vld [vmem:[%s358 + $0xb0] sm:$0xff]
      %v382 = vld [vmem:[%s358 + $0xb8] sm:$0x3]
      %v383 = vld [vmem:[%s358 + $0xc0] sm:$0xff]
      %v384 = vld [vmem:[%s358 + $0xc8] sm:$0xff]
      %v385 = vld [vmem:[%s358 + $0xd0] sm:$0x3]
      %v386 = vld [vmem:[%s358 + $0xd8] sm:$0xff]
      %v387 = vld [vmem:[%s358 + $0xe0] sm:$0xff]
      %v388 = vld [vmem:[%s358 + $0xe8] sm:$0x3]
      %v389 = vld [vmem:[%s358 + $0xf0] sm:$0xff]
      %v390 = vld [vmem:[%s358 + $0xf8] sm:$0xff]
      %v391 = vld [vmem:[%s358 + $0x100] sm:$0x3]
      %v392 = vld [vmem:[%s358 + $0x108] sm:$0xff]
      %v393 = vld [vmem:[%s358 + $0x110] sm:$0xff]
      %v394 = vld [vmem:[%s358 + $0x118] sm:$0x3]
      %v395 = vpack.c.bf16 %v360, %v359
      %v396 = vpack.c.bf16 %v363, %v362
      %v397 = vpack.c.bf16 %v366, %v365
      %v398 = vpack.c.bf16 %v369, %v368
      %v399 = vpack.c.bf16 %v372, %v371
      %v400 = vpack.c.bf16 %v375, %v374
      %v401 = vpack.c.bf16 %v378, %v377
      %v402 = vpack.c.bf16 %v381, %v380
      %v403 = vpack.c.bf16 %v384, %v383
      %v404 = vpack.c.bf16 %v387, %v386
      %v405 = vld [vmem:[%s1] sm:$0x3]
      %vm436 = vcmask 1046528
      %v437 = vrot.slane %v359, 1
      %v438 = vrot.slane %v360, 1
      %v439 = vsel %vm436, %v437, %v438
      %v440 = vrot.slane %v361, 1
      %v441 = vsel %vm436, %v438, %v440
      %v442 = vrot.slane %v362, 1
      %v443 = vrot.slane %v363, 1
      %v444 = vsel %vm436, %v442, %v443
      %v445 = vrot.slane %v364, 1
      %v446 = vsel %vm436, %v443, %v445
      %v447 = vrot.slane %v365, 1
      %v448 = vrot.slane %v366, 1
      %v449 = vsel %vm436, %v447, %v448
      %v450 = vrot.slane %v367, 1
      %v451 = vsel %vm436, %v448, %v450
      %v452 = vrot.slane %v368, 1
      %v453 = vrot.slane %v369, 1
      %v454 = vsel %vm436, %v452, %v453
      %v455 = vrot.slane %v370, 1
      %v456 = vsel %vm436, %v453, %v455
      %v457 = vrot.slane %v371, 1
      %v458 = vrot.slane %v372, 1
      %v459 = vsel %vm436, %v457, %v458
      %v460 = vrot.slane %v373, 1
      %v461 = vsel %vm436, %v458, %v460
      %v462 = vrot.slane %v374, 1
      %v463 = vrot.slane %v375, 1
      %v464 = vsel %vm436, %v462, %v463
      %v465 = vrot.slane %v376, 1
      %v466 = vsel %vm436, %v463, %v465
      %v467 = vrot.slane %v377, 1
      %v468 = vrot.slane %v378, 1
      %v469 = vsel %vm436, %v467, %v468
      %v470 = vrot.slane %v379, 1
      %v471 = vsel %vm436, %v468, %v470
      %v472 = vrot.slane %v380, 1
      %v473 = vrot.slane %v381, 1
      %v474 = vsel %vm436, %v472, %v473
      %v475 = vrot.slane %v382, 1
      %v476 = vsel %vm436, %v473, %v475
      %v477 = vrot.slane %v383, 1
      %v478 = vrot.slane %v384, 1
      %v479 = vsel %vm436, %v477, %v478
      %v480 = vrot.slane %v385, 1
      %v481 = vsel %vm436, %v478, %v480
      %v482 = vrot.slane %v386, 1
      %v483 = vrot.slane %v387, 1
      %v484 = vsel %vm436, %v482, %v483
      %v485 = vrot.slane %v388, 1
      %v486 = vsel %vm436, %v483, %v485
      %v507 = vpack.c.bf16 %v441, %v439
      %v508 = vpack.c.bf16 %v446, %v444
      %v509 = vpack.c.bf16 %v451, %v449
      %v510 = vpack.c.bf16 %v456, %v454
      %v511 = vpack.c.bf16 %v461, %v459
      %v512 = vpack.c.bf16 %v466, %v464
      %v513 = vpack.c.bf16 %v471, %v469
      %v514 = vpack.c.bf16 %v476, %v474
      %v515 = vpack.c.bf16 %v481, %v479
      %v516 = vpack.c.bf16 %v486, %v484
      %s517 = scalar_lea.vmem %s1, 2
      %v518 = vld [vmem:[%s517] sm:$0x3]
      %vm519 = vcmask 31744
      %v521 = vsel %vm519, %v507, 0
      %v524 = vsel %vm519, %v508, 0
      %v527 = vsel %vm519, %v509, 0
      %v530 = vsel %vm519, %v510, 0
      %v533 = vsel %vm519, %v511, 0
      %v536 = vsel %vm519, %v512, 0
      %v539 = vsel %vm519, %v513, 0
      %v542 = vsel %vm519, %v514, 0
      %v545 = vsel %vm519, %v515, 0
      %v548 = vsel %vm519, %v516, 0
      %vm550 = vcmask 1041408
      %v552 = vsel %vm550, %v518, 0
      %554 = vmatprep.subr.bf16.mxu0 0
      %555 = vmatpush1.bf16.msra.mxu0 %v552
      %556 = vmatprep.subr.bf16.mxu0 0
      %557 = vmatpush1.bf16.msra.mxu0 0
      %558 = vmatprep.subr.bf16.mxu0 0
      %559 = vmatpush1.bf16.msra.mxu0 0
      %560 = vmatprep.subr.bf16.mxu0 0
      %561 = vmatpush1.bf16.msra.mxu0 0
      %562 = vmatprep.subr.bf16.mxu0 0
      %563 = vmatpush1.bf16.msra.mxu0 0
      %564 = vmatprep.subr.bf16.mxu0 0
      %565 = vmatpush1.bf16.msra.mxu0 0
      %566 = vmatprep.subr.bf16.mxu0 0
      %567 = vmatpush1.bf16.msra.mxu0 0
      %568 = vmatprep.subr.bf16.mxu0 0
      %569 = vmatpush1.bf16.msra.mxu0 0
      %570 = vmatprep.subr.bf16.mxu0 0
      %571 = vmatpush1.bf16.msra.mxu0 0
      %572 = vmatprep.subr.bf16.mxu0 0
      %573 = vmatpush1.bf16.msra.mxu0 0
      %574 = vmatprep.subr.bf16.mxu0 0
      %575 = vmatpush1.bf16.msra.mxu0 0
      %576 = vmatprep.subr.bf16.mxu0 0
      %577 = vmatpush1.bf16.msra.mxu0 0
      %578 = vmatprep.subr.bf16.mxu0 0
      %579 = vmatpush1.bf16.msra.mxu0 0
      %580 = vmatprep.subr.bf16.mxu0 0
      %581 = vmatpush1.bf16.msra.mxu0 0
      %582 = vmatprep.subr.bf16.mxu0 0
      %583 = vmatpush1.bf16.msra.mxu0 0
      %584 = vmatprep.subr.bf16.mxu0 0
      %585 = vmatpush1.bf16.msra.mxu0 0
      %586 = vmatprep.mubr.bf16.mxu0 0
      %587 = vmatmul.mubr.bf16.gmra.mrb[0].mxu0 %v521
      %v588 = vpop.f32.mrb[0].mxu0
      %v589 = vadd.f32 0.0, %v588
      %v590 = vpop.f32.mrb[0].mxu0
      %v591 = vpop.f32.mrb[0].mxu0
      %v592 = vadd.f32 0.0, %v591
      %v593 = vpop.f32.mrb[0].mxu0
      %594 = vmatprep.mubr.bf16.mxu0 0
      %595 = vmatmul.mubr.bf16.gmra.mrb[0].mxu0 %v524
      %v596 = vpop.f32.mrb[0].mxu0
      %v597 = vadd.f32 0.0, %v596
      %v598 = vpop.f32.mrb[0].mxu0
      %v599 = vpop.f32.mrb[0].mxu0
      %v600 = vadd.f32 0.0, %v599
      %v601 = vpop.f32.mrb[0].mxu0
      %602 = vmatprep.mubr.bf16.mxu0 0
      %603 = vmatmul.mubr.bf16.gmra.mrb[0].mxu0 %v527
      %v604 = vpop.f32.mrb[0].mxu0
      %v605 = vadd.f32 0.0, %v604
      %v606 = vpop.f32.mrb[0].mxu0
      %v607 = vpop.f32.mrb[0].mxu0
      %v608 = vadd.f32 0.0, %v607
      %v609 = vpop.f32.mrb[0].mxu0
      %610 = vmatprep.mubr.bf16.mxu0 0
      %611 = vmatmul.mubr.bf16.gmra.mrb[0].mxu0 %v530
      %v612 = vpop.f32.mrb[0].mxu0
      %v613 = vadd.f32 0.0, %v612
      %v614 = vpop.f32.mrb[0].mxu0
      %v615 = vpop.f32.mrb[0].mxu0
      %v616 = vadd.f32 0.0, %v615
      %v617 = vpop.f32.mrb[0].mxu0
      %618 = vmatprep.mubr.bf16.mxu0 0
      %619 = vmatmul.mubr.bf16.gmra.mrb[0].mxu0 %v533
      %v620 = vpop.f32.mrb[0].mxu0
      %v621 = vadd.f32 0.0, %v620
      %v622 = vpop.f32.mrb[0].mxu0
      %v623 = vpop.f32.mrb[0].mxu0
      %v624 = vadd.f32 0.0, %v623
      %v625 = vpop.f32.mrb[0].mxu0
      %626 = vmatprep.mubr.bf16.mxu0 0
      %627 = vmatmul.mubr.bf16.gmra.mrb[0].mxu0 %v536
      %v628 = vpop.f32.mrb[0].mxu0
      %v629 = vadd.f32 0.0, %v628
      %v630 = vpop.f32.mrb[0].mxu0
      %v631 = vpop.f32.mrb[0].mxu0
      %v632 = vadd.f32 0.0, %v631
      %v633 = vpop.f32.mrb[0].mxu0
      %634 = vmatprep.mubr.bf16.mxu0 0
      %635 = vmatmul.mubr.bf16.gmra.mrb[0].mxu0 %v539
      %v636 = vpop.f32.mrb[0].mxu0
      %v637 = vadd.f32 0.0, %v636
      %v638 = vpop.f32.mrb[0].mxu0
      %v639 = vpop.f32.mrb[0].mxu0
      %v640 = vadd.f32 0.0, %v639
      %v641 = vpop.f32.mrb[0].mxu0
      %642 = vmatprep.mubr.bf16.mxu0 0
      %643 = vmatmul.mubr.bf16.gmra.mrb[0].mxu0 %v542
      %v644 = vpop.f32.mrb[0].mxu0
      %v645 = vadd.f32 0.0, %v644
      %v646 = vpop.f32.mrb[0].mxu0
      %v647 = vpop.f32.mrb[0].mxu0
      %v648 = vadd.f32 0.0, %v647
      %v649 = vpop.f32.mrb[0].mxu0
      %650 = vmatprep.mubr.bf16.mxu0 0
      %651 = vmatmul.mubr.bf16.gmra.mrb[0].mxu0 %v545
      %v652 = vpop.f32.mrb[0].mxu0
      %v653 = vadd.f32 0.0, %v652
      %v654 = vpop.f32.mrb[0].mxu0
      %v655 = vpop.f32.mrb[0].mxu0
      %v656 = vadd.f32 0.0, %v655
      %v657 = vpop.f32.mrb[0].mxu0
      %658 = vmatprep.mubr.bf16.mxu0 0
      %659 = vmatmul.mubr.bf16.gmra.mrb[0].mxu0 %v548
      %v660 = vpop.f32.mrb[0].mxu0
      %v661 = vadd.f32 0.0, %v660
      %v662 = vpop.f32.mrb[0].mxu0
      %v663 = vpop.f32.mrb[0].mxu0
      %v664 = vadd.f32 0.0, %v663
      %v665 = vpop.f32.mrb[0].mxu0
      %666 = vdwg.mxu0
      %v668 = vsel %vm519, %v395, 0
      %v671 = vsel %vm519, %v396, 0
      %v674 = vsel %vm519, %v397, 0
      %v677 = vsel %vm519, %v398, 0
      %v680 = vsel %vm519, %v399, 0
      %v683 = vsel %vm519, %v400, 0
      %v686 = vsel %vm519, %v401, 0
      %v689 = vsel %vm519, %v402, 0
      %v692 = vsel %vm519, %v403, 0
      %v695 = vsel %vm519, %v404, 0
      %v698 = vsel %vm550, %v405, 0
      %700 = vmatprep.subr.bf16.mxu0 0
      %701 = vmatpush1.bf16.msra.mxu0 %v698
      %702 = vmatprep.subr.bf16.mxu0 0
      %703 = vmatpush1.bf16.msra.mxu0 0
      %704 = vmatprep.subr.bf16.mxu0 0
      %705 = vmatpush1.bf16.msra.mxu0 0
      %706 = vmatprep.subr.bf16.mxu0 0
      %707 = vmatpush1.bf16.msra.mxu0 0
      %708 = vmatprep.subr.bf16.mxu0 0
      %709 = vmatpush1.bf16.msra.mxu0 0
      %710 = vmatprep.subr.bf16.mxu0 0
      %711 = vmatpush1.bf16.msra.mxu0 0
      %712 = vmatprep.subr.bf16.mxu0 0
      %713 = vmatpush1.bf16.msra.mxu0 0
      %714 = vmatprep.subr.bf16.mxu0 0
      %715 = vmatpush1.bf16.msra.mxu0 0
      %716 = vmatprep.subr.bf16.mxu0 0
      %717 = vmatpush1.bf16.msra.mxu0 0
      %718 = vmatprep.subr.bf16.mxu0 0
      %719 = vmatpush1.bf16.msra.mxu0 0
      %720 = vmatprep.subr.bf16.mxu0 0
      %721 = vmatpush1.bf16.msra.mxu0 0
      %722 = vmatprep.subr.bf16.mxu0 0
      %723 = vmatpush1.bf16.msra.mxu0 0
      %724 = vmatprep.subr.bf16.mxu0 0
      %725 = vmatpush1.bf16.msra.mxu0 0
      %726 = vmatprep.subr.bf16.mxu0 0
      %727 = vmatpush1.bf16.msra.mxu0 0
      %728 = vmatprep.subr.bf16.mxu0 0
      %729 = vmatpush1.bf16.msra.mxu0 0
      %730 = vmatprep.subr.bf16.mxu0 0
      %731 = vmatpush1.bf16.msra.mxu0 0
      %732 = vmatprep.mubr.bf16.mxu0 0
      %733 = vmatmul.mubr.bf16.gmra.mrb[0].mxu0 %v668
      %v734 = vpop.f32.mrb[0].mxu0
      %v735 = vadd.f32 %v589, %v734
      %v736 = vpop.f32.mrb[0].mxu0
      %v737 = vpop.f32.mrb[0].mxu0
      %v738 = vadd.f32 %v592, %v737
      %v739 = vpop.f32.mrb[0].mxu0
      %740 = vmatprep.mubr.bf16.mxu0 0
      %741 = vmatmul.mubr.bf16.gmra.mrb[0].mxu0 %v671
      %v742 = vpop.f32.mrb[0].mxu0
      %v743 = vadd.f32 %v597, %v742
      %v744 = vpop.f32.mrb[0].mxu0
      %v745 = vpop.f32.mrb[0].mxu0
      %v746 = vadd.f32 %v600, %v745
      %v747 = vpop.f32.mrb[0].mxu0
      %748 = vmatprep.mubr.bf16.mxu0 0
      %749 = vmatmul.mubr.bf16.gmra.mrb[0].mxu0 %v674
      %v750 = vpop.f32.mrb[0].mxu0
      %v751 = vadd.f32 %v605, %v750
      %v752 = vpop.f32.mrb[0].mxu0
      %v753 = vpop.f32.mrb[0].mxu0
      %v754 = vadd.f32 %v608, %v753
      %v755 = vpop.f32.mrb[0].mxu0
      %756 = vmatprep.mubr.bf16.mxu0 0
      %757 = vmatmul.mubr.bf16.gmra.mrb[0].mxu0 %v677
      %v758 = vpop.f32.mrb[0].mxu0
      %v759 = vadd.f32 %v613, %v758
      %v760 = vpop.f32.mrb[0].mxu0
      %v761 = vpop.f32.mrb[0].mxu0
      %v762 = vadd.f32 %v616, %v761
      %v763 = vpop.f32.mrb[0].mxu0
      %764 = vmatprep.mubr.bf16.mxu0 0
      %765 = vmatmul.mubr.bf16.gmra.mrb[0].mxu0 %v680
      %v766 = vpop.f32.mrb[0].mxu0
      %v767 = vadd.f32 %v621, %v766
      %v768 = vpop.f32.mrb[0].mxu0
      %v769 = vpop.f32.mrb[0].mxu0
      %v770 = vadd.f32 %v624, %v769
      %v771 = vpop.f32.mrb[0].mxu0
      %772 = vmatprep.mubr.bf16.mxu0 0
      %773 = vmatmul.mubr.bf16.gmra.mrb[0].mxu0 %v683
      %v774 = vpop.f32.mrb[0].mxu0
      %v775 = vadd.f32 %v629, %v774
      %v776 = vpop.f32.mrb[0].mxu0
      %v777 = vpop.f32.mrb[0].mxu0
      %v778 = vadd.f32 %v632, %v777
      %v779 = vpop.f32.mrb[0].mxu0
      %780 = vmatprep.mubr.bf16.mxu0 0
      %781 = vmatmul.mubr.bf16.gmra.mrb[0].mxu0 %v686
      %v782 = vpop.f32.mrb[0].mxu0
      %v783 = vadd.f32 %v637, %v782
      %v784 = vpop.f32.mrb[0].mxu0
      %v785 = vpop.f32.mrb[0].mxu0
      %v786 = vadd.f32 %v640, %v785
      %v787 = vpop.f32.mrb[0].mxu0
      %788 = vmatprep.mubr.bf16.mxu0 0
      %789 = vmatmul.mubr.bf16.gmra.mrb[0].mxu0 %v689
      %v790 = vpop.f32.mrb[0].mxu0
      %v791 = vadd.f32 %v645, %v790
      %v792 = vpop.f32.mrb[0].mxu0
      %v793 = vpop.f32.mrb[0].mxu0
      %v794 = vadd.f32 %v648, %v793
      %v795 = vpop.f32.mrb[0].mxu0
      %796 = vmatprep.mubr.bf16.mxu0 0
      %797 = vmatmul.mubr.bf16.gmra.mrb[0].mxu0 %v692
      %v798 = vpop.f32.mrb[0].mxu0
      %v799 = vadd.f32 %v653, %v798
      %v800 = vpop.f32.mrb[0].mxu0
      %v801 = vpop.f32.mrb[0].mxu0
      %v802 = vadd.f32 %v656, %v801
      %v803 = vpop.f32.mrb[0].mxu0
      %804 = vmatprep.mubr.bf16.mxu0 0
      %805 = vmatmul.mubr.bf16.gmra.mrb[0].mxu0 %v695
      %v806 = vpop.f32.mrb[0].mxu0
      %v807 = vadd.f32 %v661, %v806
      %v808 = vpop.f32.mrb[0].mxu0
      %v809 = vpop.f32.mrb[0].mxu0
      %v810 = vadd.f32 %v664, %v809
      %v811 = vpop.f32.mrb[0].mxu0
      %812 = vdwg.mxu0
      %vm813 = vcmask 1045504
      %v814 = vrot.slane %v359, 2
      %v815 = vrot.slane %v360, 2
      %v816 = vsel %vm813, %v814, %v815
      %v817 = vrot.slane %v361, 2
      %v818 = vsel %vm813, %v815, %v817
      %v819 = vrot.slane %v362, 2
      %v820 = vrot.slane %v363, 2
      %v821 = vsel %vm813, %v819, %v820
      %v822 = vrot.slane %v364, 2
      %v823 = vsel %vm813, %v820, %v822
      %v824 = vrot.slane %v365, 2
      %v825 = vrot.slane %v366, 2
      %v826 = vsel %vm813, %v824, %v825
      %v827 = vrot.slane %v367, 2
      %v828 = vsel %vm813, %v825, %v827
      %v829 = vrot.slane %v368, 2
      %v830 = vrot.slane %v369, 2
      %v831 = vsel %vm813, %v829, %v830
      %v832 = vrot.slane %v370, 2
      %v833 = vsel %vm813, %v830, %v832
      %v834 = vrot.slane %v371, 2
      %v835 = vrot.slane %v372, 2
      %v836 = vsel %vm813, %v834, %v835
      %v837 = vrot.slane %v373, 2
      %v838 = vsel %vm813, %v835, %v837
      %v839 = vrot.slane %v374, 2
      %v840 = vrot.slane %v375, 2
      %v841 = vsel %vm813, %v839, %v840
      %v842 = vrot.slane %v376, 2
      %v843 = vsel %vm813, %v840, %v842
      %v844 = vrot.slane %v377, 2
      %v845 = vrot.slane %v378, 2
      %v846 = vsel %vm813, %v844, %v845
      %v847 = vrot.slane %v379, 2
      %v848 = vsel %vm813, %v845, %v847
      %v849 = vrot.slane %v380, 2
      %v850 = vrot.slane %v381, 2
      %v851 = vsel %vm813, %v849, %v850
      %v852 = vrot.slane %v382, 2
      %v853 = vsel %vm813, %v850, %v852
      %v854 = vrot.slane %v383, 2
      %v855 = vrot.slane %v384, 2
      %v856 = vsel %vm813, %v854, %v855
      %v857 = vrot.slane %v385, 2
      %v858 = vsel %vm813, %v855, %v857
      %v859 = vrot.slane %v386, 2
      %v860 = vrot.slane %v387, 2
      %v861 = vsel %vm813, %v859, %v860
      %v862 = vrot.slane %v388, 2
      %v863 = vsel %vm813, %v860, %v862
      %v884 = vpack.c.bf16 %v818, %v816
      %v885 = vpack.c.bf16 %v823, %v821
      %v886 = vpack.c.bf16 %v828, %v826
      %v887 = vpack.c.bf16 %v833, %v831
      %v888 = vpack.c.bf16 %v838, %v836
      %v889 = vpack.c.bf16 %v843, %v841
      %v890 = vpack.c.bf16 %v848, %v846
      %v891 = vpack.c.bf16 %v853, %v851
      %v892 = vpack.c.bf16 %v858, %v856
      %v893 = vpack.c.bf16 %v863, %v861
      %s894 = scalar_lea.vmem %s1, 4
      %v895 = vld [vmem:[%s894] sm:$0x3]
      %v897 = vsel %vm519, %v884, 0
      %v900 = vsel %vm519, %v885, 0
      %v903 = vsel %vm519, %v886, 0
      %v906 = vsel %vm519, %v887, 0
      %v909 = vsel %vm519, %v888, 0
      %v912 = vsel %vm519, %v889, 0
      %v915 = vsel %vm519, %v890, 0
      %v918 = vsel %vm519, %v891, 0
      %v921 = vsel %vm519, %v892, 0
      %v924 = vsel %vm519, %v893, 0
      %v927 = vsel %vm550, %v895, 0
      %929 = vmatprep.subr.bf16.mxu0 0
      %930 = vmatpush1.bf16.msra.mxu0 %v927
      %931 = vmatprep.subr.bf16.mxu0 0
      %932 = vmatpush1.bf16.msra.mxu0 0
      %933 = vmatprep.subr.bf16.mxu0 0
      %934 = vmatpush1.bf16.msra.mxu0 0
      %935 = vmatprep.subr.bf16.mxu0 0
      %936 = vmatpush1.bf16.msra.mxu0 0
      %937 = vmatprep.subr.bf16.mxu0 0
      %938 = vmatpush1.bf16.msra.mxu0 0
      %939 = vmatprep.subr.bf16.mxu0 0
      %940 = vmatpush1.bf16.msra.mxu0 0
      %941 = vmatprep.subr.bf16.mxu0 0
      %942 = vmatpush1.bf16.msra.mxu0 0
      %943 = vmatprep.subr.bf16.mxu0 0
      %944 = vmatpush1.bf16.msra.mxu0 0
      %945 = vmatprep.subr.bf16.mxu0 0
      %946 = vmatpush1.bf16.msra.mxu0 0
      %947 = vmatprep.subr.bf16.mxu0 0
      %948 = vmatpush1.bf16.msra.mxu0 0
      %949 = vmatprep.subr.bf16.mxu0 0
      %950 = vmatpush1.bf16.msra.mxu0 0
      %951 = vmatprep.subr.bf16.mxu0 0
      %952 = vmatpush1.bf16.msra.mxu0 0
      %953 = vmatprep.subr.bf16.mxu0 0
      %954 = vmatpush1.bf16.msra.mxu0 0
      %955 = vmatprep.subr.bf16.mxu0 0
      %956 = vmatpush1.bf16.msra.mxu0 0
      %957 = vmatprep.subr.bf16.mxu0 0
      %958 = vmatpush1.bf16.msra.mxu0 0
      %959 = vmatprep.subr.bf16.mxu0 0
      %960 = vmatpush1.bf16.msra.mxu0 0
      %961 = vmatprep.mubr.bf16.mxu0 0
      %962 = vmatmul.mubr.bf16.gmra.mrb[0].mxu0 %v897
      %v963 = vpop.f32.mrb[0].mxu0
      %v964 = vadd.f32 0.0, %v963
      %v965 = vpop.f32.mrb[0].mxu0
      %v966 = vpop.f32.mrb[0].mxu0
      %v967 = vadd.f32 0.0, %v966
      %v968 = vpop.f32.mrb[0].mxu0
      %969 = vmatprep.mubr.bf16.mxu0 0
      %970 = vmatmul.mubr.bf16.gmra.mrb[0].mxu0 %v900
      %v971 = vpop.f32.mrb[0].mxu0
      %v972 = vadd.f32 0.0, %v971
      %v973 = vpop.f32.mrb[0].mxu0
      %v974 = vpop.f32.mrb[0].mxu0
      %v975 = vadd.f32 0.0, %v974
      %v976 = vpop.f32.mrb[0].mxu0
      %977 = vmatprep.mubr.bf16.mxu0 0
      %978 = vmatmul.mubr.bf16.gmra.mrb[0].mxu0 %v903
      %v979 = vpop.f32.mrb[0].mxu0
      %v980 = vadd.f32 0.0, %v979
      %v981 = vpop.f32.mrb[0].mxu0
      %v982 = vpop.f32.mrb[0].mxu0
      %v983 = vadd.f32 0.0, %v982
      %v984 = vpop.f32.mrb[0].mxu0
      %985 = vmatprep.mubr.bf16.mxu0 0
      %986 = vmatmul.mubr.bf16.gmra.mrb[0].mxu0 %v906
      %v987 = vpop.f32.mrb[0].mxu0
      %v988 = vadd.f32 0.0, %v987
      %v989 = vpop.f32.mrb[0].mxu0
      %v990 = vpop.f32.mrb[0].mxu0
      %v991 = vadd.f32 0.0, %v990
      %v992 = vpop.f32.mrb[0].mxu0
      %993 = vmatprep.mubr.bf16.mxu0 0
      %994 = vmatmul.mubr.bf16.gmra.mrb[0].mxu0 %v909
      %v995 = vpop.f32.mrb[0].mxu0
      %v996 = vadd.f32 0.0, %v995
      %v997 = vpop.f32.mrb[0].mxu0
      %v998 = vpop.f32.mrb[0].mxu0
      %v999 = vadd.f32 0.0, %v998
      %v1000 = vpop.f32.mrb[0].mxu0
      %1001 = vmatprep.mubr.bf16.mxu0 0
      %1002 = vmatmul.mubr.bf16.gmra.mrb[0].mxu0 %v912
      %v1003 = vpop.f32.mrb[0].mxu0
      %v1004 = vadd.f32 0.0, %v1003
      %v1005 = vpop.f32.mrb[0].mxu0
      %v1006 = vpop.f32.mrb[0].mxu0
      %v1007 = vadd.f32 0.0, %v1006
      %v1008 = vpop.f32.mrb[0].mxu0
      %1009 = vmatprep.mubr.bf16.mxu0 0
      %1010 = vmatmul.mubr.bf16.gmra.mrb[0].mxu0 %v915
      %v1011 = vpop.f32.mrb[0].mxu0
      %v1012 = vadd.f32 0.0, %v1011
      %v1013 = vpop.f32.mrb[0].mxu0
      %v1014 = vpop.f32.mrb[0].mxu0
      %v1015 = vadd.f32 0.0, %v1014
      %v1016 = vpop.f32.mrb[0].mxu0
      %1017 = vmatprep.mubr.bf16.mxu0 0
      %1018 = vmatmul.mubr.bf16.gmra.mrb[0].mxu0 %v918
      %v1019 = vpop.f32.mrb[0].mxu0
      %v1020 = vadd.f32 0.0, %v1019
      %v1021 = vpop.f32.mrb[0].mxu0
      %v1022 = vpop.f32.mrb[0].mxu0
      %v1023 = vadd.f32 0.0, %v1022
      %v1024 = vpop.f32.mrb[0].mxu0
      %1025 = vmatprep.mubr.bf16.mxu0 0
      %1026 = vmatmul.mubr.bf16.gmra.mrb[0].mxu0 %v921
      %v1027 = vpop.f32.mrb[0].mxu0
      %v1028 = vadd.f32 0.0, %v1027
      %v1029 = vpop.f32.mrb[0].mxu0
      %v1030 = vpop.f32.mrb[0].mxu0
      %v1031 = vadd.f32 0.0, %v1030
      %v1032 = vpop.f32.mrb[0].mxu0
      %1033 = vmatprep.mubr.bf16.mxu0 0
      %1034 = vmatmul.mubr.bf16.gmra.mrb[0].mxu0 %v924
      %v1035 = vpop.f32.mrb[0].mxu0
      %v1036 = vadd.f32 0.0, %v1035
      %v1037 = vpop.f32.mrb[0].mxu0
      %v1038 = vpop.f32.mrb[0].mxu0
      %v1039 = vadd.f32 0.0, %v1038
      %v1040 = vpop.f32.mrb[0].mxu0
      %1041 = vdwg.mxu0
      %v1042 = vadd.f32 %v735, %v964
      %v1043 = vadd.f32 %v738, %v967
      %v1044 = vadd.f32 %v743, %v972
      %v1045 = vadd.f32 %v746, %v975
      %v1046 = vadd.f32 %v751, %v980
      %v1047 = vadd.f32 %v754, %v983
      %v1048 = vadd.f32 %v759, %v988
      %v1049 = vadd.f32 %v762, %v991
      %v1050 = vadd.f32 %v767, %v996
      %v1051 = vadd.f32 %v770, %v999
      %v1052 = vadd.f32 %v775, %v1004
      %v1053 = vadd.f32 %v778, %v1007
      %v1054 = vadd.f32 %v783, %v1012
      %v1055 = vadd.f32 %v786, %v1015
      %v1056 = vadd.f32 %v791, %v1020
      %v1057 = vadd.f32 %v794, %v1023
      %v1058 = vadd.f32 %v799, %v1028
      %v1059 = vadd.f32 %v802, %v1031
      %v1060 = vadd.f32 %v807, %v1036
      %v1061 = vadd.f32 %v810, %v1039
      %v1062 = vpack.c.bf16 %v390, %v389
      %s1063 = scalar_lea.vmem %s1, 6
      %v1064 = vld [vmem:[%s1063] sm:$0x3]
      %v1066 = vsel %vm519, %v1062, 0
      %v1069 = vsel %vm550, %v1064, 0
      %1071 = vmatprep.subr.bf16.mxu0 0
      %1072 = vmatpush1.bf16.msra.mxu0 %v1069
      %1073 = vmatprep.subr.bf16.mxu0 0
      %1074 = vmatpush1.bf16.msra.mxu0 0
      %1075 = vmatprep.subr.bf16.mxu0 0
      %1076 = vmatpush1.bf16.msra.mxu0 0
      %1077 = vmatprep.subr.bf16.mxu0 0
      %1078 = vmatpush1.bf16.msra.mxu0 0
      %1079 = vmatprep.subr.bf16.mxu0 0
      %1080 = vmatpush1.bf16.msra.mxu0 0
      %1081 = vmatprep.subr.bf16.mxu0 0
      %1082 = vmatpush1.bf16.msra.mxu0 0
      %1083 = vmatprep.subr.bf16.mxu0 0
      %1084 = vmatpush1.bf16.msra.mxu0 0
      %1085 = vmatprep.subr.bf16.mxu0 0
      %1086 = vmatpush1.bf16.msra.mxu0 0
      %1087 = vmatprep.subr.bf16.mxu0 0
      %1088 = vmatpush1.bf16.msra.mxu0 0
      %1089 = vmatprep.subr.bf16.mxu0 0
      %1090 = vmatpush1.bf16.msra.mxu0 0
      %1091 = vmatprep.subr.bf16.mxu0 0
      %1092 = vmatpush1.bf16.msra.mxu0 0
      %1093 = vmatprep.subr.bf16.mxu0 0
      %1094 = vmatpush1.bf16.msra.mxu0 0
      %1095 = vmatprep.subr.bf16.mxu0 0
      %1096 = vmatpush1.bf16.msra.mxu0 0
      %1097 = vmatprep.subr.bf16.mxu0 0
      %1098 = vmatpush1.bf16.msra.mxu0 0
      %1099 = vmatprep.subr.bf16.mxu0 0
      %1100 = vmatpush1.bf16.msra.mxu0 0
      %1101 = vmatprep.subr.bf16.mxu0 0
      %1102 = vmatpush1.bf16.msra.mxu0 0
      %1103 = vmatprep.mubr.bf16.mxu0 0
      %1104 = vmatmul.mubr.bf16.gmra.mrb[0].mxu0 %v671
      %v1105 = vpop.f32.mrb[0].mxu0
      %v1106 = vadd.f32 0.0, %v1105
      %v1107 = vpop.f32.mrb[0].mxu0
      %v1108 = vpop.f32.mrb[0].mxu0
      %v1109 = vadd.f32 0.0, %v1108
      %v1110 = vpop.f32.mrb[0].mxu0
      %1111 = vmatprep.mubr.bf16.mxu0 0
      %1112 = vmatmul.mubr.bf16.gmra.mrb[0].mxu0 %v674
      %v1113 = vpop.f32.mrb[0].mxu0
      %v1114 = vadd.f32 0.0, %v1113
      %v1115 = vpop.f32.mrb[0].mxu0
      %v1116 = vpop.f32.mrb[0].mxu0
      %v1117 = vadd.f32 0.0, %v1116
      %v1118 = vpop.f32.mrb[0].mxu0
      %1119 = vmatprep.mubr.bf16.mxu0 0
      %1120 = vmatmul.mubr.bf16.gmra.mrb[0].mxu0 %v677
      %v1121 = vpop.f32.mrb[0].mxu0
      %v1122 = vadd.f32 0.0, %v1121
      %v1123 = vpop.f32.mrb[0].mxu0
      %v1124 = vpop.f32.mrb[0].mxu0
      %v1125 = vadd.f32 0.0, %v1124
      %v1126 = vpop.f32.mrb[0].mxu0
      %1127 = vmatprep.mubr.bf16.mxu0 0
      %1128 = vmatmul.mubr.bf16.gmra.mrb[0].mxu0 %v680
      %v1129 = vpop.f32.mrb[0].mxu0
      %v1130 = vadd.f32 0.0, %v1129
      %v1131 = vpop.f32.mrb[0].mxu0
      %v1132 = vpop.f32.mrb[0].mxu0
      %v1133 = vadd.f32 0.0, %v1132
      %v1134 = vpop.f32.mrb[0].mxu0
      %1135 = vmatprep.mubr.bf16.mxu0 0
      %1136 = vmatmul.mubr.bf16.gmra.mrb[0].mxu0 %v683
      %v1137 = vpop.f32.mrb[0].mxu0
      %v1138 = vadd.f32 0.0, %v1137
      %v1139 = vpop.f32.mrb[0].mxu0
      %v1140 = vpop.f32.mrb[0].mxu0
      %v1141 = vadd.f32 0.0, %v1140
      %v1142 = vpop.f32.mrb[0].mxu0
      %1143 = vmatprep.mubr.bf16.mxu0 0
      %1144 = vmatmul.mubr.bf16.gmra.mrb[0].mxu0 %v686
      %v1145 = vpop.f32.mrb[0].mxu0
      %v1146 = vadd.f32 0.0, %v1145
      %v1147 = vpop.f32.mrb[0].mxu0
      %v1148 = vpop.f32.mrb[0].mxu0
      %v1149 = vadd.f32 0.0, %v1148
      %v1150 = vpop.f32.mrb[0].mxu0
      %1151 = vmatprep.mubr.bf16.mxu0 0
      %1152 = vmatmul.mubr.bf16.gmra.mrb[0].mxu0 %v689
      %v1153 = vpop.f32.mrb[0].mxu0
      %v1154 = vadd.f32 0.0, %v1153
      %v1155 = vpop.f32.mrb[0].mxu0
      %v1156 = vpop.f32.mrb[0].mxu0
      %v1157 = vadd.f32 0.0, %v1156
      %v1158 = vpop.f32.mrb[0].mxu0
      %1159 = vmatprep.mubr.bf16.mxu0 0
      %1160 = vmatmul.mubr.bf16.gmra.mrb[0].mxu0 %v692
      %v1161 = vpop.f32.mrb[0].mxu0
      %v1162 = vadd.f32 0.0, %v1161
      %v1163 = vpop.f32.mrb[0].mxu0
      %v1164 = vpop.f32.mrb[0].mxu0
      %v1165 = vadd.f32 0.0, %v1164
      %v1166 = vpop.f32.mrb[0].mxu0
      %1167 = vmatprep.mubr.bf16.mxu0 0
      %1168 = vmatmul.mubr.bf16.gmra.mrb[0].mxu0 %v695
      %v1169 = vpop.f32.mrb[0].mxu0
      %v1170 = vadd.f32 0.0, %v1169
      %v1171 = vpop.f32.mrb[0].mxu0
      %v1172 = vpop.f32.mrb[0].mxu0
      %v1173 = vadd.f32 0.0, %v1172
      %v1174 = vpop.f32.mrb[0].mxu0
      %1175 = vmatprep.mubr.bf16.mxu0 0
      %1176 = vmatmul.mubr.bf16.gmra.mrb[0].mxu0 %v1066
      %v1177 = vpop.f32.mrb[0].mxu0
      %v1178 = vadd.f32 0.0, %v1177
      %v1179 = vpop.f32.mrb[0].mxu0
      %v1180 = vpop.f32.mrb[0].mxu0
      %v1181 = vadd.f32 0.0, %v1180
      %v1182 = vpop.f32.mrb[0].mxu0
      %1183 = vdwg.mxu0
      %v1184 = vadd.f32 %v1042, %v1106
      %v1185 = vadd.f32 %v1043, %v1109
      %v1186 = vadd.f32 %v1044, %v1114
      %v1187 = vadd.f32 %v1045, %v1117
      %v1188 = vadd.f32 %v1046, %v1122
      %v1189 = vadd.f32 %v1047, %v1125
      %v1190 = vadd.f32 %v1048, %v1130
      %v1191 = vadd.f32 %v1049, %v1133
      %v1192 = vadd.f32 %v1050, %v1138
      %v1193 = vadd.f32 %v1051, %v1141
      %v1194 = vadd.f32 %v1052, %v1146
      %v1195 = vadd.f32 %v1053, %v1149
      %v1196 = vadd.f32 %v1054, %v1154
      %v1197 = vadd.f32 %v1055, %v1157
      %v1198 = vadd.f32 %v1056, %v1162
      %v1199 = vadd.f32 %v1057, %v1165
      %v1200 = vadd.f32 %v1058, %v1170
      %v1201 = vadd.f32 %v1059, %v1173
      %v1202 = vadd.f32 %v1060, %v1178
      %v1203 = vadd.f32 %v1061, %v1181
      %v1207 = vrot.slane %v389, 1
      %v1208 = vrot.slane %v390, 1
      %v1209 = vsel %vm436, %v1207, %v1208
      %v1210 = vrot.slane %v391, 1
      %v1211 = vsel %vm436, %v1208, %v1210
      %v1214 = vpack.c.bf16 %v1211, %v1209
      %s1215 = scalar_lea.vmem %s1, 8
      %v1216 = vld [vmem:[%s1215] sm:$0x3]
      %v1218 = vsel %vm519, %v1214, 0
      %v1221 = vsel %vm550, %v1216, 0
      %1223 = vmatprep.subr.bf16.mxu0 0
      %1224 = vmatpush1.bf16.msra.mxu0 %v1221
      %1225 = vmatprep.subr.bf16.mxu0 0
      %1226 = vmatpush1.bf16.msra.mxu0 0
      %1227 = vmatprep.subr.bf16.mxu0 0
      %1228 = vmatpush1.bf16.msra.mxu0 0
      %1229 = vmatprep.subr.bf16.mxu0 0
      %1230 = vmatpush1.bf16.msra.mxu0 0
      %1231 = vmatprep.subr.bf16.mxu0 0
      %1232 = vmatpush1.bf16.msra.mxu0 0
      %1233 = vmatprep.subr.bf16.mxu0 0
      %1234 = vmatpush1.bf16.msra.mxu0 0
      %1235 = vmatprep.subr.bf16.mxu0 0
      %1236 = vmatpush1.bf16.msra.mxu0 0
      %1237 = vmatprep.subr.bf16.mxu0 0
      %1238 = vmatpush1.bf16.msra.mxu0 0
      %1239 = vmatprep.subr.bf16.mxu0 0
      %1240 = vmatpush1.bf16.msra.mxu0 0
      %1241 = vmatprep.subr.bf16.mxu0 0
      %1242 = vmatpush1.bf16.msra.mxu0 0
      %1243 = vmatprep.subr.bf16.mxu0 0
      %1244 = vmatpush1.bf16.msra.mxu0 0
      %1245 = vmatprep.subr.bf16.mxu0 0
      %1246 = vmatpush1.bf16.msra.mxu0 0
      %1247 = vmatprep.subr.bf16.mxu0 0
      %1248 = vmatpush1.bf16.msra.mxu0 0
      %1249 = vmatprep.subr.bf16.mxu0 0
      %1250 = vmatpush1.bf16.msra.mxu0 0
      %1251 = vmatprep.subr.bf16.mxu0 0
      %1252 = vmatpush1.bf16.msra.mxu0 0
      %1253 = vmatprep.subr.bf16.mxu0 0
      %1254 = vmatpush1.bf16.msra.mxu0 0
      %1255 = vmatprep.mubr.bf16.mxu0 0
      %1256 = vmatmul.mubr.bf16.gmra.mrb[0].mxu0 %v524
      %v1257 = vpop.f32.mrb[0].mxu0
      %v1258 = vadd.f32 0.0, %v1257
      %v1259 = vpop.f32.mrb[0].mxu0
      %v1260 = vpop.f32.mrb[0].mxu0
      %v1261 = vadd.f32 0.0, %v1260
      %v1262 = vpop.f32.mrb[0].mxu0
      %1263 = vmatprep.mubr.bf16.mxu0 0
      %1264 = vmatmul.mubr.bf16.gmra.mrb[0].mxu0 %v527
      %v1265 = vpop.f32.mrb[0].mxu0
      %v1266 = vadd.f32 0.0, %v1265
      %v1267 = vpop.f32.mrb[0].mxu0
      %v1268 = vpop.f32.mrb[0].mxu0
      %v1269 = vadd.f32 0.0, %v1268
      %v1270 = vpop.f32.mrb[0].mxu0
      %1271 = vmatprep.mubr.bf16.mxu0 0
      %1272 = vmatmul.mubr.bf16.gmra.mrb[0].mxu0 %v530
      %v1273 = vpop.f32.mrb[0].mxu0
      %v1274 = vadd.f32 0.0, %v1273
      %v1275 = vpop.f32.mrb[0].mxu0
      %v1276 = vpop.f32.mrb[0].mxu0
      %v1277 = vadd.f32 0.0, %v1276
      %v1278 = vpop.f32.mrb[0].mxu0
      %1279 = vmatprep.mubr.bf16.mxu0 0
      %1280 = vmatmul.mubr.bf16.gmra.mrb[0].mxu0 %v533
      %v1281 = vpop.f32.mrb[0].mxu0
      %v1282 = vadd.f32 0.0, %v1281
      %v1283 = vpop.f32.mrb[0].mxu0
      %v1284 = vpop.f32.mrb[0].mxu0
      %v1285 = vadd.f32 0.0, %v1284
      %v1286 = vpop.f32.mrb[0].mxu0
      %1287 = vmatprep.mubr.bf16.mxu0 0
      %1288 = vmatmul.mubr.bf16.gmra.mrb[0].mxu0 %v536
      %v1289 = vpop.f32.mrb[0].mxu0
      %v1290 = vadd.f32 0.0, %v1289
      %v1291 = vpop.f32.mrb[0].mxu0
      %v1292 = vpop.f32.mrb[0].mxu0
      %v1293 = vadd.f32 0.0, %v1292
      %v1294 = vpop.f32.mrb[0].mxu0
      %1295 = vmatprep.mubr.bf16.mxu0 0
      %1296 = vmatmul.mubr.bf16.gmra.mrb[0].mxu0 %v539
      %v1297 = vpop.f32.mrb[0].mxu0
      %v1298 = vadd.f32 0.0, %v1297
      %v1299 = vpop.f32.mrb[0].mxu0
      %v1300 = vpop.f32.mrb[0].mxu0
      %v1301 = vadd.f32 0.0, %v1300
      %v1302 = vpop.f32.mrb[0].mxu0
      %1303 = vmatprep.mubr.bf16.mxu0 0
      %1304 = vmatmul.mubr.bf16.gmra.mrb[0].mxu0 %v542
      %v1305 = vpop.f32.mrb[0].mxu0
      %v1306 = vadd.f32 0.0, %v1305
      %v1307 = vpop.f32.mrb[0].mxu0
      %v1308 = vpop.f32.mrb[0].mxu0
      %v1309 = vadd.f32 0.0, %v1308
      %v1310 = vpop.f32.mrb[0].mxu0
      %1311 = vmatprep.mubr.bf16.mxu0 0
      %1312 = vmatmul.mubr.bf16.gmra.mrb[0].mxu0 %v545
      %v1313 = vpop.f32.mrb[0].mxu0
      %v1314 = vadd.f32 0.0, %v1313
      %v1315 = vpop.f32.mrb[0].mxu0
      %v1316 = vpop.f32.mrb[0].mxu0
      %v1317 = vadd.f32 0.0, %v1316
      %v1318 = vpop.f32.mrb[0].mxu0
      %1319 = vmatprep.mubr.bf16.mxu0 0
      %1320 = vmatmul.mubr.bf16.gmra.mrb[0].mxu0 %v548
      %v1321 = vpop.f32.mrb[0].mxu0
      %v1322 = vadd.f32 0.0, %v1321
      %v1323 = vpop.f32.mrb[0].mxu0
      %v1324 = vpop.f32.mrb[0].mxu0
      %v1325 = vadd.f32 0.0, %v1324
      %v1326 = vpop.f32.mrb[0].mxu0
      %1327 = vmatprep.mubr.bf16.mxu0 0
      %1328 = vmatmul.mubr.bf16.gmra.mrb[0].mxu0 %v1218
      %v1329 = vpop.f32.mrb[0].mxu0
      %v1330 = vadd.f32 0.0, %v1329
      %v1331 = vpop.f32.mrb[0].mxu0
      %v1332 = vpop.f32.mrb[0].mxu0
      %v1333 = vadd.f32 0.0, %v1332
      %v1334 = vpop.f32.mrb[0].mxu0
      %1335 = vdwg.mxu0
      %v1336 = vadd.f32 %v1184, %v1258
      %v1337 = vadd.f32 %v1185, %v1261
      %v1338 = vadd.f32 %v1186, %v1266
      %v1339 = vadd.f32 %v1187, %v1269
      %v1340 = vadd.f32 %v1188, %v1274
      %v1341 = vadd.f32 %v1189, %v1277
      %v1342 = vadd.f32 %v1190, %v1282
      %v1343 = vadd.f32 %v1191, %v1285
      %v1344 = vadd.f32 %v1192, %v1290
      %v1345 = vadd.f32 %v1193, %v1293
      %v1346 = vadd.f32 %v1194, %v1298
      %v1347 = vadd.f32 %v1195, %v1301
      %v1348 = vadd.f32 %v1196, %v1306
      %v1349 = vadd.f32 %v1197, %v1309
      %v1350 = vadd.f32 %v1198, %v1314
      %v1351 = vadd.f32 %v1199, %v1317
      %v1352 = vadd.f32 %v1200, %v1322
      %v1353 = vadd.f32 %v1201, %v1325
      %v1354 = vadd.f32 %v1202, %v1330
      %v1355 = vadd.f32 %v1203, %v1333
      %v1356 = vrot.slane %v389, 2
      %v1357 = vrot.slane %v390, 2
      %v1358 = vsel %vm813, %v1356, %v1357
      %v1359 = vrot.slane %v391, 2
      %v1360 = vsel %vm813, %v1357, %v1359
      %v1363 = vpack.c.bf16 %v1360, %v1358
      %s1364 = scalar_lea.vmem %s1, 10
      %v1365 = vld [vmem:[%s1364] sm:$0x3]
      %v1367 = vsel %vm519, %v1363, 0
      %v1370 = vsel %vm550, %v1365, 0
      %1372 = vmatprep.subr.bf16.mxu0 0
      %1373 = vmatpush1.bf16.msra.mxu0 %v1370
      %1374 = vmatprep.subr.bf16.mxu0 0
      %1375 = vmatpush1.bf16.msra.mxu0 0
      %1376 = vmatprep.subr.bf16.mxu0 0
      %1377 = vmatpush1.bf16.msra.mxu0 0
      %1378 = vmatprep.subr.bf16.mxu0 0
      %1379 = vmatpush1.bf16.msra.mxu0 0
      %1380 = vmatprep.subr.bf16.mxu0 0
      %1381 = vmatpush1.bf16.msra.mxu0 0
      %1382 = vmatprep.subr.bf16.mxu0 0
      %1383 = vmatpush1.bf16.msra.mxu0 0
      %1384 = vmatprep.subr.bf16.mxu0 0
      %1385 = vmatpush1.bf16.msra.mxu0 0
      %1386 = vmatprep.subr.bf16.mxu0 0
      %1387 = vmatpush1.bf16.msra.mxu0 0
      %1388 = vmatprep.subr.bf16.mxu0 0
      %1389 = vmatpush1.bf16.msra.mxu0 0
      %1390 = vmatprep.subr.bf16.mxu0 0
      %1391 = vmatpush1.bf16.msra.mxu0 0
      %1392 = vmatprep.subr.bf16.mxu0 0
      %1393 = vmatpush1.bf16.msra.mxu0 0
      %1394 = vmatprep.subr.bf16.mxu0 0
      %1395 = vmatpush1.bf16.msra.mxu0 0
      %1396 = vmatprep.subr.bf16.mxu0 0
      %1397 = vmatpush1.bf16.msra.mxu0 0
      %1398 = vmatprep.subr.bf16.mxu0 0
      %1399 = vmatpush1.bf16.msra.mxu0 0
      %1400 = vmatprep.subr.bf16.mxu0 0
      %1401 = vmatpush1.bf16.msra.mxu0 0
      %1402 = vmatprep.subr.bf16.mxu0 0
      %1403 = vmatpush1.bf16.msra.mxu0 0
      %1404 = vmatprep.mubr.bf16.mxu0 0
      %1405 = vmatmul.mubr.bf16.gmra.mrb[0].mxu0 %v900
      %v1406 = vpop.f32.mrb[0].mxu0
      %v1407 = vadd.f32 0.0, %v1406
      %v1408 = vpop.f32.mrb[0].mxu0
      %v1409 = vpop.f32.mrb[0].mxu0
      %v1410 = vadd.f32 0.0, %v1409
      %v1411 = vpop.f32.mrb[0].mxu0
      %1412 = vmatprep.mubr.bf16.mxu0 0
      %1413 = vmatmul.mubr.bf16.gmra.mrb[0].mxu0 %v903
      %v1414 = vpop.f32.mrb[0].mxu0
      %v1415 = vadd.f32 0.0, %v1414
      %v1416 = vpop.f32.mrb[0].mxu0
      %v1417 = vpop.f32.mrb[0].mxu0
      %v1418 = vadd.f32 0.0, %v1417
      %v1419 = vpop.f32.mrb[0].mxu0
      %1420 = vmatprep.mubr.bf16.mxu0 0
      %1421 = vmatmul.mubr.bf16.gmra.mrb[0].mxu0 %v906
      %v1422 = vpop.f32.mrb[0].mxu0
      %v1423 = vadd.f32 0.0, %v1422
      %v1424 = vpop.f32.mrb[0].mxu0
      %v1425 = vpop.f32.mrb[0].mxu0
      %v1426 = vadd.f32 0.0, %v1425
      %v1427 = vpop.f32.mrb[0].mxu0
      %1428 = vmatprep.mubr.bf16.mxu0 0
      %1429 = vmatmul.mubr.bf16.gmra.mrb[0].mxu0 %v909
      %v1430 = vpop.f32.mrb[0].mxu0
      %v1431 = vadd.f32 0.0, %v1430
      %v1432 = vpop.f32.mrb[0].mxu0
      %v1433 = vpop.f32.mrb[0].mxu0
      %v1434 = vadd.f32 0.0, %v1433
      %v1435 = vpop.f32.mrb[0].mxu0
      %1436 = vmatprep.mubr.bf16.mxu0 0
      %1437 = vmatmul.mubr.bf16.gmra.mrb[0].mxu0 %v912
      %v1438 = vpop.f32.mrb[0].mxu0
      %v1439 = vadd.f32 0.0, %v1438
      %v1440 = vpop.f32.mrb[0].mxu0
      %v1441 = vpop.f32.mrb[0].mxu0
      %v1442 = vadd.f32 0.0, %v1441
      %v1443 = vpop.f32.mrb[0].mxu0
      %1444 = vmatprep.mubr.bf16.mxu0 0
      %1445 = vmatmul.mubr.bf16.gmra.mrb[0].mxu0 %v915
      %v1446 = vpop.f32.mrb[0].mxu0
      %v1447 = vadd.f32 0.0, %v1446
      %v1448 = vpop.f32.mrb[0].mxu0
      %v1449 = vpop.f32.mrb[0].mxu0
      %v1450 = vadd.f32 0.0, %v1449
      %v1451 = vpop.f32.mrb[0].mxu0
      %1452 = vmatprep.mubr.bf16.mxu0 0
      %1453 = vmatmul.mubr.bf16.gmra.mrb[0].mxu0 %v918
      %v1454 = vpop.f32.mrb[0].mxu0
      %v1455 = vadd.f32 0.0, %v1454
      %v1456 = vpop.f32.mrb[0].mxu0
      %v1457 = vpop.f32.mrb[0].mxu0
      %v1458 = vadd.f32 0.0, %v1457
      %v1459 = vpop.f32.mrb[0].mxu0
      %1460 = vmatprep.mubr.bf16.mxu0 0
      %1461 = vmatmul.mubr.bf16.gmra.mrb[0].mxu0 %v921
      %v1462 = vpop.f32.mrb[0].mxu0
      %v1463 = vadd.f32 0.0, %v1462
      %v1464 = vpop.f32.mrb[0].mxu0
      %v1465 = vpop.f32.mrb[0].mxu0
      %v1466 = vadd.f32 0.0, %v1465
      %v1467 = vpop.f32.mrb[0].mxu0
      %1468 = vmatprep.mubr.bf16.mxu0 0
      %1469 = vmatmul.mubr.bf16.gmra.mrb[0].mxu0 %v924
      %v1470 = vpop.f32.mrb[0].mxu0
      %v1471 = vadd.f32 0.0, %v1470
      %v1472 = vpop.f32.mrb[0].mxu0
      %v1473 = vpop.f32.mrb[0].mxu0
      %v1474 = vadd.f32 0.0, %v1473
      %v1475 = vpop.f32.mrb[0].mxu0
      %1476 = vmatprep.mubr.bf16.mxu0 0
      %1477 = vmatmul.mubr.bf16.gmra.mrb[0].mxu0 %v1367
      %v1478 = vpop.f32.mrb[0].mxu0
      %v1479 = vadd.f32 0.0, %v1478
      %v1480 = vpop.f32.mrb[0].mxu0
      %v1481 = vpop.f32.mrb[0].mxu0
      %v1482 = vadd.f32 0.0, %v1481
      %v1483 = vpop.f32.mrb[0].mxu0
      %1484 = vdwg.mxu0
      %v1485 = vadd.f32 %v1336, %v1407
      %v1486 = vadd.f32 %v1337, %v1410
      %v1487 = vadd.f32 %v1338, %v1415
      %v1488 = vadd.f32 %v1339, %v1418
      %v1489 = vadd.f32 %v1340, %v1423
      %v1490 = vadd.f32 %v1341, %v1426
      %v1491 = vadd.f32 %v1342, %v1431
      %v1492 = vadd.f32 %v1343, %v1434
      %v1493 = vadd.f32 %v1344, %v1439
      %v1494 = vadd.f32 %v1345, %v1442
      %v1495 = vadd.f32 %v1346, %v1447
      %v1496 = vadd.f32 %v1347, %v1450
      %v1497 = vadd.f32 %v1348, %v1455
      %v1498 = vadd.f32 %v1349, %v1458
      %v1499 = vadd.f32 %v1350, %v1463
      %v1500 = vadd.f32 %v1351, %v1466
      %v1501 = vadd.f32 %v1352, %v1471
      %v1502 = vadd.f32 %v1353, %v1474
      %v1503 = vadd.f32 %v1354, %v1479
      %v1504 = vadd.f32 %v1355, %v1482
      %v1505 = vpack.c.bf16 %v393, %v392
      %s1506 = scalar_lea.vmem %s1, 12
      %v1507 = vld [vmem:[%s1506] sm:$0x3]
      %v1509 = vsel %vm519, %v1505, 0
      %v1512 = vsel %vm550, %v1507, 0
      %1514 = vmatprep.subr.bf16.mxu0 0
      %1515 = vmatpush1.bf16.msra.mxu0 %v1512
      %1516 = vmatprep.subr.bf16.mxu0 0
      %1517 = vmatpush1.bf16.msra.mxu0 0
      %1518 = vmatprep.subr.bf16.mxu0 0
      %1519 = vmatpush1.bf16.msra.mxu0 0
      %1520 = vmatprep.subr.bf16.mxu0 0
      %1521 = vmatpush1.bf16.msra.mxu0 0
      %1522 = vmatprep.subr.bf16.mxu0 0
      %1523 = vmatpush1.bf16.msra.mxu0 0
      %1524 = vmatprep.subr.bf16.mxu0 0
      %1525 = vmatpush1.bf16.msra.mxu0 0
      %1526 = vmatprep.subr.bf16.mxu0 0
      %1527 = vmatpush1.bf16.msra.mxu0 0
      %1528 = vmatprep.subr.bf16.mxu0 0
      %1529 = vmatpush1.bf16.msra.mxu0 0
      %1530 = vmatprep.subr.bf16.mxu0 0
      %1531 = vmatpush1.bf16.msra.mxu0 0
      %1532 = vmatprep.subr.bf16.mxu0 0
      %1533 = vmatpush1.bf16.msra.mxu0 0
      %1534 = vmatprep.subr.bf16.mxu0 0
      %1535 = vmatpush1.bf16.msra.mxu0 0
      %1536 = vmatprep.subr.bf16.mxu0 0
      %1537 = vmatpush1.bf16.msra.mxu0 0
      %1538 = vmatprep.subr.bf16.mxu0 0
      %1539 = vmatpush1.bf16.msra.mxu0 0
      %1540 = vmatprep.subr.bf16.mxu0 0
      %1541 = vmatpush1.bf16.msra.mxu0 0
      %1542 = vmatprep.subr.bf16.mxu0 0
      %1543 = vmatpush1.bf16.msra.mxu0 0
      %1544 = vmatprep.subr.bf16.mxu0 0
      %1545 = vmatpush1.bf16.msra.mxu0 0
      %1546 = vmatprep.mubr.bf16.mxu0 0
      %1547 = vmatmul.mubr.bf16.gmra.mrb[0].mxu0 %v674
      %v1548 = vpop.f32.mrb[0].mxu0
      %v1549 = vadd.f32 0.0, %v1548
      %v1550 = vpop.f32.mrb[0].mxu0
      %v1551 = vpop.f32.mrb[0].mxu0
      %v1552 = vadd.f32 0.0, %v1551
      %v1553 = vpop.f32.mrb[0].mxu0
      %1554 = vmatprep.mubr.bf16.mxu0 0
      %1555 = vmatmul.mubr.bf16.gmra.mrb[0].mxu0 %v677
      %v1556 = vpop.f32.mrb[0].mxu0
      %v1557 = vadd.f32 0.0, %v1556
      %v1558 = vpop.f32.mrb[0].mxu0
      %v1559 = vpop.f32.mrb[0].mxu0
      %v1560 = vadd.f32 0.0, %v1559
      %v1561 = vpop.f32.mrb[0].mxu0
      %1562 = vmatprep.mubr.bf16.mxu0 0
      %1563 = vmatmul.mubr.bf16.gmra.mrb[0].mxu0 %v680
      %v1564 = vpop.f32.mrb[0].mxu0
      %v1565 = vadd.f32 0.0, %v1564
      %v1566 = vpop.f32.mrb[0].mxu0
      %v1567 = vpop.f32.mrb[0].mxu0
      %v1568 = vadd.f32 0.0, %v1567
      %v1569 = vpop.f32.mrb[0].mxu0
      %1570 = vmatprep.mubr.bf16.mxu0 0
      %1571 = vmatmul.mubr.bf16.gmra.mrb[0].mxu0 %v683
      %v1572 = vpop.f32.mrb[0].mxu0
      %v1573 = vadd.f32 0.0, %v1572
      %v1574 = vpop.f32.mrb[0].mxu0
      %v1575 = vpop.f32.mrb[0].mxu0
      %v1576 = vadd.f32 0.0, %v1575
      %v1577 = vpop.f32.mrb[0].mxu0
      %1578 = vmatprep.mubr.bf16.mxu0 0
      %1579 = vmatmul.mubr.bf16.gmra.mrb[0].mxu0 %v686
      %v1580 = vpop.f32.mrb[0].mxu0
      %v1581 = vadd.f32 0.0, %v1580
      %v1582 = vpop.f32.mrb[0].mxu0
      %v1583 = vpop.f32.mrb[0].mxu0
      %v1584 = vadd.f32 0.0, %v1583
      %v1585 = vpop.f32.mrb[0].mxu0
      %1586 = vmatprep.mubr.bf16.mxu0 0
      %1587 = vmatmul.mubr.bf16.gmra.mrb[0].mxu0 %v689
      %v1588 = vpop.f32.mrb[0].mxu0
      %v1589 = vadd.f32 0.0, %v1588
      %v1590 = vpop.f32.mrb[0].mxu0
      %v1591 = vpop.f32.mrb[0].mxu0
      %v1592 = vadd.f32 0.0, %v1591
      %v1593 = vpop.f32.mrb[0].mxu0
      %1594 = vmatprep.mubr.bf16.mxu0 0
      %1595 = vmatmul.mubr.bf16.gmra.mrb[0].mxu0 %v692
      %v1596 = vpop.f32.mrb[0].mxu0
      %v1597 = vadd.f32 0.0, %v1596
      %v1598 = vpop.f32.mrb[0].mxu0
      %v1599 = vpop.f32.mrb[0].mxu0
      %v1600 = vadd.f32 0.0, %v1599
      %v1601 = vpop.f32.mrb[0].mxu0
      %1602 = vmatprep.mubr.bf16.mxu0 0
      %1603 = vmatmul.mubr.bf16.gmra.mrb[0].mxu0 %v695
      %v1604 = vpop.f32.mrb[0].mxu0
      %v1605 = vadd.f32 0.0, %v1604
      %v1606 = vpop.f32.mrb[0].mxu0
      %v1607 = vpop.f32.mrb[0].mxu0
      %v1608 = vadd.f32 0.0, %v1607
      %v1609 = vpop.f32.mrb[0].mxu0
      %1610 = vmatprep.mubr.bf16.mxu0 0
      %1611 = vmatmul.mubr.bf16.gmra.mrb[0].mxu0 %v1066
      %v1612 = vpop.f32.mrb[0].mxu0
      %v1613 = vadd.f32 0.0, %v1612
      %v1614 = vpop.f32.mrb[0].mxu0
      %v1615 = vpop.f32.mrb[0].mxu0
      %v1616 = vadd.f32 0.0, %v1615
      %v1617 = vpop.f32.mrb[0].mxu0
      %1618 = vmatprep.mubr.bf16.mxu0 0
      %1619 = vmatmul.mubr.bf16.gmra.mrb[0].mxu0 %v1509
      %v1620 = vpop.f32.mrb[0].mxu0
      %v1621 = vadd.f32 0.0, %v1620
      %v1622 = vpop.f32.mrb[0].mxu0
      %v1623 = vpop.f32.mrb[0].mxu0
      %v1624 = vadd.f32 0.0, %v1623
      %v1625 = vpop.f32.mrb[0].mxu0
      %1626 = vdwg.mxu0
      %v1627 = vadd.f32 %v1485, %v1549
      %v1628 = vadd.f32 %v1486, %v1552
      %v1629 = vadd.f32 %v1487, %v1557
      %v1630 = vadd.f32 %v1488, %v1560
      %v1631 = vadd.f32 %v1489, %v1565
      %v1632 = vadd.f32 %v1490, %v1568
      %v1633 = vadd.f32 %v1491, %v1573
      %v1634 = vadd.f32 %v1492, %v1576
      %v1635 = vadd.f32 %v1493, %v1581
      %v1636 = vadd.f32 %v1494, %v1584
      %v1637 = vadd.f32 %v1495, %v1589
      %v1638 = vadd.f32 %v1496, %v1592
      %v1639 = vadd.f32 %v1497, %v1597
      %v1640 = vadd.f32 %v1498, %v1600
      %v1641 = vadd.f32 %v1499, %v1605
      %v1642 = vadd.f32 %v1500, %v1608
      %v1643 = vadd.f32 %v1501, %v1613
      %v1644 = vadd.f32 %v1502, %v1616
      %v1645 = vadd.f32 %v1503, %v1621
      %v1646 = vadd.f32 %v1504, %v1624
      %v1650 = vrot.slane %v392, 1
      %v1651 = vrot.slane %v393, 1
      %v1652 = vsel %vm436, %v1650, %v1651
      %v1653 = vrot.slane %v394, 1
      %v1654 = vsel %vm436, %v1651, %v1653
      %v1657 = vpack.c.bf16 %v1654, %v1652
      %s1658 = scalar_lea.vmem %s1, 14
      %v1659 = vld [vmem:[%s1658] sm:$0x3]
      %v1661 = vsel %vm519, %v1657, 0
      %v1664 = vsel %vm550, %v1659, 0
      %1666 = vmatprep.subr.bf16.mxu0 0
      %1667 = vmatpush1.bf16.msra.mxu0 %v1664
      %1668 = vmatprep.subr.bf16.mxu0 0
      %1669 = vmatpush1.bf16.msra.mxu0 0
      %1670 = vmatprep.subr.bf16.mxu0 0
      %1671 = vmatpush1.bf16.msra.mxu0 0
      %1672 = vmatprep.subr.bf16.mxu0 0
      %1673 = vmatpush1.bf16.msra.mxu0 0
      %1674 = vmatprep.subr.bf16.mxu0 0
      %1675 = vmatpush1.bf16.msra.mxu0 0
      %1676 = vmatprep.subr.bf16.mxu0 0
      %1677 = vmatpush1.bf16.msra.mxu0 0
      %1678 = vmatprep.subr.bf16.mxu0 0
      %1679 = vmatpush1.bf16.msra.mxu0 0
      %1680 = vmatprep.subr.bf16.mxu0 0
      %1681 = vmatpush1.bf16.msra.mxu0 0
      %1682 = vmatprep.subr.bf16.mxu0 0
      %1683 = vmatpush1.bf16.msra.mxu0 0
      %1684 = vmatprep.subr.bf16.mxu0 0
      %1685 = vmatpush1.bf16.msra.mxu0 0
      %1686 = vmatprep.subr.bf16.mxu0 0
      %1687 = vmatpush1.bf16.msra.mxu0 0
      %1688 = vmatprep.subr.bf16.mxu0 0
      %1689 = vmatpush1.bf16.msra.mxu0 0
      %1690 = vmatprep.subr.bf16.mxu0 0
      %1691 = vmatpush1.bf16.msra.mxu0 0
      %1692 = vmatprep.subr.bf16.mxu0 0
      %1693 = vmatpush1.bf16.msra.mxu0 0
      %1694 = vmatprep.subr.bf16.mxu0 0
      %1695 = vmatpush1.bf16.msra.mxu0 0
      %1696 = vmatprep.subr.bf16.mxu0 0
      %1697 = vmatpush1.bf16.msra.mxu0 0
      %1698 = vmatprep.mubr.bf16.mxu0 0
      %1699 = vmatmul.mubr.bf16.gmra.mrb[0].mxu0 %v527
      %v1700 = vpop.f32.mrb[0].mxu0
      %v1701 = vadd.f32 0.0, %v1700
      %v1702 = vpop.f32.mrb[0].mxu0
      %v1703 = vpop.f32.mrb[0].mxu0
      %v1704 = vadd.f32 0.0, %v1703
      %v1705 = vpop.f32.mrb[0].mxu0
      %1706 = vmatprep.mubr.bf16.mxu0 0
      %1707 = vmatmul.mubr.bf16.gmra.mrb[0].mxu0 %v530
      %v1708 = vpop.f32.mrb[0].mxu0
      %v1709 = vadd.f32 0.0, %v1708
      %v1710 = vpop.f32.mrb[0].mxu0
      %v1711 = vpop.f32.mrb[0].mxu0
      %v1712 = vadd.f32 0.0, %v1711
      %v1713 = vpop.f32.mrb[0].mxu0
      %1714 = vmatprep.mubr.bf16.mxu0 0
      %1715 = vmatmul.mubr.bf16.gmra.mrb[0].mxu0 %v533
      %v1716 = vpop.f32.mrb[0].mxu0
      %v1717 = vadd.f32 0.0, %v1716
      %v1718 = vpop.f32.mrb[0].mxu0
      %v1719 = vpop.f32.mrb[0].mxu0
      %v1720 = vadd.f32 0.0, %v1719
      %v1721 = vpop.f32.mrb[0].mxu0
      %1722 = vmatprep.mubr.bf16.mxu0 0
      %1723 = vmatmul.mubr.bf16.gmra.mrb[0].mxu0 %v536
      %v1724 = vpop.f32.mrb[0].mxu0
      %v1725 = vadd.f32 0.0, %v1724
      %v1726 = vpop.f32.mrb[0].mxu0
      %v1727 = vpop.f32.mrb[0].mxu0
      %v1728 = vadd.f32 0.0, %v1727
      %v1729 = vpop.f32.mrb[0].mxu0
      %1730 = vmatprep.mubr.bf16.mxu0 0
      %1731 = vmatmul.mubr.bf16.gmra.mrb[0].mxu0 %v539
      %v1732 = vpop.f32.mrb[0].mxu0
      %v1733 = vadd.f32 0.0, %v1732
      %v1734 = vpop.f32.mrb[0].mxu0
      %v1735 = vpop.f32.mrb[0].mxu0
      %v1736 = vadd.f32 0.0, %v1735
      %v1737 = vpop.f32.mrb[0].mxu0
      %1738 = vmatprep.mubr.bf16.mxu0 0
      %1739 = vmatmul.mubr.bf16.gmra.mrb[0].mxu0 %v542
      %v1740 = vpop.f32.mrb[0].mxu0
      %v1741 = vadd.f32 0.0, %v1740
      %v1742 = vpop.f32.mrb[0].mxu0
      %v1743 = vpop.f32.mrb[0].mxu0
      %v1744 = vadd.f32 0.0, %v1743
      %v1745 = vpop.f32.mrb[0].mxu0
      %1746 = vmatprep.mubr.bf16.mxu0 0
      %1747 = vmatmul.mubr.bf16.gmra.mrb[0].mxu0 %v545
      %v1748 = vpop.f32.mrb[0].mxu0
      %v1749 = vadd.f32 0.0, %v1748
      %v1750 = vpop.f32.mrb[0].mxu0
      %v1751 = vpop.f32.mrb[0].mxu0
      %v1752 = vadd.f32 0.0, %v1751
      %v1753 = vpop.f32.mrb[0].mxu0
      %1754 = vmatprep.mubr.bf16.mxu0 0
      %1755 = vmatmul.mubr.bf16.gmra.mrb[0].mxu0 %v548
      %v1756 = vpop.f32.mrb[0].mxu0
      %v1757 = vadd.f32 0.0, %v1756
      %v1758 = vpop.f32.mrb[0].mxu0
      %v1759 = vpop.f32.mrb[0].mxu0
      %v1760 = vadd.f32 0.0, %v1759
      %v1761 = vpop.f32.mrb[0].mxu0
      %1762 = vmatprep.mubr.bf16.mxu0 0
      %1763 = vmatmul.mubr.bf16.gmra.mrb[0].mxu0 %v1218
      %v1764 = vpop.f32.mrb[0].mxu0
      %v1765 = vadd.f32 0.0, %v1764
      %v1766 = vpop.f32.mrb[0].mxu0
      %v1767 = vpop.f32.mrb[0].mxu0
      %v1768 = vadd.f32 0.0, %v1767
      %v1769 = vpop.f32.mrb[0].mxu0
      %1770 = vmatprep.mubr.bf16.mxu0 0
      %1771 = vmatmul.mubr.bf16.gmra.mrb[0].mxu0 %v1661
      %v1772 = vpop.f32.mrb[0].mxu0
      %v1773 = vadd.f32 0.0, %v1772
      %v1774 = vpop.f32.mrb[0].mxu0
      %v1775 = vpop.f32.mrb[0].mxu0
      %v1776 = vadd.f32 0.0, %v1775
      %v1777 = vpop.f32.mrb[0].mxu0
      %1778 = vdwg.mxu0
      %v1779 = vadd.f32 %v1627, %v1701
      %v1780 = vadd.f32 %v1628, %v1704
      %v1781 = vadd.f32 %v1629, %v1709
      %v1782 = vadd.f32 %v1630, %v1712
      %v1783 = vadd.f32 %v1631, %v1717
      %v1784 = vadd.f32 %v1632, %v1720
      %v1785 = vadd.f32 %v1633, %v1725
      %v1786 = vadd.f32 %v1634, %v1728
      %v1787 = vadd.f32 %v1635, %v1733
      %v1788 = vadd.f32 %v1636, %v1736
      %v1789 = vadd.f32 %v1637, %v1741
      %v1790 = vadd.f32 %v1638, %v1744
      %v1791 = vadd.f32 %v1639, %v1749
      %v1792 = vadd.f32 %v1640, %v1752
      %v1793 = vadd.f32 %v1641, %v1757
      %v1794 = vadd.f32 %v1642, %v1760
      %v1795 = vadd.f32 %v1643, %v1765
      %v1796 = vadd.f32 %v1644, %v1768
      %v1797 = vadd.f32 %v1645, %v1773
      %v1798 = vadd.f32 %v1646, %v1776
      %v1799 = vrot.slane %v392, 2
      %v1800 = vrot.slane %v393, 2
      %v1801 = vsel %vm813, %v1799, %v1800
      %v1802 = vrot.slane %v394, 2
      %v1803 = vsel %vm813, %v1800, %v1802
      %v1806 = vpack.c.bf16 %v1803, %v1801
      %s1807 = scalar_lea.vmem %s1, 16
      %v1808 = vld [vmem:[%s1807] sm:$0x3]
      %v1810 = vsel %vm519, %v1806, 0
      %v1813 = vsel %vm550, %v1808, 0
      %1815 = vmatprep.subr.bf16.mxu0 0
      %1816 = vmatpush1.bf16.msra.mxu0 %v1813
      %1817 = vmatprep.subr.bf16.mxu0 0
      %1818 = vmatpush1.bf16.msra.mxu0 0
      %1819 = vmatprep.subr.bf16.mxu0 0
      %1820 = vmatpush1.bf16.msra.mxu0 0
      %1821 = vmatprep.subr.bf16.mxu0 0
      %1822 = vmatpush1.bf16.msra.mxu0 0
      %1823 = vmatprep.subr.bf16.mxu0 0
      %1824 = vmatpush1.bf16.msra.mxu0 0
      %1825 = vmatprep.subr.bf16.mxu0 0
      %1826 = vmatpush1.bf16.msra.mxu0 0
      %1827 = vmatprep.subr.bf16.mxu0 0
      %1828 = vmatpush1.bf16.msra.mxu0 0
      %1829 = vmatprep.subr.bf16.mxu0 0
      %1830 = vmatpush1.bf16.msra.mxu0 0
      %1831 = vmatprep.subr.bf16.mxu0 0
      %1832 = vmatpush1.bf16.msra.mxu0 0
      %1833 = vmatprep.subr.bf16.mxu0 0
      %1834 = vmatpush1.bf16.msra.mxu0 0
      %1835 = vmatprep.subr.bf16.mxu0 0
      %1836 = vmatpush1.bf16.msra.mxu0 0
      %1837 = vmatprep.subr.bf16.mxu0 0
      %1838 = vmatpush1.bf16.msra.mxu0 0
      %1839 = vmatprep.subr.bf16.mxu0 0
      %1840 = vmatpush1.bf16.msra.mxu0 0
      %1841 = vmatprep.subr.bf16.mxu0 0
      %1842 = vmatpush1.bf16.msra.mxu0 0
      %1843 = vmatprep.subr.bf16.mxu0 0
      %1844 = vmatpush1.bf16.msra.mxu0 0
      %1845 = vmatprep.subr.bf16.mxu0 0
      %1846 = vmatpush1.bf16.msra.mxu0 0
      %1847 = vmatprep.mubr.bf16.mxu0 0
      %1848 = vmatmul.mubr.bf16.gmra.mrb[0].mxu0 %v903
      %v1849 = vpop.f32.mrb[0].mxu0
      %v1850 = vadd.f32 0.0, %v1849
      %v1851 = vpop.f32.mrb[0].mxu0
      %v1852 = vpop.f32.mrb[0].mxu0
      %v1853 = vadd.f32 0.0, %v1852
      %v1854 = vpop.f32.mrb[0].mxu0
      %1855 = vmatprep.mubr.bf16.mxu0 0
      %1856 = vmatmul.mubr.bf16.gmra.mrb[0].mxu0 %v906
      %v1857 = vpop.f32.mrb[0].mxu0
      %v1858 = vadd.f32 0.0, %v1857
      %v1859 = vpop.f32.mrb[0].mxu0
      %v1860 = vpop.f32.mrb[0].mxu0
      %v1861 = vadd.f32 0.0, %v1860
      %v1862 = vpop.f32.mrb[0].mxu0
      %1863 = vmatprep.mubr.bf16.mxu0 0
      %1864 = vmatmul.mubr.bf16.gmra.mrb[0].mxu0 %v909
      %v1865 = vpop.f32.mrb[0].mxu0
      %v1866 = vadd.f32 0.0, %v1865
      %v1867 = vpop.f32.mrb[0].mxu0
      %v1868 = vpop.f32.mrb[0].mxu0
      %v1869 = vadd.f32 0.0, %v1868
      %v1870 = vpop.f32.mrb[0].mxu0
      %1871 = vmatprep.mubr.bf16.mxu0 0
      %1872 = vmatmul.mubr.bf16.gmra.mrb[0].mxu0 %v912
      %v1873 = vpop.f32.mrb[0].mxu0
      %v1874 = vadd.f32 0.0, %v1873
      %v1875 = vpop.f32.mrb[0].mxu0
      %v1876 = vpop.f32.mrb[0].mxu0
      %v1877 = vadd.f32 0.0, %v1876
      %v1878 = vpop.f32.mrb[0].mxu0
      %1879 = vmatprep.mubr.bf16.mxu0 0
      %1880 = vmatmul.mubr.bf16.gmra.mrb[0].mxu0 %v915
      %v1881 = vpop.f32.mrb[0].mxu0
      %v1882 = vadd.f32 0.0, %v1881
      %v1883 = vpop.f32.mrb[0].mxu0
      %v1884 = vpop.f32.mrb[0].mxu0
      %v1885 = vadd.f32 0.0, %v1884
      %v1886 = vpop.f32.mrb[0].mxu0
      %1887 = vmatprep.mubr.bf16.mxu0 0
      %1888 = vmatmul.mubr.bf16.gmra.mrb[0].mxu0 %v918
      %v1889 = vpop.f32.mrb[0].mxu0
      %v1890 = vadd.f32 0.0, %v1889
      %v1891 = vpop.f32.mrb[0].mxu0
      %v1892 = vpop.f32.mrb[0].mxu0
      %v1893 = vadd.f32 0.0, %v1892
      %v1894 = vpop.f32.mrb[0].mxu0
      %1895 = vmatprep.mubr.bf16.mxu0 0
      %1896 = vmatmul.mubr.bf16.gmra.mrb[0].mxu0 %v921
      %v1897 = vpop.f32.mrb[0].mxu0
      %v1898 = vadd.f32 0.0, %v1897
      %v1899 = vpop.f32.mrb[0].mxu0
      %v1900 = vpop.f32.mrb[0].mxu0
      %v1901 = vadd.f32 0.0, %v1900
      %v1902 = vpop.f32.mrb[0].mxu0
      %1903 = vmatprep.mubr.bf16.mxu0 0
      %1904 = vmatmul.mubr.bf16.gmra.mrb[0].mxu0 %v924
      %v1905 = vpop.f32.mrb[0].mxu0
      %v1906 = vadd.f32 0.0, %v1905
      %v1907 = vpop.f32.mrb[0].mxu0
      %v1908 = vpop.f32.mrb[0].mxu0
      %v1909 = vadd.f32 0.0, %v1908
      %v1910 = vpop.f32.mrb[0].mxu0
      %1911 = vmatprep.mubr.bf16.mxu0 0
      %1912 = vmatmul.mubr.bf16.gmra.mrb[0].mxu0 %v1367
      %v1913 = vpop.f32.mrb[0].mxu0
      %v1914 = vadd.f32 0.0, %v1913
      %v1915 = vpop.f32.mrb[0].mxu0
      %v1916 = vpop.f32.mrb[0].mxu0
      %v1917 = vadd.f32 0.0, %v1916
      %v1918 = vpop.f32.mrb[0].mxu0
      %1919 = vmatprep.mubr.bf16.mxu0 0
      %1920 = vmatmul.mubr.bf16.gmra.mrb[0].mxu0 %v1810
      %v1921 = vpop.f32.mrb[0].mxu0
      %v1922 = vadd.f32 0.0, %v1921
      %v1923 = vpop.f32.mrb[0].mxu0
      %v1924 = vpop.f32.mrb[0].mxu0
      %v1925 = vadd.f32 0.0, %v1924
      %v1926 = vpop.f32.mrb[0].mxu0
      %1927 = vdwg.mxu0
      %v1928 = vadd.f32 %v1779, %v1850
      %v1929 = vadd.f32 %v1780, %v1853
      %v1930 = vadd.f32 %v1781, %v1858
      %v1931 = vadd.f32 %v1782, %v1861
      %v1932 = vadd.f32 %v1783, %v1866
      %v1933 = vadd.f32 %v1784, %v1869
      %v1934 = vadd.f32 %v1785, %v1874
      %v1935 = vadd.f32 %v1786, %v1877
      %v1936 = vadd.f32 %v1787, %v1882
      %v1937 = vadd.f32 %v1788, %v1885
      %v1938 = vadd.f32 %v1789, %v1890
      %v1939 = vadd.f32 %v1790, %v1893
      %v1940 = vadd.f32 %v1791, %v1898
      %v1941 = vadd.f32 %v1792, %v1901
      %v1942 = vadd.f32 %v1793, %v1906
      %v1943 = vadd.f32 %v1794, %v1909
      %v1944 = vadd.f32 %v1795, %v1914
      %v1945 = vadd.f32 %v1796, %v1917
      %v1946 = vadd.f32 %v1797, %v1922
      %v1947 = vadd.f32 %v1798, %v1925
      %v1948 = vld [vmem:[%s2] sm:$0x1]
      %v1950 = vlaneseq
      %v1951 = vshrl.u32 %v1950, 7
      %v1952 = vsub.s32 0, %v1951
      %v1953 = vrot.slane %v1948, %v1952
      %v1955 = vadd.f32 %v1928, %v1953
      %v1956 = vadd.f32 %v1929, %v1953
      %v1957 = vadd.f32 %v1930, %v1953
      %v1958 = vadd.f32 %v1931, %v1953
      %v1959 = vadd.f32 %v1932, %v1953
      %v1960 = vadd.f32 %v1933, %v1953
      %v1961 = vadd.f32 %v1934, %v1953
      %v1962 = vadd.f32 %v1935, %v1953
      %v1963 = vadd.f32 %v1936, %v1953
      %v1964 = vadd.f32 %v1937, %v1953
      %v1965 = vadd.f32 %v1938, %v1953
      %v1966 = vadd.f32 %v1939, %v1953
      %v1967 = vadd.f32 %v1940, %v1953
      %v1968 = vadd.f32 %v1941, %v1953
      %v1969 = vadd.f32 %v1942, %v1953
      %v1970 = vadd.f32 %v1943, %v1953
      %v1971 = vadd.f32 %v1944, %v1953
      %v1972 = vadd.f32 %v1945, %v1953
      %v1973 = vadd.f32 %v1946, %v1953
      %v1974 = vadd.f32 %v1947, %v1953
      %v1975 = vpack.c.bf16 %v1958, %v1957
      %v1976 = vpack.c.bf16 %v1960, %v1959
      %v1977 = vpack.c.bf16 %v1962, %v1961
      %v1978 = vpack.c.bf16 %v1964, %v1963
      %v1979 = vpack.c.bf16 %v1966, %v1965
      %v1980 = vpack.c.bf16 %v1968, %v1967
      %v1981 = vpack.c.bf16 %v1970, %v1969
      %v1982 = vpack.c.bf16 %v1972, %v1971
      %v1991 = vunpack.c.l.b16 %v1975
      %v1992 = vunpack.c.h.b16 %v1975
      %v1993 = vunpack.c.l.b16 %v1976
      %v1994 = vunpack.c.h.b16 %v1976
      %v1995 = vunpack.c.l.b16 %v1977
      %v1996 = vunpack.c.h.b16 %v1977
      %v1997 = vunpack.c.l.b16 %v1978
      %v1998 = vunpack.c.h.b16 %v1978
      %v1999 = vunpack.c.l.b16 %v1979
      %v2000 = vunpack.c.h.b16 %v1979
      %v2001 = vunpack.c.l.b16 %v1980
      %v2002 = vunpack.c.h.b16 %v1980
      %v2003 = vunpack.c.l.b16 %v1981
      %v2004 = vunpack.c.h.b16 %v1981
      %v2005 = vunpack.c.l.b16 %v1982
      %v2006 = vunpack.c.h.b16 %v1982
      %v2007 = vpack.c.b16 %v1991, %v1991
      %v2008 = vpack.c.b16 %v1992, %v1992
      %v2009 = vpack.c.b16 %v1993, %v1993
      %v2010 = vpack.c.b16 %v1994, %v1994
      %v2011 = vpack.c.b16 %v1995, %v1995
      %v2012 = vpack.c.b16 %v1996, %v1996
      %v2013 = vpack.c.b16 %v1997, %v1997
      %v2014 = vpack.c.b16 %v1998, %v1998
      %v2015 = vpack.c.b16 %v1999, %v1999
      %v2016 = vpack.c.b16 %v2000, %v2000
      %v2017 = vpack.c.b16 %v2001, %v2001
      %v2018 = vpack.c.b16 %v2002, %v2002
      %v2019 = vpack.c.b16 %v2003, %v2003
      %v2020 = vpack.c.b16 %v2004, %v2004
      %v2021 = vpack.c.b16 %v2005, %v2005
      %v2022 = vpack.c.b16 %v2006, %v2006
      %vm2039 = vcmask 60416
      %2040 = vst.msk [vmem:[%s342] sm:$0xf] %vm2039, %v2007
      %2041 = vst.msk [vmem:[%s342 + $0x4] sm:$0xf] %vm2039, %v2008
      %2042 = vst.msk [vmem:[%s342 + $0x8] sm:$0xf] %vm2039, %v2009
      %2043 = vst.msk [vmem:[%s342 + $0xc] sm:$0xf] %vm2039, %v2010
      %2044 = vst.msk [vmem:[%s342 + $0x10] sm:$0xf] %vm2039, %v2011
      %2045 = vst.msk [vmem:[%s342 + $0x14] sm:$0xf] %vm2039, %v2012
      %2046 = vst.msk [vmem:[%s342 + $0x18] sm:$0xf] %vm2039, %v2013
      %2047 = vst.msk [vmem:[%s342 + $0x1c] sm:$0xf] %vm2039, %v2014
      %2048 = vst.msk [vmem:[%s342 + $0x20] sm:$0xf] %vm2039, %v2015
      %2049 = vst.msk [vmem:[%s342 + $0x24] sm:$0xf] %vm2039, %v2016
      %2050 = vst.msk [vmem:[%s342 + $0x28] sm:$0xf] %vm2039, %v2017
      %2051 = vst.msk [vmem:[%s342 + $0x2c] sm:$0xf] %vm2039, %v2018
      %2052 = vst.msk [vmem:[%s342 + $0x30] sm:$0xf] %vm2039, %v2019
      %2053 = vst.msk [vmem:[%s342 + $0x34] sm:$0xf] %vm2039, %v2020
      %2054 = vst.msk [vmem:[%s342 + $0x38] sm:$0xf] %vm2039, %v2021
      %2055 = vst.msk [vmem:[%s342 + $0x3c] sm:$0xf] %vm2039, %v2022
      %v2056 = vmax.f32 %v1955, 0.0
      %v2057 = vmax.f32 %v1956, 0.0
      %v2058 = vmax.f32 %v1957, 0.0
      %v2059 = vmax.f32 %v1958, 0.0
      %v2060 = vmax.f32 %v1959, 0.0
      %v2061 = vmax.f32 %v1960, 0.0
      %v2062 = vmax.f32 %v1961, 0.0
      %v2063 = vmax.f32 %v1962, 0.0
      %v2064 = vmax.f32 %v1963, 0.0
      %v2065 = vmax.f32 %v1964, 0.0
      %v2066 = vmax.f32 %v1965, 0.0
      %v2067 = vmax.f32 %v1966, 0.0
      %v2068 = vmax.f32 %v1967, 0.0
      %v2069 = vmax.f32 %v1968, 0.0
      %v2070 = vmax.f32 %v1969, 0.0
      %v2071 = vmax.f32 %v1970, 0.0
      %v2072 = vmax.f32 %v1971, 0.0
      %v2073 = vmax.f32 %v1972, 0.0
      %v2074 = vmax.f32 %v1973, 0.0
      %v2075 = vmax.f32 %v1974, 0.0
      %s2076 = ssub.s32 %s356, 1
      %v2077 = vstv %s2076
      %v2078 = vadd.s32 %v2077, 1
      %v2079 = vadd.s32 %v2077, 2
      %v2080 = vadd.s32 %v2077, 3
      %v2081 = vadd.s32 %v2077, 4
      %v2082 = vadd.s32 %v2077, 5
      %v2083 = vadd.s32 %v2077, 6
      %v2084 = vadd.s32 %v2077, 7
      %v2085 = vadd.s32 %v2077, 8
      %v2086 = vadd.s32 %v2077, 9
      %vm2087 = vcmp.ge.s32.totalorder %v2077, 0
      %vm2088 = vcmp.ge.s32.totalorder %v2078, 0
      %vm2089 = vcmp.ge.s32.totalorder %v2079, 0
      %vm2090 = vcmp.ge.s32.totalorder %v2080, 0
      %vm2091 = vcmp.ge.s32.totalorder %v2081, 0
      %vm2092 = vcmp.ge.s32.totalorder %v2082, 0
      %vm2093 = vcmp.ge.s32.totalorder %v2083, 0
      %vm2094 = vcmp.ge.s32.totalorder %v2084, 0
      %vm2095 = vcmp.ge.s32.totalorder %v2085, 0
      %vm2096 = vcmp.ge.s32.totalorder %v2086, 0
      %vm2097 = vcmp.lt.s32.totalorder %v2077, 16
      %vm2098 = vcmp.lt.s32.totalorder %v2078, 16
      %vm2099 = vcmp.lt.s32.totalorder %v2079, 16
      %vm2100 = vcmp.lt.s32.totalorder %v2080, 16
      %vm2101 = vcmp.lt.s32.totalorder %v2081, 16
      %vm2102 = vcmp.lt.s32.totalorder %v2082, 16
      %vm2103 = vcmp.lt.s32.totalorder %v2083, 16
      %vm2104 = vcmp.lt.s32.totalorder %v2084, 16
      %vm2105 = vcmp.lt.s32.totalorder %v2085, 16
      %vm2106 = vcmp.lt.s32.totalorder %v2086, 16
      %vm2107 = vmand %vm2087, %vm2097
      %vm2108 = vmand %vm2088, %vm2098
      %vm2109 = vmand %vm2089, %vm2099
      %vm2110 = vmand %vm2090, %vm2100
      %vm2111 = vmand %vm2091, %vm2101
      %vm2112 = vmand %vm2092, %vm2102
      %vm2113 = vmand %vm2093, %vm2103
      %vm2114 = vmand %vm2094, %vm2104
      %vm2115 = vmand %vm2095, %vm2105
      %vm2116 = vmand %vm2096, %vm2106
      %v2117 = vsel %vm2107, 1, 0
      %v2118 = vsel %vm2108, 1, 0
      %v2119 = vsel %vm2109, 1, 0
      %v2120 = vsel %vm2110, 1, 0
      %v2121 = vsel %vm2111, 1, 0
      %v2122 = vsel %vm2112, 1, 0
      %v2123 = vsel %vm2113, 1, 0
      %v2124 = vsel %vm2114, 1, 0
      %v2125 = vsel %vm2115, 1, 0
      %v2126 = vsel %vm2116, 1, 0
      %vm2127 = vcmp.eq.s32.totalorder %v2117, 1
      %vm2128 = vcmp.eq.s32.totalorder %v2118, 1
      %vm2129 = vcmp.eq.s32.totalorder %v2119, 1
      %vm2130 = vcmp.eq.s32.totalorder %v2120, 1
      %vm2131 = vcmp.eq.s32.totalorder %v2121, 1
      %vm2132 = vcmp.eq.s32.totalorder %v2122, 1
      %vm2133 = vcmp.eq.s32.totalorder %v2123, 1
      %vm2134 = vcmp.eq.s32.totalorder %v2124, 1
      %vm2135 = vcmp.eq.s32.totalorder %v2125, 1
      %vm2136 = vcmp.eq.s32.totalorder %v2126, 1
      %v2137 = vsel %vm2127, %v2056, 0.0
      %v2138 = vsel %vm2127, %v2057, 0.0
      %v2139 = vsel %vm2128, %v2058, 0.0
      %v2140 = vsel %vm2128, %v2059, 0.0
      %v2141 = vsel %vm2129, %v2060, 0.0
      %v2142 = vsel %vm2129, %v2061, 0.0
      %v2143 = vsel %vm2130, %v2062, 0.0
      %v2144 = vsel %vm2130, %v2063, 0.0
      %v2145 = vsel %vm2131, %v2064, 0.0
      %v2146 = vsel %vm2131, %v2065, 0.0
      %v2147 = vsel %vm2132, %v2066, 0.0
      %v2148 = vsel %vm2132, %v2067, 0.0
      %v2149 = vsel %vm2133, %v2068, 0.0
      %v2150 = vsel %vm2133, %v2069, 0.0
      %v2151 = vsel %vm2134, %v2070, 0.0
      %v2152 = vsel %vm2134, %v2071, 0.0
      %v2153 = vsel %vm2135, %v2072, 0.0
      %v2154 = vsel %vm2135, %v2073, 0.0
      %v2155 = vsel %vm2136, %v2074, 0.0
      %v2156 = vsel %vm2136, %v2075, 0.0
      %vm2177 = vcmask 1040384
      %v2178 = vrot.slane %v2137, 7
      %v2179 = vrot.slane %v2138, 7
      %v2180 = vsel %vm2177, %v2178, %v2179
      %v2181 = vrot.slane %v2139, 7
      %v2182 = vrot.slane %v2140, 7
      %v2183 = vsel %vm2177, %v2181, %v2182
      %v2184 = vrot.slane %v2141, 7
      %v2185 = vrot.slane %v2142, 7
      %v2186 = vsel %vm2177, %v2184, %v2185
      %v2187 = vrot.slane %v2143, 7
      %v2188 = vrot.slane %v2144, 7
      %v2189 = vsel %vm2177, %v2187, %v2188
      %v2190 = vrot.slane %v2145, 7
      %v2191 = vrot.slane %v2146, 7
      %v2192 = vsel %vm2177, %v2190, %v2191
      %v2193 = vrot.slane %v2147, 7
      %v2194 = vrot.slane %v2148, 7
      %v2195 = vsel %vm2177, %v2193, %v2194
      %v2196 = vrot.slane %v2149, 7
      %v2197 = vrot.slane %v2150, 7
      %v2198 = vsel %vm2177, %v2196, %v2197
      %v2199 = vrot.slane %v2151, 7
      %v2200 = vrot.slane %v2152, 7
      %v2201 = vsel %vm2177, %v2199, %v2200
      %v2202 = vrot.slane %v2153, 7
      %v2203 = vrot.slane %v2154, 7
      %v2204 = vsel %vm2177, %v2202, %v2203
      %v2205 = vrot.slane %v2155, 7
      %v2206 = vrot.slane %v2156, 7
      %v2207 = vsel %vm2177, %v2205, %v2206
      %v2238 = vsel %vm2177, 0.0, %v2178
      %v2239 = vsel %vm2177, 0.0, %v2181
      %v2240 = vsel %vm2177, 0.0, %v2184
      %v2241 = vsel %vm2177, 0.0, %v2187
      %v2242 = vsel %vm2177, 0.0, %v2190
      %v2243 = vsel %vm2177, 0.0, %v2193
      %v2244 = vsel %vm2177, 0.0, %v2196
      %v2245 = vsel %vm2177, 0.0, %v2199
      %v2246 = vsel %vm2177, 0.0, %v2202
      %v2247 = vsel %vm2177, 0.0, %v2205
      %v2248 = vsel %vm2177, %v2179, 0.0
      %v2249 = vsel %vm2177, %v2182, 0.0
      %v2250 = vsel %vm2177, %v2185, 0.0
      %v2251 = vsel %vm2177, %v2188, 0.0
      %v2252 = vsel %vm2177, %v2191, 0.0
      %v2253 = vsel %vm2177, %v2194, 0.0
      %v2254 = vsel %vm2177, %v2197, 0.0
      %v2255 = vsel %vm2177, %v2200, 0.0
      %v2256 = vsel %vm2177, %v2203, 0.0
      %v2257 = vsel %vm2177, %v2206, 0.0
      %v2258 = vpack.c.bf16 %v2180, %v2238
      %v2259 = vpack.c.bf16 %v2183, %v2239
      %v2260 = vpack.c.bf16 %v2186, %v2240
      %v2261 = vpack.c.bf16 %v2189, %v2241
      %v2262 = vpack.c.bf16 %v2192, %v2242
      %v2263 = vpack.c.bf16 %v2195, %v2243
      %v2264 = vpack.c.bf16 %v2198, %v2244
      %v2265 = vpack.c.bf16 %v2201, %v2245
      %v2266 = vld [vmem:[%s3] sm:$0xf]
      %v2283 = vrot.slane %v2238, 1
      %v2284 = vrot.slane %v2180, 1
      %v2285 = vsel %vm436, %v2283, %v2284
      %v2286 = vrot.slane %v2248, 1
      %v2287 = vsel %vm436, %v2284, %v2286
      %v2288 = vrot.slane %v2239, 1
      %v2289 = vrot.slane %v2183, 1
      %v2290 = vsel %vm436, %v2288, %v2289
      %v2291 = vrot.slane %v2249, 1
      %v2292 = vsel %vm436, %v2289, %v2291
      %v2293 = vrot.slane %v2240, 1
      %v2294 = vrot.slane %v2186, 1
      %v2295 = vsel %vm436, %v2293, %v2294
      %v2296 = vrot.slane %v2250, 1
      %v2297 = vsel %vm436, %v2294, %v2296
      %v2298 = vrot.slane %v2241, 1
      %v2299 = vrot.slane %v2189, 1
      %v2300 = vsel %vm436, %v2298, %v2299
      %v2301 = vrot.slane %v2251, 1
      %v2302 = vsel %vm436, %v2299, %v2301
      %v2303 = vrot.slane %v2242, 1
      %v2304 = vrot.slane %v2192, 1
      %v2305 = vsel %vm436, %v2303, %v2304
      %v2306 = vrot.slane %v2252, 1
      %v2307 = vsel %vm436, %v2304, %v2306
      %v2308 = vrot.slane %v2243, 1
      %v2309 = vrot.slane %v2195, 1
      %v2310 = vsel %vm436, %v2308, %v2309
      %v2311 = vrot.slane %v2253, 1
      %v2312 = vsel %vm436, %v2309, %v2311
      %v2313 = vrot.slane %v2244, 1
      %v2314 = vrot.slane %v2198, 1
      %v2315 = vsel %vm436, %v2313, %v2314
      %v2316 = vrot.slane %v2254, 1
      %v2317 = vsel %vm436, %v2314, %v2316
      %v2318 = vrot.slane %v2245, 1
      %v2319 = vrot.slane %v2201, 1
      %v2320 = vsel %vm436, %v2318, %v2319
      %v2321 = vrot.slane %v2255, 1
      %v2322 = vsel %vm436, %v2319, %v2321
      %v2339 = vpack.c.bf16 %v2287, %v2285
      %v2340 = vpack.c.bf16 %v2292, %v2290
      %v2341 = vpack.c.bf16 %v2297, %v2295
      %v2342 = vpack.c.bf16 %v2302, %v2300
      %v2343 = vpack.c.bf16 %v2307, %v2305
      %v2344 = vpack.c.bf16 %v2312, %v2310
      %v2345 = vpack.c.bf16 %v2317, %v2315
      %v2346 = vpack.c.bf16 %v2322, %v2320
      %s2347 = scalar_lea.vmem %s3, 4
      %v2348 = vld [vmem:[%s2347] sm:$0xf]
      %vm2349 = vcmask 64512
      %v2351 = vsel %vm2349, %v2339, 0
      %v2354 = vsel %vm2349, %v2340, 0
      %v2357 = vsel %vm2349, %v2341, 0
      %v2360 = vsel %vm2349, %v2342, 0
      %v2363 = vsel %vm2349, %v2343, 0
      %v2366 = vsel %vm2349, %v2344, 0
      %v2369 = vsel %vm2349, %v2345, 0
      %v2372 = vsel %vm2349, %v2346, 0
      %vm2374 = vcmask 1043456
      %v2376 = vsel %vm2374, %v2348, 0
      %2378 = vmatprep.subr.bf16.mxu0 0
      %2379 = vmatpush1.bf16.msra.mxu0 %v2376
      %2380 = vmatprep.subr.bf16.mxu0 0
      %2381 = vmatpush1.bf16.msra.mxu0 0
      %2382 = vmatprep.subr.bf16.mxu0 0
      %2383 = vmatpush1.bf16.msra.mxu0 0
      %2384 = vmatprep.subr.bf16.mxu0 0
      %2385 = vmatpush1.bf16.msra.mxu0 0
      %2386 = vmatprep.subr.bf16.mxu0 0
      %2387 = vmatpush1.bf16.msra.mxu0 0
      %2388 = vmatprep.subr.bf16.mxu0 0
      %2389 = vmatpush1.bf16.msra.mxu0 0
      %2390 = vmatprep.subr.bf16.mxu0 0
      %2391 = vmatpush1.bf16.msra.mxu0 0
      %2392 = vmatprep.subr.bf16.mxu0 0
      %2393 = vmatpush1.bf16.msra.mxu0 0
      %2394 = vmatprep.subr.bf16.mxu0 0
      %2395 = vmatpush1.bf16.msra.mxu0 0
      %2396 = vmatprep.subr.bf16.mxu0 0
      %2397 = vmatpush1.bf16.msra.mxu0 0
      %2398 = vmatprep.subr.bf16.mxu0 0
      %2399 = vmatpush1.bf16.msra.mxu0 0
      %2400 = vmatprep.subr.bf16.mxu0 0
      %2401 = vmatpush1.bf16.msra.mxu0 0
      %2402 = vmatprep.subr.bf16.mxu0 0
      %2403 = vmatpush1.bf16.msra.mxu0 0
      %2404 = vmatprep.subr.bf16.mxu0 0
      %2405 = vmatpush1.bf16.msra.mxu0 0
      %2406 = vmatprep.subr.bf16.mxu0 0
      %2407 = vmatpush1.bf16.msra.mxu0 0
      %2408 = vmatprep.subr.bf16.mxu0 0
      %2409 = vmatpush1.bf16.msra.mxu0 0
      %2410 = vmatprep.mubr.bf16.mxu0 0
      %2411 = vmatmul.mubr.bf16.gmra.mrb[0].mxu0 %v2351
      %v2412 = vpop.f32.mrb[0].mxu0
      %v2413 = vadd.f32 0.0, %v2412
      %v2414 = vpop.f32.mrb[0].mxu0
      %v2415 = vpop.f32.mrb[0].mxu0
      %v2416 = vadd.f32 0.0, %v2415
      %v2417 = vpop.f32.mrb[0].mxu0
      %2418 = vmatprep.mubr.bf16.mxu0 0
      %2419 = vmatmul.mubr.bf16.gmra.mrb[0].mxu0 %v2354
      %v2420 = vpop.f32.mrb[0].mxu0
      %v2421 = vadd.f32 0.0, %v2420
      %v2422 = vpop.f32.mrb[0].mxu0
      %v2423 = vpop.f32.mrb[0].mxu0
      %v2424 = vadd.f32 0.0, %v2423
      %v2425 = vpop.f32.mrb[0].mxu0
      %2426 = vmatprep.mubr.bf16.mxu0 0
      %2427 = vmatmul.mubr.bf16.gmra.mrb[0].mxu0 %v2357
      %v2428 = vpop.f32.mrb[0].mxu0
      %v2429 = vadd.f32 0.0, %v2428
      %v2430 = vpop.f32.mrb[0].mxu0
      %v2431 = vpop.f32.mrb[0].mxu0
      %v2432 = vadd.f32 0.0, %v2431
      %v2433 = vpop.f32.mrb[0].mxu0
      %2434 = vmatprep.mubr.bf16.mxu0 0
      %2435 = vmatmul.mubr.bf16.gmra.mrb[0].mxu0 %v2360
      %v2436 = vpop.f32.mrb[0].mxu0
      %v2437 = vadd.f32 0.0, %v2436
      %v2438 = vpop.f32.mrb[0].mxu0
      %v2439 = vpop.f32.mrb[0].mxu0
      %v2440 = vadd.f32 0.0, %v2439
      %v2441 = vpop.f32.mrb[0].mxu0
      %2442 = vmatprep.mubr.bf16.mxu0 0
      %2443 = vmatmul.mubr.bf16.gmra.mrb[0].mxu0 %v2363
      %v2444 = vpop.f32.mrb[0].mxu0
      %v2445 = vadd.f32 0.0, %v2444
      %v2446 = vpop.f32.mrb[0].mxu0
      %v2447 = vpop.f32.mrb[0].mxu0
      %v2448 = vadd.f32 0.0, %v2447
      %v2449 = vpop.f32.mrb[0].mxu0
      %2450 = vmatprep.mubr.bf16.mxu0 0
      %2451 = vmatmul.mubr.bf16.gmra.mrb[0].mxu0 %v2366
      %v2452 = vpop.f32.mrb[0].mxu0
      %v2453 = vadd.f32 0.0, %v2452
      %v2454 = vpop.f32.mrb[0].mxu0
      %v2455 = vpop.f32.mrb[0].mxu0
      %v2456 = vadd.f32 0.0, %v2455
      %v2457 = vpop.f32.mrb[0].mxu0
      %2458 = vmatprep.mubr.bf16.mxu0 0
      %2459 = vmatmul.mubr.bf16.gmra.mrb[0].mxu0 %v2369
      %v2460 = vpop.f32.mrb[0].mxu0
      %v2461 = vadd.f32 0.0, %v2460
      %v2462 = vpop.f32.mrb[0].mxu0
      %v2463 = vpop.f32.mrb[0].mxu0
      %v2464 = vadd.f32 0.0, %v2463
      %v2465 = vpop.f32.mrb[0].mxu0
      %2466 = vmatprep.mubr.bf16.mxu0 0
      %2467 = vmatmul.mubr.bf16.gmra.mrb[0].mxu0 %v2372
      %v2468 = vpop.f32.mrb[0].mxu0
      %v2469 = vadd.f32 0.0, %v2468
      %v2470 = vpop.f32.mrb[0].mxu0
      %v2471 = vpop.f32.mrb[0].mxu0
      %v2472 = vadd.f32 0.0, %v2471
      %v2473 = vpop.f32.mrb[0].mxu0
      %2474 = vdwg.mxu0
      %v2476 = vsel %vm2349, %v2258, 0
      %v2479 = vsel %vm2349, %v2259, 0
      %v2482 = vsel %vm2349, %v2260, 0
      %v2485 = vsel %vm2349, %v2261, 0
      %v2488 = vsel %vm2349, %v2262, 0
      %v2491 = vsel %vm2349, %v2263, 0
      %v2494 = vsel %vm2349, %v2264, 0
      %v2497 = vsel %vm2349, %v2265, 0
      %v2500 = vsel %vm2374, %v2266, 0
      %2502 = vmatprep.subr.bf16.mxu0 0
      %2503 = vmatpush1.bf16.msra.mxu0 %v2500
      %2504 = vmatprep.subr.bf16.mxu0 0
      %2505 = vmatpush1.bf16.msra.mxu0 0
      %2506 = vmatprep.subr.bf16.mxu0 0
      %2507 = vmatpush1.bf16.msra.mxu0 0
      %2508 = vmatprep.subr.bf16.mxu0 0
      %2509 = vmatpush1.bf16.msra.mxu0 0
      %2510 = vmatprep.subr.bf16.mxu0 0
      %2511 = vmatpush1.bf16.msra.mxu0 0
      %2512 = vmatprep.subr.bf16.mxu0 0
      %2513 = vmatpush1.bf16.msra.mxu0 0
      %2514 = vmatprep.subr.bf16.mxu0 0
      %2515 = vmatpush1.bf16.msra.mxu0 0
      %2516 = vmatprep.subr.bf16.mxu0 0
      %2517 = vmatpush1.bf16.msra.mxu0 0
      %2518 = vmatprep.subr.bf16.mxu0 0
      %2519 = vmatpush1.bf16.msra.mxu0 0
      %2520 = vmatprep.subr.bf16.mxu0 0
      %2521 = vmatpush1.bf16.msra.mxu0 0
      %2522 = vmatprep.subr.bf16.mxu0 0
      %2523 = vmatpush1.bf16.msra.mxu0 0
      %2524 = vmatprep.subr.bf16.mxu0 0
      %2525 = vmatpush1.bf16.msra.mxu0 0
      %2526 = vmatprep.subr.bf16.mxu0 0
      %2527 = vmatpush1.bf16.msra.mxu0 0
      %2528 = vmatprep.subr.bf16.mxu0 0
      %2529 = vmatpush1.bf16.msra.mxu0 0
      %2530 = vmatprep.subr.bf16.mxu0 0
      %2531 = vmatpush1.bf16.msra.mxu0 0
      %2532 = vmatprep.subr.bf16.mxu0 0
      %2533 = vmatpush1.bf16.msra.mxu0 0
      %2534 = vmatprep.mubr.bf16.mxu0 0
      %2535 = vmatmul.mubr.bf16.gmra.mrb[0].mxu0 %v2476
      %v2536 = vpop.f32.mrb[0].mxu0
      %v2537 = vadd.f32 %v2413, %v2536
      %v2538 = vpop.f32.mrb[0].mxu0
      %v2539 = vpop.f32.mrb[0].mxu0
      %v2540 = vadd.f32 %v2416, %v2539
      %v2541 = vpop.f32.mrb[0].mxu0
      %2542 = vmatprep.mubr.bf16.mxu0 0
      %2543 = vmatmul.mubr.bf16.gmra.mrb[0].mxu0 %v2479
      %v2544 = vpop.f32.mrb[0].mxu0
      %v2545 = vadd.f32 %v2421, %v2544
      %v2546 = vpop.f32.mrb[0].mxu0
      %v2547 = vpop.f32.mrb[0].mxu0
      %v2548 = vadd.f32 %v2424, %v2547
      %v2549 = vpop.f32.mrb[0].mxu0
      %2550 = vmatprep.mubr.bf16.mxu0 0
      %2551 = vmatmul.mubr.bf16.gmra.mrb[0].mxu0 %v2482
      %v2552 = vpop.f32.mrb[0].mxu0
      %v2553 = vadd.f32 %v2429, %v2552
      %v2554 = vpop.f32.mrb[0].mxu0
      %v2555 = vpop.f32.mrb[0].mxu0
      %v2556 = vadd.f32 %v2432, %v2555
      %v2557 = vpop.f32.mrb[0].mxu0
      %2558 = vmatprep.mubr.bf16.mxu0 0
      %2559 = vmatmul.mubr.bf16.gmra.mrb[0].mxu0 %v2485
      %v2560 = vpop.f32.mrb[0].mxu0
      %v2561 = vadd.f32 %v2437, %v2560
      %v2562 = vpop.f32.mrb[0].mxu0
      %v2563 = vpop.f32.mrb[0].mxu0
      %v2564 = vadd.f32 %v2440, %v2563
      %v2565 = vpop.f32.mrb[0].mxu0
      %2566 = vmatprep.mubr.bf16.mxu0 0
      %2567 = vmatmul.mubr.bf16.gmra.mrb[0].mxu0 %v2488
      %v2568 = vpop.f32.mrb[0].mxu0
      %v2569 = vadd.f32 %v2445, %v2568
      %v2570 = vpop.f32.mrb[0].mxu0
      %v2571 = vpop.f32.mrb[0].mxu0
      %v2572 = vadd.f32 %v2448, %v2571
      %v2573 = vpop.f32.mrb[0].mxu0
      %2574 = vmatprep.mubr.bf16.mxu0 0
      %2575 = vmatmul.mubr.bf16.gmra.mrb[0].mxu0 %v2491
      %v2576 = vpop.f32.mrb[0].mxu0
      %v2577 = vadd.f32 %v2453, %v2576
      %v2578 = vpop.f32.mrb[0].mxu0
      %v2579 = vpop.f32.mrb[0].mxu0
      %v2580 = vadd.f32 %v2456, %v2579
      %v2581 = vpop.f32.mrb[0].mxu0
      %2582 = vmatprep.mubr.bf16.mxu0 0
      %2583 = vmatmul.mubr.bf16.gmra.mrb[0].mxu0 %v2494
      %v2584 = vpop.f32.mrb[0].mxu0
      %v2585 = vadd.f32 %v2461, %v2584
      %v2586 = vpop.f32.mrb[0].mxu0
      %v2587 = vpop.f32.mrb[0].mxu0
      %v2588 = vadd.f32 %v2464, %v2587
      %v2589 = vpop.f32.mrb[0].mxu0
      %2590 = vmatprep.mubr.bf16.mxu0 0
      %2591 = vmatmul.mubr.bf16.gmra.mrb[0].mxu0 %v2497
      %v2592 = vpop.f32.mrb[0].mxu0
      %v2593 = vadd.f32 %v2469, %v2592
      %v2594 = vpop.f32.mrb[0].mxu0
      %v2595 = vpop.f32.mrb[0].mxu0
      %v2596 = vadd.f32 %v2472, %v2595
      %v2597 = vpop.f32.mrb[0].mxu0
      %2598 = vdwg.mxu0
      %v2599 = vrot.slane %v2238, 2
      %v2600 = vrot.slane %v2180, 2
      %v2601 = vsel %vm813, %v2599, %v2600
      %v2602 = vrot.slane %v2248, 2
      %v2603 = vsel %vm813, %v2600, %v2602
      %v2604 = vrot.slane %v2239, 2
      %v2605 = vrot.slane %v2183, 2
      %v2606 = vsel %vm813, %v2604, %v2605
      %v2607 = vrot.slane %v2249, 2
      %v2608 = vsel %vm813, %v2605, %v2607
      %v2609 = vrot.slane %v2240, 2
      %v2610 = vrot.slane %v2186, 2
      %v2611 = vsel %vm813, %v2609, %v2610
      %v2612 = vrot.slane %v2250, 2
      %v2613 = vsel %vm813, %v2610, %v2612
      %v2614 = vrot.slane %v2241, 2
      %v2615 = vrot.slane %v2189, 2
      %v2616 = vsel %vm813, %v2614, %v2615
      %v2617 = vrot.slane %v2251, 2
      %v2618 = vsel %vm813, %v2615, %v2617
      %v2619 = vrot.slane %v2242, 2
      %v2620 = vrot.slane %v2192, 2
      %v2621 = vsel %vm813, %v2619, %v2620
      %v2622 = vrot.slane %v2252, 2
      %v2623 = vsel %vm813, %v2620, %v2622
      %v2624 = vrot.slane %v2243, 2
      %v2625 = vrot.slane %v2195, 2
      %v2626 = vsel %vm813, %v2624, %v2625
      %v2627 = vrot.slane %v2253, 2
      %v2628 = vsel %vm813, %v2625, %v2627
      %v2629 = vrot.slane %v2244, 2
      %v2630 = vrot.slane %v2198, 2
      %v2631 = vsel %vm813, %v2629, %v2630
      %v2632 = vrot.slane %v2254, 2
      %v2633 = vsel %vm813, %v2630, %v2632
      %v2634 = vrot.slane %v2245, 2
      %v2635 = vrot.slane %v2201, 2
      %v2636 = vsel %vm813, %v2634, %v2635
      %v2637 = vrot.slane %v2255, 2
      %v2638 = vsel %vm813, %v2635, %v2637
      %v2655 = vpack.c.bf16 %v2603, %v2601
      %v2656 = vpack.c.bf16 %v2608, %v2606
      %v2657 = vpack.c.bf16 %v2613, %v2611
      %v2658 = vpack.c.bf16 %v2618, %v2616
      %v2659 = vpack.c.bf16 %v2623, %v2621
      %v2660 = vpack.c.bf16 %v2628, %v2626
      %v2661 = vpack.c.bf16 %v2633, %v2631
      %v2662 = vpack.c.bf16 %v2638, %v2636
      %s2663 = scalar_lea.vmem %s3, 8
      %v2664 = vld [vmem:[%s2663] sm:$0xf]
      %v2666 = vsel %vm2349, %v2655, 0
      %v2669 = vsel %vm2349, %v2656, 0
      %v2672 = vsel %vm2349, %v2657, 0
      %v2675 = vsel %vm2349, %v2658, 0
      %v2678 = vsel %vm2349, %v2659, 0
      %v2681 = vsel %vm2349, %v2660, 0
      %v2684 = vsel %vm2349, %v2661, 0
      %v2687 = vsel %vm2349, %v2662, 0
      %v2690 = vsel %vm2374, %v2664, 0
      %2692 = vmatprep.subr.bf16.mxu0 0
      %2693 = vmatpush1.bf16.msra.mxu0 %v2690
      %2694 = vmatprep.subr.bf16.mxu0 0
      %2695 = vmatpush1.bf16.msra.mxu0 0
      %2696 = vmatprep.subr.bf16.mxu0 0
      %2697 = vmatpush1.bf16.msra.mxu0 0
      %2698 = vmatprep.subr.bf16.mxu0 0
      %2699 = vmatpush1.bf16.msra.mxu0 0
      %2700 = vmatprep.subr.bf16.mxu0 0
      %2701 = vmatpush1.bf16.msra.mxu0 0
      %2702 = vmatprep.subr.bf16.mxu0 0
      %2703 = vmatpush1.bf16.msra.mxu0 0
      %2704 = vmatprep.subr.bf16.mxu0 0
      %2705 = vmatpush1.bf16.msra.mxu0 0
      %2706 = vmatprep.subr.bf16.mxu0 0
      %2707 = vmatpush1.bf16.msra.mxu0 0
      %2708 = vmatprep.subr.bf16.mxu0 0
      %2709 = vmatpush1.bf16.msra.mxu0 0
      %2710 = vmatprep.subr.bf16.mxu0 0
      %2711 = vmatpush1.bf16.msra.mxu0 0
      %2712 = vmatprep.subr.bf16.mxu0 0
      %2713 = vmatpush1.bf16.msra.mxu0 0
      %2714 = vmatprep.subr.bf16.mxu0 0
      %2715 = vmatpush1.bf16.msra.mxu0 0
      %2716 = vmatprep.subr.bf16.mxu0 0
      %2717 = vmatpush1.bf16.msra.mxu0 0
      %2718 = vmatprep.subr.bf16.mxu0 0
      %2719 = vmatpush1.bf16.msra.mxu0 0
      %2720 = vmatprep.subr.bf16.mxu0 0
      %2721 = vmatpush1.bf16.msra.mxu0 0
      %2722 = vmatprep.subr.bf16.mxu0 0
      %2723 = vmatpush1.bf16.msra.mxu0 0
      %2724 = vmatprep.mubr.bf16.mxu0 0
      %2725 = vmatmul.mubr.bf16.gmra.mrb[0].mxu0 %v2666
      %v2726 = vpop.f32.mrb[0].mxu0
      %v2727 = vadd.f32 0.0, %v2726
      %v2728 = vpop.f32.mrb[0].mxu0
      %v2729 = vpop.f32.mrb[0].mxu0
      %v2730 = vadd.f32 0.0, %v2729
      %v2731 = vpop.f32.mrb[0].mxu0
      %2732 = vmatprep.mubr.bf16.mxu0 0
      %2733 = vmatmul.mubr.bf16.gmra.mrb[0].mxu0 %v2669
      %v2734 = vpop.f32.mrb[0].mxu0
      %v2735 = vadd.f32 0.0, %v2734
      %v2736 = vpop.f32.mrb[0].mxu0
      %v2737 = vpop.f32.mrb[0].mxu0
      %v2738 = vadd.f32 0.0, %v2737
      %v2739 = vpop.f32.mrb[0].mxu0
      %2740 = vmatprep.mubr.bf16.mxu0 0
      %2741 = vmatmul.mubr.bf16.gmra.mrb[0].mxu0 %v2672
      %v2742 = vpop.f32.mrb[0].mxu0
      %v2743 = vadd.f32 0.0, %v2742
      %v2744 = vpop.f32.mrb[0].mxu0
      %v2745 = vpop.f32.mrb[0].mxu0
      %v2746 = vadd.f32 0.0, %v2745
      %v2747 = vpop.f32.mrb[0].mxu0
      %2748 = vmatprep.mubr.bf16.mxu0 0
      %2749 = vmatmul.mubr.bf16.gmra.mrb[0].mxu0 %v2675
      %v2750 = vpop.f32.mrb[0].mxu0
      %v2751 = vadd.f32 0.0, %v2750
      %v2752 = vpop.f32.mrb[0].mxu0
      %v2753 = vpop.f32.mrb[0].mxu0
      %v2754 = vadd.f32 0.0, %v2753
      %v2755 = vpop.f32.mrb[0].mxu0
      %2756 = vmatprep.mubr.bf16.mxu0 0
      %2757 = vmatmul.mubr.bf16.gmra.mrb[0].mxu0 %v2678
      %v2758 = vpop.f32.mrb[0].mxu0
      %v2759 = vadd.f32 0.0, %v2758
      %v2760 = vpop.f32.mrb[0].mxu0
      %v2761 = vpop.f32.mrb[0].mxu0
      %v2762 = vadd.f32 0.0, %v2761
      %v2763 = vpop.f32.mrb[0].mxu0
      %2764 = vmatprep.mubr.bf16.mxu0 0
      %2765 = vmatmul.mubr.bf16.gmra.mrb[0].mxu0 %v2681
      %v2766 = vpop.f32.mrb[0].mxu0
      %v2767 = vadd.f32 0.0, %v2766
      %v2768 = vpop.f32.mrb[0].mxu0
      %v2769 = vpop.f32.mrb[0].mxu0
      %v2770 = vadd.f32 0.0, %v2769
      %v2771 = vpop.f32.mrb[0].mxu0
      %2772 = vmatprep.mubr.bf16.mxu0 0
      %2773 = vmatmul.mubr.bf16.gmra.mrb[0].mxu0 %v2684
      %v2774 = vpop.f32.mrb[0].mxu0
      %v2775 = vadd.f32 0.0, %v2774
      %v2776 = vpop.f32.mrb[0].mxu0
      %v2777 = vpop.f32.mrb[0].mxu0
      %v2778 = vadd.f32 0.0, %v2777
      %v2779 = vpop.f32.mrb[0].mxu0
      %2780 = vmatprep.mubr.bf16.mxu0 0
      %2781 = vmatmul.mubr.bf16.gmra.mrb[0].mxu0 %v2687
      %v2782 = vpop.f32.mrb[0].mxu0
      %v2783 = vadd.f32 0.0, %v2782
      %v2784 = vpop.f32.mrb[0].mxu0
      %v2785 = vpop.f32.mrb[0].mxu0
      %v2786 = vadd.f32 0.0, %v2785
      %v2787 = vpop.f32.mrb[0].mxu0
      %2788 = vdwg.mxu0
      %v2789 = vadd.f32 %v2537, %v2727
      %v2790 = vadd.f32 %v2540, %v2730
      %v2791 = vadd.f32 %v2545, %v2735
      %v2792 = vadd.f32 %v2548, %v2738
      %v2793 = vadd.f32 %v2553, %v2743
      %v2794 = vadd.f32 %v2556, %v2746
      %v2795 = vadd.f32 %v2561, %v2751
      %v2796 = vadd.f32 %v2564, %v2754
      %v2797 = vadd.f32 %v2569, %v2759
      %v2798 = vadd.f32 %v2572, %v2762
      %v2799 = vadd.f32 %v2577, %v2767
      %v2800 = vadd.f32 %v2580, %v2770
      %v2801 = vadd.f32 %v2585, %v2775
      %v2802 = vadd.f32 %v2588, %v2778
      %v2803 = vadd.f32 %v2593, %v2783
      %v2804 = vadd.f32 %v2596, %v2786
      %v2805 = vpack.c.bf16 %v2204, %v2246
      %s2806 = scalar_lea.vmem %s3, 12
      %v2807 = vld [vmem:[%s2806] sm:$0xf]
      %v2809 = vsel %vm2349, %v2805, 0
      %v2812 = vsel %vm2374, %v2807, 0
      %2814 = vmatprep.subr.bf16.mxu0 0
      %2815 = vmatpush1.bf16.msra.mxu0 %v2812
      %2816 = vmatprep.subr.bf16.mxu0 0
      %2817 = vmatpush1.bf16.msra.mxu0 0
      %2818 = vmatprep.subr.bf16.mxu0 0
      %2819 = vmatpush1.bf16.msra.mxu0 0
      %2820 = vmatprep.subr.bf16.mxu0 0
      %2821 = vmatpush1.bf16.msra.mxu0 0
      %2822 = vmatprep.subr.bf16.mxu0 0
      %2823 = vmatpush1.bf16.msra.mxu0 0
      %2824 = vmatprep.subr.bf16.mxu0 0
      %2825 = vmatpush1.bf16.msra.mxu0 0
      %2826 = vmatprep.subr.bf16.mxu0 0
      %2827 = vmatpush1.bf16.msra.mxu0 0
      %2828 = vmatprep.subr.bf16.mxu0 0
      %2829 = vmatpush1.bf16.msra.mxu0 0
      %2830 = vmatprep.subr.bf16.mxu0 0
      %2831 = vmatpush1.bf16.msra.mxu0 0
      %2832 = vmatprep.subr.bf16.mxu0 0
      %2833 = vmatpush1.bf16.msra.mxu0 0
      %2834 = vmatprep.subr.bf16.mxu0 0
      %2835 = vmatpush1.bf16.msra.mxu0 0
      %2836 = vmatprep.subr.bf16.mxu0 0
      %2837 = vmatpush1.bf16.msra.mxu0 0
      %2838 = vmatprep.subr.bf16.mxu0 0
      %2839 = vmatpush1.bf16.msra.mxu0 0
      %2840 = vmatprep.subr.bf16.mxu0 0
      %2841 = vmatpush1.bf16.msra.mxu0 0
      %2842 = vmatprep.subr.bf16.mxu0 0
      %2843 = vmatpush1.bf16.msra.mxu0 0
      %2844 = vmatprep.subr.bf16.mxu0 0
      %2845 = vmatpush1.bf16.msra.mxu0 0
      %2846 = vmatprep.mubr.bf16.mxu0 0
      %2847 = vmatmul.mubr.bf16.gmra.mrb[0].mxu0 %v2479
      %v2848 = vpop.f32.mrb[0].mxu0
      %v2849 = vadd.f32 0.0, %v2848
      %v2850 = vpop.f32.mrb[0].mxu0
      %v2851 = vpop.f32.mrb[0].mxu0
      %v2852 = vadd.f32 0.0, %v2851
      %v2853 = vpop.f32.mrb[0].mxu0
      %2854 = vmatprep.mubr.bf16.mxu0 0
      %2855 = vmatmul.mubr.bf16.gmra.mrb[0].mxu0 %v2482
      %v2856 = vpop.f32.mrb[0].mxu0
      %v2857 = vadd.f32 0.0, %v2856
      %v2858 = vpop.f32.mrb[0].mxu0
      %v2859 = vpop.f32.mrb[0].mxu0
      %v2860 = vadd.f32 0.0, %v2859
      %v2861 = vpop.f32.mrb[0].mxu0
      %2862 = vmatprep.mubr.bf16.mxu0 0
      %2863 = vmatmul.mubr.bf16.gmra.mrb[0].mxu0 %v2485
      %v2864 = vpop.f32.mrb[0].mxu0
      %v2865 = vadd.f32 0.0, %v2864
      %v2866 = vpop.f32.mrb[0].mxu0
      %v2867 = vpop.f32.mrb[0].mxu0
      %v2868 = vadd.f32 0.0, %v2867
      %v2869 = vpop.f32.mrb[0].mxu0
      %2870 = vmatprep.mubr.bf16.mxu0 0
      %2871 = vmatmul.mubr.bf16.gmra.mrb[0].mxu0 %v2488
      %v2872 = vpop.f32.mrb[0].mxu0
      %v2873 = vadd.f32 0.0, %v2872
      %v2874 = vpop.f32.mrb[0].mxu0
      %v2875 = vpop.f32.mrb[0].mxu0
      %v2876 = vadd.f32 0.0, %v2875
      %v2877 = vpop.f32.mrb[0].mxu0
      %2878 = vmatprep.mubr.bf16.mxu0 0
      %2879 = vmatmul.mubr.bf16.gmra.mrb[0].mxu0 %v2491
      %v2880 = vpop.f32.mrb[0].mxu0
      %v2881 = vadd.f32 0.0, %v2880
      %v2882 = vpop.f32.mrb[0].mxu0
      %v2883 = vpop.f32.mrb[0].mxu0
      %v2884 = vadd.f32 0.0, %v2883
      %v2885 = vpop.f32.mrb[0].mxu0
      %2886 = vmatprep.mubr.bf16.mxu0 0
      %2887 = vmatmul.mubr.bf16.gmra.mrb[0].mxu0 %v2494
      %v2888 = vpop.f32.mrb[0].mxu0
      %v2889 = vadd.f32 0.0, %v2888
      %v2890 = vpop.f32.mrb[0].mxu0
      %v2891 = vpop.f32.mrb[0].mxu0
      %v2892 = vadd.f32 0.0, %v2891
      %v2893 = vpop.f32.mrb[0].mxu0
      %2894 = vmatprep.mubr.bf16.mxu0 0
      %2895 = vmatmul.mubr.bf16.gmra.mrb[0].mxu0 %v2497
      %v2896 = vpop.f32.mrb[0].mxu0
      %v2897 = vadd.f32 0.0, %v2896
      %v2898 = vpop.f32.mrb[0].mxu0
      %v2899 = vpop.f32.mrb[0].mxu0
      %v2900 = vadd.f32 0.0, %v2899
      %v2901 = vpop.f32.mrb[0].mxu0
      %2902 = vmatprep.mubr.bf16.mxu0 0
      %2903 = vmatmul.mubr.bf16.gmra.mrb[0].mxu0 %v2809
      %v2904 = vpop.f32.mrb[0].mxu0
      %v2905 = vadd.f32 0.0, %v2904
      %v2906 = vpop.f32.mrb[0].mxu0
      %v2907 = vpop.f32.mrb[0].mxu0
      %v2908 = vadd.f32 0.0, %v2907
      %v2909 = vpop.f32.mrb[0].mxu0
      %2910 = vdwg.mxu0
      %v2911 = vadd.f32 %v2789, %v2849
      %v2912 = vadd.f32 %v2790, %v2852
      %v2913 = vadd.f32 %v2791, %v2857
      %v2914 = vadd.f32 %v2792, %v2860
      %v2915 = vadd.f32 %v2793, %v2865
      %v2916 = vadd.f32 %v2794, %v2868
      %v2917 = vadd.f32 %v2795, %v2873
      %v2918 = vadd.f32 %v2796, %v2876
      %v2919 = vadd.f32 %v2797, %v2881
      %v2920 = vadd.f32 %v2798, %v2884
      %v2921 = vadd.f32 %v2799, %v2889
      %v2922 = vadd.f32 %v2800, %v2892
      %v2923 = vadd.f32 %v2801, %v2897
      %v2924 = vadd.f32 %v2802, %v2900
      %v2925 = vadd.f32 %v2803, %v2905
      %v2926 = vadd.f32 %v2804, %v2908
      %v2929 = vrot.slane %v2246, 1
      %v2930 = vrot.slane %v2204, 1
      %v2931 = vsel %vm436, %v2929, %v2930
      %v2932 = vrot.slane %v2256, 1
      %v2933 = vsel %vm436, %v2930, %v2932
      %v2936 = vpack.c.bf16 %v2933, %v2931
      %s2937 = scalar_lea.vmem %s3, 16
      %v2938 = vld [vmem:[%s2937] sm:$0xf]
      %v2940 = vsel %vm2349, %v2936, 0
      %v2943 = vsel %vm2374, %v2938, 0
      %2945 = vmatprep.subr.bf16.mxu0 0
      %2946 = vmatpush1.bf16.msra.mxu0 %v2943
      %2947 = vmatprep.subr.bf16.mxu0 0
      %2948 = vmatpush1.bf16.msra.mxu0 0
      %2949 = vmatprep.subr.bf16.mxu0 0
      %2950 = vmatpush1.bf16.msra.mxu0 0
      %2951 = vmatprep.subr.bf16.mxu0 0
      %2952 = vmatpush1.bf16.msra.mxu0 0
      %2953 = vmatprep.subr.bf16.mxu0 0
      %2954 = vmatpush1.bf16.msra.mxu0 0
      %2955 = vmatprep.subr.bf16.mxu0 0
      %2956 = vmatpush1.bf16.msra.mxu0 0
      %2957 = vmatprep.subr.bf16.mxu0 0
      %2958 = vmatpush1.bf16.msra.mxu0 0
      %2959 = vmatprep.subr.bf16.mxu0 0
      %2960 = vmatpush1.bf16.msra.mxu0 0
      %2961 = vmatprep.subr.bf16.mxu0 0
      %2962 = vmatpush1.bf16.msra.mxu0 0
      %2963 = vmatprep.subr.bf16.mxu0 0
      %2964 = vmatpush1.bf16.msra.mxu0 0
      %2965 = vmatprep.subr.bf16.mxu0 0
      %2966 = vmatpush1.bf16.msra.mxu0 0
      %2967 = vmatprep.subr.bf16.mxu0 0
      %2968 = vmatpush1.bf16.msra.mxu0 0
      %2969 = vmatprep.subr.bf16.mxu0 0
      %2970 = vmatpush1.bf16.msra.mxu0 0
      %2971 = vmatprep.subr.bf16.mxu0 0
      %2972 = vmatpush1.bf16.msra.mxu0 0
      %2973 = vmatprep.subr.bf16.mxu0 0
      %2974 = vmatpush1.bf16.msra.mxu0 0
      %2975 = vmatprep.subr.bf16.mxu0 0
      %2976 = vmatpush1.bf16.msra.mxu0 0
      %2977 = vmatprep.mubr.bf16.mxu0 0
      %2978 = vmatmul.mubr.bf16.gmra.mrb[0].mxu0 %v2354
      %v2979 = vpop.f32.mrb[0].mxu0
      %v2980 = vadd.f32 0.0, %v2979
      %v2981 = vpop.f32.mrb[0].mxu0
      %v2982 = vpop.f32.mrb[0].mxu0
      %v2983 = vadd.f32 0.0, %v2982
      %v2984 = vpop.f32.mrb[0].mxu0
      %2985 = vmatprep.mubr.bf16.mxu0 0
      %2986 = vmatmul.mubr.bf16.gmra.mrb[0].mxu0 %v2357
      %v2987 = vpop.f32.mrb[0].mxu0
      %v2988 = vadd.f32 0.0, %v2987
      %v2989 = vpop.f32.mrb[0].mxu0
      %v2990 = vpop.f32.mrb[0].mxu0
      %v2991 = vadd.f32 0.0, %v2990
      %v2992 = vpop.f32.mrb[0].mxu0
      %2993 = vmatprep.mubr.bf16.mxu0 0
      %2994 = vmatmul.mubr.bf16.gmra.mrb[0].mxu0 %v2360
      %v2995 = vpop.f32.mrb[0].mxu0
      %v2996 = vadd.f32 0.0, %v2995
      %v2997 = vpop.f32.mrb[0].mxu0
      %v2998 = vpop.f32.mrb[0].mxu0
      %v2999 = vadd.f32 0.0, %v2998
      %v3000 = vpop.f32.mrb[0].mxu0
      %3001 = vmatprep.mubr.bf16.mxu0 0
      %3002 = vmatmul.mubr.bf16.gmra.mrb[0].mxu0 %v2363
      %v3003 = vpop.f32.mrb[0].mxu0
      %v3004 = vadd.f32 0.0, %v3003
      %v3005 = vpop.f32.mrb[0].mxu0
      %v3006 = vpop.f32.mrb[0].mxu0
      %v3007 = vadd.f32 0.0, %v3006
      %v3008 = vpop.f32.mrb[0].mxu0
      %3009 = vmatprep.mubr.bf16.mxu0 0
      %3010 = vmatmul.mubr.bf16.gmra.mrb[0].mxu0 %v2366
      %v3011 = vpop.f32.mrb[0].mxu0
      %v3012 = vadd.f32 0.0, %v3011
      %v3013 = vpop.f32.mrb[0].mxu0
      %v3014 = vpop.f32.mrb[0].mxu0
      %v3015 = vadd.f32 0.0, %v3014
      %v3016 = vpop.f32.mrb[0].mxu0
      %3017 = vmatprep.mubr.bf16.mxu0 0
      %3018 = vmatmul.mubr.bf16.gmra.mrb[0].mxu0 %v2369
      %v3019 = vpop.f32.mrb[0].mxu0
      %v3020 = vadd.f32 0.0, %v3019
      %v3021 = vpop.f32.mrb[0].mxu0
      %v3022 = vpop.f32.mrb[0].mxu0
      %v3023 = vadd.f32 0.0, %v3022
      %v3024 = vpop.f32.mrb[0].mxu0
      %3025 = vmatprep.mubr.bf16.mxu0 0
      %3026 = vmatmul.mubr.bf16.gmra.mrb[0].mxu0 %v2372
      %v3027 = vpop.f32.mrb[0].mxu0
      %v3028 = vadd.f32 0.0, %v3027
      %v3029 = vpop.f32.mrb[0].mxu0
      %v3030 = vpop.f32.mrb[0].mxu0
      %v3031 = vadd.f32 0.0, %v3030
      %v3032 = vpop.f32.mrb[0].mxu0
      %3033 = vmatprep.mubr.bf16.mxu0 0
      %3034 = vmatmul.mubr.bf16.gmra.mrb[0].mxu0 %v2940
      %v3035 = vpop.f32.mrb[0].mxu0
      %v3036 = vadd.f32 0.0, %v3035
      %v3037 = vpop.f32.mrb[0].mxu0
      %v3038 = vpop.f32.mrb[0].mxu0
      %v3039 = vadd.f32 0.0, %v3038
      %v3040 = vpop.f32.mrb[0].mxu0
      %3041 = vdwg.mxu0
      %v3042 = vadd.f32 %v2911, %v2980
      %v3043 = vadd.f32 %v2912, %v2983
      %v3044 = vadd.f32 %v2913, %v2988
      %v3045 = vadd.f32 %v2914, %v2991
      %v3046 = vadd.f32 %v2915, %v2996
      %v3047 = vadd.f32 %v2916, %v2999
      %v3048 = vadd.f32 %v2917, %v3004
      %v3049 = vadd.f32 %v2918, %v3007
      %v3050 = vadd.f32 %v2919, %v3012
      %v3051 = vadd.f32 %v2920, %v3015
      %v3052 = vadd.f32 %v2921, %v3020
      %v3053 = vadd.f32 %v2922, %v3023
      %v3054 = vadd.f32 %v2923, %v3028
      %v3055 = vadd.f32 %v2924, %v3031
      %v3056 = vadd.f32 %v2925, %v3036
      %v3057 = vadd.f32 %v2926, %v3039
      %v3058 = vrot.slane %v2246, 2
      %v3059 = vrot.slane %v2204, 2
      %v3060 = vsel %vm813, %v3058, %v3059
      %v3061 = vrot.slane %v2256, 2
      %v3062 = vsel %vm813, %v3059, %v3061
      %v3065 = vpack.c.bf16 %v3062, %v3060
      %s3066 = scalar_lea.vmem %s3, 20
      %v3067 = vld [vmem:[%s3066] sm:$0xf]
      %v3069 = vsel %vm2349, %v3065, 0
      %v3072 = vsel %vm2374, %v3067, 0
      %3074 = vmatprep.subr.bf16.mxu0 0
      %3075 = vmatpush1.bf16.msra.mxu0 %v3072
      %3076 = vmatprep.subr.bf16.mxu0 0
      %3077 = vmatpush1.bf16.msra.mxu0 0
      %3078 = vmatprep.subr.bf16.mxu0 0
      %3079 = vmatpush1.bf16.msra.mxu0 0
      %3080 = vmatprep.subr.bf16.mxu0 0
      %3081 = vmatpush1.bf16.msra.mxu0 0
      %3082 = vmatprep.subr.bf16.mxu0 0
      %3083 = vmatpush1.bf16.msra.mxu0 0
      %3084 = vmatprep.subr.bf16.mxu0 0
      %3085 = vmatpush1.bf16.msra.mxu0 0
      %3086 = vmatprep.subr.bf16.mxu0 0
      %3087 = vmatpush1.bf16.msra.mxu0 0
      %3088 = vmatprep.subr.bf16.mxu0 0
      %3089 = vmatpush1.bf16.msra.mxu0 0
      %3090 = vmatprep.subr.bf16.mxu0 0
      %3091 = vmatpush1.bf16.msra.mxu0 0
      %3092 = vmatprep.subr.bf16.mxu0 0
      %3093 = vmatpush1.bf16.msra.mxu0 0
      %3094 = vmatprep.subr.bf16.mxu0 0
      %3095 = vmatpush1.bf16.msra.mxu0 0
      %3096 = vmatprep.subr.bf16.mxu0 0
      %3097 = vmatpush1.bf16.msra.mxu0 0
      %3098 = vmatprep.subr.bf16.mxu0 0
      %3099 = vmatpush1.bf16.msra.mxu0 0
      %3100 = vmatprep.subr.bf16.mxu0 0
      %3101 = vmatpush1.bf16.msra.mxu0 0
      %3102 = vmatprep.subr.bf16.mxu0 0
      %3103 = vmatpush1.bf16.msra.mxu0 0
      %3104 = vmatprep.subr.bf16.mxu0 0
      %3105 = vmatpush1.bf16.msra.mxu0 0
      %3106 = vmatprep.mubr.bf16.mxu0 0
      %3107 = vmatmul.mubr.bf16.gmra.mrb[0].mxu0 %v2669
      %v3108 = vpop.f32.mrb[0].mxu0
      %v3109 = vadd.f32 0.0, %v3108
      %v3110 = vpop.f32.mrb[0].mxu0
      %v3111 = vpop.f32.mrb[0].mxu0
      %v3112 = vadd.f32 0.0, %v3111
      %v3113 = vpop.f32.mrb[0].mxu0
      %3114 = vmatprep.mubr.bf16.mxu0 0
      %3115 = vmatmul.mubr.bf16.gmra.mrb[0].mxu0 %v2672
      %v3116 = vpop.f32.mrb[0].mxu0
      %v3117 = vadd.f32 0.0, %v3116
      %v3118 = vpop.f32.mrb[0].mxu0
      %v3119 = vpop.f32.mrb[0].mxu0
      %v3120 = vadd.f32 0.0, %v3119
      %v3121 = vpop.f32.mrb[0].mxu0
      %3122 = vmatprep.mubr.bf16.mxu0 0
      %3123 = vmatmul.mubr.bf16.gmra.mrb[0].mxu0 %v2675
      %v3124 = vpop.f32.mrb[0].mxu0
      %v3125 = vadd.f32 0.0, %v3124
      %v3126 = vpop.f32.mrb[0].mxu0
      %v3127 = vpop.f32.mrb[0].mxu0
      %v3128 = vadd.f32 0.0, %v3127
      %v3129 = vpop.f32.mrb[0].mxu0
      %3130 = vmatprep.mubr.bf16.mxu0 0
      %3131 = vmatmul.mubr.bf16.gmra.mrb[0].mxu0 %v2678
      %v3132 = vpop.f32.mrb[0].mxu0
      %v3133 = vadd.f32 0.0, %v3132
      %v3134 = vpop.f32.mrb[0].mxu0
      %v3135 = vpop.f32.mrb[0].mxu0
      %v3136 = vadd.f32 0.0, %v3135
      %v3137 = vpop.f32.mrb[0].mxu0
      %3138 = vmatprep.mubr.bf16.mxu0 0
      %3139 = vmatmul.mubr.bf16.gmra.mrb[0].mxu0 %v2681
      %v3140 = vpop.f32.mrb[0].mxu0
      %v3141 = vadd.f32 0.0, %v3140
      %v3142 = vpop.f32.mrb[0].mxu0
      %v3143 = vpop.f32.mrb[0].mxu0
      %v3144 = vadd.f32 0.0, %v3143
      %v3145 = vpop.f32.mrb[0].mxu0
      %3146 = vmatprep.mubr.bf16.mxu0 0
      %3147 = vmatmul.mubr.bf16.gmra.mrb[0].mxu0 %v2684
      %v3148 = vpop.f32.mrb[0].mxu0
      %v3149 = vadd.f32 0.0, %v3148
      %v3150 = vpop.f32.mrb[0].mxu0
      %v3151 = vpop.f32.mrb[0].mxu0
      %v3152 = vadd.f32 0.0, %v3151
      %v3153 = vpop.f32.mrb[0].mxu0
      %3154 = vmatprep.mubr.bf16.mxu0 0
      %3155 = vmatmul.mubr.bf16.gmra.mrb[0].mxu0 %v2687
      %v3156 = vpop.f32.mrb[0].mxu0
      %v3157 = vadd.f32 0.0, %v3156
      %v3158 = vpop.f32.mrb[0].mxu0
      %v3159 = vpop.f32.mrb[0].mxu0
      %v3160 = vadd.f32 0.0, %v3159
      %v3161 = vpop.f32.mrb[0].mxu0
      %3162 = vmatprep.mubr.bf16.mxu0 0
      %3163 = vmatmul.mubr.bf16.gmra.mrb[0].mxu0 %v3069
      %v3164 = vpop.f32.mrb[0].mxu0
      %v3165 = vadd.f32 0.0, %v3164
      %v3166 = vpop.f32.mrb[0].mxu0
      %v3167 = vpop.f32.mrb[0].mxu0
      %v3168 = vadd.f32 0.0, %v3167
      %v3169 = vpop.f32.mrb[0].mxu0
      %3170 = vdwg.mxu0
      %v3171 = vadd.f32 %v3042, %v3109
      %v3172 = vadd.f32 %v3043, %v3112
      %v3173 = vadd.f32 %v3044, %v3117
      %v3174 = vadd.f32 %v3045, %v3120
      %v3175 = vadd.f32 %v3046, %v3125
      %v3176 = vadd.f32 %v3047, %v3128
      %v3177 = vadd.f32 %v3048, %v3133
      %v3178 = vadd.f32 %v3049, %v3136
      %v3179 = vadd.f32 %v3050, %v3141
      %v3180 = vadd.f32 %v3051, %v3144
      %v3181 = vadd.f32 %v3052, %v3149
      %v3182 = vadd.f32 %v3053, %v3152
      %v3183 = vadd.f32 %v3054, %v3157
      %v3184 = vadd.f32 %v3055, %v3160
      %v3185 = vadd.f32 %v3056, %v3165
      %v3186 = vadd.f32 %v3057, %v3168
      %v3187 = vpack.c.bf16 %v2207, %v2247
      %s3188 = scalar_lea.vmem %s3, 24
      %v3189 = vld [vmem:[%s3188] sm:$0xf]
      %v3191 = vsel %vm2349, %v3187, 0
      %v3194 = vsel %vm2374, %v3189, 0
      %3196 = vmatprep.subr.bf16.mxu0 0
      %3197 = vmatpush1.bf16.msra.mxu0 %v3194
      %3198 = vmatprep.subr.bf16.mxu0 0
      %3199 = vmatpush1.bf16.msra.mxu0 0
      %3200 = vmatprep.subr.bf16.mxu0 0
      %3201 = vmatpush1.bf16.msra.mxu0 0
      %3202 = vmatprep.subr.bf16.mxu0 0
      %3203 = vmatpush1.bf16.msra.mxu0 0
      %3204 = vmatprep.subr.bf16.mxu0 0
      %3205 = vmatpush1.bf16.msra.mxu0 0
      %3206 = vmatprep.subr.bf16.mxu0 0
      %3207 = vmatpush1.bf16.msra.mxu0 0
      %3208 = vmatprep.subr.bf16.mxu0 0
      %3209 = vmatpush1.bf16.msra.mxu0 0
      %3210 = vmatprep.subr.bf16.mxu0 0
      %3211 = vmatpush1.bf16.msra.mxu0 0
      %3212 = vmatprep.subr.bf16.mxu0 0
      %3213 = vmatpush1.bf16.msra.mxu0 0
      %3214 = vmatprep.subr.bf16.mxu0 0
      %3215 = vmatpush1.bf16.msra.mxu0 0
      %3216 = vmatprep.subr.bf16.mxu0 0
      %3217 = vmatpush1.bf16.msra.mxu0 0
      %3218 = vmatprep.subr.bf16.mxu0 0
      %3219 = vmatpush1.bf16.msra.mxu0 0
      %3220 = vmatprep.subr.bf16.mxu0 0
      %3221 = vmatpush1.bf16.msra.mxu0 0
      %3222 = vmatprep.subr.bf16.mxu0 0
      %3223 = vmatpush1.bf16.msra.mxu0 0
      %3224 = vmatprep.subr.bf16.mxu0 0
      %3225 = vmatpush1.bf16.msra.mxu0 0
      %3226 = vmatprep.subr.bf16.mxu0 0
      %3227 = vmatpush1.bf16.msra.mxu0 0
      %3228 = vmatprep.mubr.bf16.mxu0 0
      %3229 = vmatmul.mubr.bf16.gmra.mrb[0].mxu0 %v2482
      %v3230 = vpop.f32.mrb[0].mxu0
      %v3231 = vadd.f32 0.0, %v3230
      %v3232 = vpop.f32.mrb[0].mxu0
      %v3233 = vpop.f32.mrb[0].mxu0
      %v3234 = vadd.f32 0.0, %v3233
      %v3235 = vpop.f32.mrb[0].mxu0
      %3236 = vmatprep.mubr.bf16.mxu0 0
      %3237 = vmatmul.mubr.bf16.gmra.mrb[0].mxu0 %v2485
      %v3238 = vpop.f32.mrb[0].mxu0
      %v3239 = vadd.f32 0.0, %v3238
      %v3240 = vpop.f32.mrb[0].mxu0
      %v3241 = vpop.f32.mrb[0].mxu0
      %v3242 = vadd.f32 0.0, %v3241
      %v3243 = vpop.f32.mrb[0].mxu0
      %3244 = vmatprep.mubr.bf16.mxu0 0
      %3245 = vmatmul.mubr.bf16.gmra.mrb[0].mxu0 %v2488
      %v3246 = vpop.f32.mrb[0].mxu0
      %v3247 = vadd.f32 0.0, %v3246
      %v3248 = vpop.f32.mrb[0].mxu0
      %v3249 = vpop.f32.mrb[0].mxu0
      %v3250 = vadd.f32 0.0, %v3249
      %v3251 = vpop.f32.mrb[0].mxu0
      %3252 = vmatprep.mubr.bf16.mxu0 0
      %3253 = vmatmul.mubr.bf16.gmra.mrb[0].mxu0 %v2491
      %v3254 = vpop.f32.mrb[0].mxu0
      %v3255 = vadd.f32 0.0, %v3254
      %v3256 = vpop.f32.mrb[0].mxu0
      %v3257 = vpop.f32.mrb[0].mxu0
      %v3258 = vadd.f32 0.0, %v3257
      %v3259 = vpop.f32.mrb[0].mxu0
      %3260 = vmatprep.mubr.bf16.mxu0 0
      %3261 = vmatmul.mubr.bf16.gmra.mrb[0].mxu0 %v2494
      %v3262 = vpop.f32.mrb[0].mxu0
      %v3263 = vadd.f32 0.0, %v3262
      %v3264 = vpop.f32.mrb[0].mxu0
      %v3265 = vpop.f32.mrb[0].mxu0
      %v3266 = vadd.f32 0.0, %v3265
      %v3267 = vpop.f32.mrb[0].mxu0
      %3268 = vmatprep.mubr.bf16.mxu0 0
      %3269 = vmatmul.mubr.bf16.gmra.mrb[0].mxu0 %v2497
      %v3270 = vpop.f32.mrb[0].mxu0
      %v3271 = vadd.f32 0.0, %v3270
      %v3272 = vpop.f32.mrb[0].mxu0
      %v3273 = vpop.f32.mrb[0].mxu0
      %v3274 = vadd.f32 0.0, %v3273
      %v3275 = vpop.f32.mrb[0].mxu0
      %3276 = vmatprep.mubr.bf16.mxu0 0
      %3277 = vmatmul.mubr.bf16.gmra.mrb[0].mxu0 %v2809
      %v3278 = vpop.f32.mrb[0].mxu0
      %v3279 = vadd.f32 0.0, %v3278
      %v3280 = vpop.f32.mrb[0].mxu0
      %v3281 = vpop.f32.mrb[0].mxu0
      %v3282 = vadd.f32 0.0, %v3281
      %v3283 = vpop.f32.mrb[0].mxu0
      %3284 = vmatprep.mubr.bf16.mxu0 0
      %3285 = vmatmul.mubr.bf16.gmra.mrb[0].mxu0 %v3191
      %v3286 = vpop.f32.mrb[0].mxu0
      %v3287 = vadd.f32 0.0, %v3286
      %v3288 = vpop.f32.mrb[0].mxu0
      %v3289 = vpop.f32.mrb[0].mxu0
      %v3290 = vadd.f32 0.0, %v3289
      %v3291 = vpop.f32.mrb[0].mxu0
      %3292 = vdwg.mxu0
      %v3293 = vadd.f32 %v3171, %v3231
      %v3294 = vadd.f32 %v3172, %v3234
      %v3295 = vadd.f32 %v3173, %v3239
      %v3296 = vadd.f32 %v3174, %v3242
      %v3297 = vadd.f32 %v3175, %v3247
      %v3298 = vadd.f32 %v3176, %v3250
      %v3299 = vadd.f32 %v3177, %v3255
      %v3300 = vadd.f32 %v3178, %v3258
      %v3301 = vadd.f32 %v3179, %v3263
      %v3302 = vadd.f32 %v3180, %v3266
      %v3303 = vadd.f32 %v3181, %v3271
      %v3304 = vadd.f32 %v3182, %v3274
      %v3305 = vadd.f32 %v3183, %v3279
      %v3306 = vadd.f32 %v3184, %v3282
      %v3307 = vadd.f32 %v3185, %v3287
      %v3308 = vadd.f32 %v3186, %v3290
      %v3311 = vrot.slane %v2247, 1
      %v3312 = vrot.slane %v2207, 1
      %v3313 = vsel %vm436, %v3311, %v3312
      %v3314 = vrot.slane %v2257, 1
      %v3315 = vsel %vm436, %v3312, %v3314
      %v3318 = vpack.c.bf16 %v3315, %v3313
      %s3319 = scalar_lea.vmem %s3, 28
      %v3320 = vld [vmem:[%s3319] sm:$0xf]
      %v3322 = vsel %vm2349, %v3318, 0
      %v3325 = vsel %vm2374, %v3320, 0
      %3327 = vmatprep.subr.bf16.mxu0 0
      %3328 = vmatpush1.bf16.msra.mxu0 %v3325
      %3329 = vmatprep.subr.bf16.mxu0 0
      %3330 = vmatpush1.bf16.msra.mxu0 0
      %3331 = vmatprep.subr.bf16.mxu0 0
      %3332 = vmatpush1.bf16.msra.mxu0 0
      %3333 = vmatprep.subr.bf16.mxu0 0
      %3334 = vmatpush1.bf16.msra.mxu0 0
      %3335 = vmatprep.subr.bf16.mxu0 0
      %3336 = vmatpush1.bf16.msra.mxu0 0
      %3337 = vmatprep.subr.bf16.mxu0 0
      %3338 = vmatpush1.bf16.msra.mxu0 0
      %3339 = vmatprep.subr.bf16.mxu0 0
      %3340 = vmatpush1.bf16.msra.mxu0 0
      %3341 = vmatprep.subr.bf16.mxu0 0
      %3342 = vmatpush1.bf16.msra.mxu0 0
      %3343 = vmatprep.subr.bf16.mxu0 0
      %3344 = vmatpush1.bf16.msra.mxu0 0
      %3345 = vmatprep.subr.bf16.mxu0 0
      %3346 = vmatpush1.bf16.msra.mxu0 0
      %3347 = vmatprep.subr.bf16.mxu0 0
      %3348 = vmatpush1.bf16.msra.mxu0 0
      %3349 = vmatprep.subr.bf16.mxu0 0
      %3350 = vmatpush1.bf16.msra.mxu0 0
      %3351 = vmatprep.subr.bf16.mxu0 0
      %3352 = vmatpush1.bf16.msra.mxu0 0
      %3353 = vmatprep.subr.bf16.mxu0 0
      %3354 = vmatpush1.bf16.msra.mxu0 0
      %3355 = vmatprep.subr.bf16.mxu0 0
      %3356 = vmatpush1.bf16.msra.mxu0 0
      %3357 = vmatprep.subr.bf16.mxu0 0
      %3358 = vmatpush1.bf16.msra.mxu0 0
      %3359 = vmatprep.mubr.bf16.mxu0 0
      %3360 = vmatmul.mubr.bf16.gmra.mrb[0].mxu0 %v2357
      %v3361 = vpop.f32.mrb[0].mxu0
      %v3362 = vadd.f32 0.0, %v3361
      %v3363 = vpop.f32.mrb[0].mxu0
      %v3364 = vpop.f32.mrb[0].mxu0
      %v3365 = vadd.f32 0.0, %v3364
      %v3366 = vpop.f32.mrb[0].mxu0
      %3367 = vmatprep.mubr.bf16.mxu0 0
      %3368 = vmatmul.mubr.bf16.gmra.mrb[0].mxu0 %v2360
      %v3369 = vpop.f32.mrb[0].mxu0
      %v3370 = vadd.f32 0.0, %v3369
      %v3371 = vpop.f32.mrb[0].mxu0
      %v3372 = vpop.f32.mrb[0].mxu0
      %v3373 = vadd.f32 0.0, %v3372
      %v3374 = vpop.f32.mrb[0].mxu0
      %3375 = vmatprep.mubr.bf16.mxu0 0
      %3376 = vmatmul.mubr.bf16.gmra.mrb[0].mxu0 %v2363
      %v3377 = vpop.f32.mrb[0].mxu0
      %v3378 = vadd.f32 0.0, %v3377
      %v3379 = vpop.f32.mrb[0].mxu0
      %v3380 = vpop.f32.mrb[0].mxu0
      %v3381 = vadd.f32 0.0, %v3380
      %v3382 = vpop.f32.mrb[0].mxu0
      %3383 = vmatprep.mubr.bf16.mxu0 0
      %3384 = vmatmul.mubr.bf16.gmra.mrb[0].mxu0 %v2366
      %v3385 = vpop.f32.mrb[0].mxu0
      %v3386 = vadd.f32 0.0, %v3385
      %v3387 = vpop.f32.mrb[0].mxu0
      %v3388 = vpop.f32.mrb[0].mxu0
      %v3389 = vadd.f32 0.0, %v3388
      %v3390 = vpop.f32.mrb[0].mxu0
      %3391 = vmatprep.mubr.bf16.mxu0 0
      %3392 = vmatmul.mubr.bf16.gmra.mrb[0].mxu0 %v2369
      %v3393 = vpop.f32.mrb[0].mxu0
      %v3394 = vadd.f32 0.0, %v3393
      %v3395 = vpop.f32.mrb[0].mxu0
      %v3396 = vpop.f32.mrb[0].mxu0
      %v3397 = vadd.f32 0.0, %v3396
      %v3398 = vpop.f32.mrb[0].mxu0
      %3399 = vmatprep.mubr.bf16.mxu0 0
      %3400 = vmatmul.mubr.bf16.gmra.mrb[0].mxu0 %v2372
      %v3401 = vpop.f32.mrb[0].mxu0
      %v3402 = vadd.f32 0.0, %v3401
      %v3403 = vpop.f32.mrb[0].mxu0
      %v3404 = vpop.f32.mrb[0].mxu0
      %v3405 = vadd.f32 0.0, %v3404
      %v3406 = vpop.f32.mrb[0].mxu0
      %3407 = vmatprep.mubr.bf16.mxu0 0
      %3408 = vmatmul.mubr.bf16.gmra.mrb[0].mxu0 %v2940
      %v3409 = vpop.f32.mrb[0].mxu0
      %v3410 = vadd.f32 0.0, %v3409
      %v3411 = vpop.f32.mrb[0].mxu0
      %v3412 = vpop.f32.mrb[0].mxu0
      %v3413 = vadd.f32 0.0, %v3412
      %v3414 = vpop.f32.mrb[0].mxu0
      %3415 = vmatprep.mubr.bf16.mxu0 0
      %3416 = vmatmul.mubr.bf16.gmra.mrb[0].mxu0 %v3322
      %v3417 = vpop.f32.mrb[0].mxu0
      %v3418 = vadd.f32 0.0, %v3417
      %v3419 = vpop.f32.mrb[0].mxu0
      %v3420 = vpop.f32.mrb[0].mxu0
      %v3421 = vadd.f32 0.0, %v3420
      %v3422 = vpop.f32.mrb[0].mxu0
      %3423 = vdwg.mxu0
      %v3424 = vadd.f32 %v3293, %v3362
      %v3425 = vadd.f32 %v3294, %v3365
      %v3426 = vadd.f32 %v3295, %v3370
      %v3427 = vadd.f32 %v3296, %v3373
      %v3428 = vadd.f32 %v3297, %v3378
      %v3429 = vadd.f32 %v3298, %v3381
      %v3430 = vadd.f32 %v3299, %v3386
      %v3431 = vadd.f32 %v3300, %v3389
      %v3432 = vadd.f32 %v3301, %v3394
      %v3433 = vadd.f32 %v3302, %v3397
      %v3434 = vadd.f32 %v3303, %v3402
      %v3435 = vadd.f32 %v3304, %v3405
      %v3436 = vadd.f32 %v3305, %v3410
      %v3437 = vadd.f32 %v3306, %v3413
      %v3438 = vadd.f32 %v3307, %v3418
      %v3439 = vadd.f32 %v3308, %v3421
      %v3440 = vrot.slane %v2247, 2
      %v3441 = vrot.slane %v2207, 2
      %v3442 = vsel %vm813, %v3440, %v3441
      %v3443 = vrot.slane %v2257, 2
      %v3444 = vsel %vm813, %v3441, %v3443
      %v3447 = vpack.c.bf16 %v3444, %v3442
      %s3448 = scalar_lea.vmem %s3, 32
      %v3449 = vld [vmem:[%s3448] sm:$0xf]
      %v3451 = vsel %vm2349, %v3447, 0
      %v3454 = vsel %vm2374, %v3449, 0
      %3456 = vmatprep.subr.bf16.mxu0 0
      %3457 = vmatpush1.bf16.msra.mxu0 %v3454
      %3458 = vmatprep.subr.bf16.mxu0 0
      %3459 = vmatpush1.bf16.msra.mxu0 0
      %3460 = vmatprep.subr.bf16.mxu0 0
      %3461 = vmatpush1.bf16.msra.mxu0 0
      %3462 = vmatprep.subr.bf16.mxu0 0
      %3463 = vmatpush1.bf16.msra.mxu0 0
      %3464 = vmatprep.subr.bf16.mxu0 0
      %3465 = vmatpush1.bf16.msra.mxu0 0
      %3466 = vmatprep.subr.bf16.mxu0 0
      %3467 = vmatpush1.bf16.msra.mxu0 0
      %3468 = vmatprep.subr.bf16.mxu0 0
      %3469 = vmatpush1.bf16.msra.mxu0 0
      %3470 = vmatprep.subr.bf16.mxu0 0
      %3471 = vmatpush1.bf16.msra.mxu0 0
      %3472 = vmatprep.subr.bf16.mxu0 0
      %3473 = vmatpush1.bf16.msra.mxu0 0
      %3474 = vmatprep.subr.bf16.mxu0 0
      %3475 = vmatpush1.bf16.msra.mxu0 0
      %3476 = vmatprep.subr.bf16.mxu0 0
      %3477 = vmatpush1.bf16.msra.mxu0 0
      %3478 = vmatprep.subr.bf16.mxu0 0
      %3479 = vmatpush1.bf16.msra.mxu0 0
      %3480 = vmatprep.subr.bf16.mxu0 0
      %3481 = vmatpush1.bf16.msra.mxu0 0
      %3482 = vmatprep.subr.bf16.mxu0 0
      %3483 = vmatpush1.bf16.msra.mxu0 0
      %3484 = vmatprep.subr.bf16.mxu0 0
      %3485 = vmatpush1.bf16.msra.mxu0 0
      %3486 = vmatprep.subr.bf16.mxu0 0
      %3487 = vmatpush1.bf16.msra.mxu0 0
      %3488 = vmatprep.mubr.bf16.mxu0 0
      %3489 = vmatmul.mubr.bf16.gmra.mrb[0].mxu0 %v2672
      %v3490 = vpop.f32.mrb[0].mxu0
      %v3491 = vadd.f32 0.0, %v3490
      %v3492 = vpop.f32.mrb[0].mxu0
      %v3493 = vpop.f32.mrb[0].mxu0
      %v3494 = vadd.f32 0.0, %v3493
      %v3495 = vpop.f32.mrb[0].mxu0
      %3496 = vmatprep.mubr.bf16.mxu0 0
      %3497 = vmatmul.mubr.bf16.gmra.mrb[0].mxu0 %v2675
      %v3498 = vpop.f32.mrb[0].mxu0
      %v3499 = vadd.f32 0.0, %v3498
      %v3500 = vpop.f32.mrb[0].mxu0
      %v3501 = vpop.f32.mrb[0].mxu0
      %v3502 = vadd.f32 0.0, %v3501
      %v3503 = vpop.f32.mrb[0].mxu0
      %3504 = vmatprep.mubr.bf16.mxu0 0
      %3505 = vmatmul.mubr.bf16.gmra.mrb[0].mxu0 %v2678
      %v3506 = vpop.f32.mrb[0].mxu0
      %v3507 = vadd.f32 0.0, %v3506
      %v3508 = vpop.f32.mrb[0].mxu0
      %v3509 = vpop.f32.mrb[0].mxu0
      %v3510 = vadd.f32 0.0, %v3509
      %v3511 = vpop.f32.mrb[0].mxu0
      %3512 = vmatprep.mubr.bf16.mxu0 0
      %3513 = vmatmul.mubr.bf16.gmra.mrb[0].mxu0 %v2681
      %v3514 = vpop.f32.mrb[0].mxu0
      %v3515 = vadd.f32 0.0, %v3514
      %v3516 = vpop.f32.mrb[0].mxu0
      %v3517 = vpop.f32.mrb[0].mxu0
      %v3518 = vadd.f32 0.0, %v3517
      %v3519 = vpop.f32.mrb[0].mxu0
      %3520 = vmatprep.mubr.bf16.mxu0 0
      %3521 = vmatmul.mubr.bf16.gmra.mrb[0].mxu0 %v2684
      %v3522 = vpop.f32.mrb[0].mxu0
      %v3523 = vadd.f32 0.0, %v3522
      %v3524 = vpop.f32.mrb[0].mxu0
      %v3525 = vpop.f32.mrb[0].mxu0
      %v3526 = vadd.f32 0.0, %v3525
      %v3527 = vpop.f32.mrb[0].mxu0
      %3528 = vmatprep.mubr.bf16.mxu0 0
      %3529 = vmatmul.mubr.bf16.gmra.mrb[0].mxu0 %v2687
      %v3530 = vpop.f32.mrb[0].mxu0
      %v3531 = vadd.f32 0.0, %v3530
      %v3532 = vpop.f32.mrb[0].mxu0
      %v3533 = vpop.f32.mrb[0].mxu0
      %v3534 = vadd.f32 0.0, %v3533
      %v3535 = vpop.f32.mrb[0].mxu0
      %3536 = vmatprep.mubr.bf16.mxu0 0
      %3537 = vmatmul.mubr.bf16.gmra.mrb[0].mxu0 %v3069
      %v3538 = vpop.f32.mrb[0].mxu0
      %v3539 = vadd.f32 0.0, %v3538
      %v3540 = vpop.f32.mrb[0].mxu0
      %v3541 = vpop.f32.mrb[0].mxu0
      %v3542 = vadd.f32 0.0, %v3541
      %v3543 = vpop.f32.mrb[0].mxu0
      %3544 = vmatprep.mubr.bf16.mxu0 0
      %3545 = vmatmul.mubr.bf16.gmra.mrb[0].mxu0 %v3451
      %v3546 = vpop.f32.mrb[0].mxu0
      %v3547 = vadd.f32 0.0, %v3546
      %v3548 = vpop.f32.mrb[0].mxu0
      %v3549 = vpop.f32.mrb[0].mxu0
      %v3550 = vadd.f32 0.0, %v3549
      %v3551 = vpop.f32.mrb[0].mxu0
      %3552 = vdwg.mxu0
      %v3553 = vadd.f32 %v3424, %v3491
      %v3554 = vadd.f32 %v3425, %v3494
      %v3555 = vadd.f32 %v3426, %v3499
      %v3556 = vadd.f32 %v3427, %v3502
      %v3557 = vadd.f32 %v3428, %v3507
      %v3558 = vadd.f32 %v3429, %v3510
      %v3559 = vadd.f32 %v3430, %v3515
      %v3560 = vadd.f32 %v3431, %v3518
      %v3561 = vadd.f32 %v3432, %v3523
      %v3562 = vadd.f32 %v3433, %v3526
      %v3563 = vadd.f32 %v3434, %v3531
      %v3564 = vadd.f32 %v3435, %v3534
      %v3565 = vadd.f32 %v3436, %v3539
      %v3566 = vadd.f32 %v3437, %v3542
      %v3567 = vadd.f32 %v3438, %v3547
      %v3568 = vadd.f32 %v3439, %v3550
      %v3569 = vld [vmem:[%s4] sm:$0x1]
      %v3571 = vlaneseq
      %v3572 = vshrl.u32 %v3571, 7
      %v3573 = vsub.s32 0, %v3572
      %v3574 = vrot.slane %v3569, %v3573
      %v3576 = vadd.f32 %v3553, %v3574
      %v3577 = vadd.f32 %v3554, %v3574
      %v3578 = vadd.f32 %v3555, %v3574
      %v3579 = vadd.f32 %v3556, %v3574
      %v3580 = vadd.f32 %v3557, %v3574
      %v3581 = vadd.f32 %v3558, %v3574
      %v3582 = vadd.f32 %v3559, %v3574
      %v3583 = vadd.f32 %v3560, %v3574
      %v3584 = vadd.f32 %v3561, %v3574
      %v3585 = vadd.f32 %v3562, %v3574
      %v3586 = vadd.f32 %v3563, %v3574
      %v3587 = vadd.f32 %v3564, %v3574
      %v3588 = vadd.f32 %v3565, %v3574
      %v3589 = vadd.f32 %v3566, %v3574
      %v3590 = vadd.f32 %v3567, %v3574
      %v3591 = vadd.f32 %v3568, %v3574
      %v3592 = vpack.c.bf16 %v3577, %v3576
      %v3593 = vpack.c.bf16 %v3579, %v3578
      %v3594 = vpack.c.bf16 %v3581, %v3580
      %v3595 = vpack.c.bf16 %v3583, %v3582
      %v3596 = vpack.c.bf16 %v3585, %v3584
      %v3597 = vpack.c.bf16 %v3587, %v3586
      %v3598 = vpack.c.bf16 %v3589, %v3588
      %v3599 = vpack.c.bf16 %v3591, %v3590
      %v3608 = vunpack.c.l.b16 %v3592
      %v3609 = vunpack.c.h.b16 %v3592
      %v3610 = vunpack.c.l.b16 %v3593
      %v3611 = vunpack.c.h.b16 %v3593
      %v3612 = vunpack.c.l.b16 %v3594
      %v3613 = vunpack.c.h.b16 %v3594
      %v3614 = vunpack.c.l.b16 %v3595
      %v3615 = vunpack.c.h.b16 %v3595
      %v3616 = vunpack.c.l.b16 %v3596
      %v3617 = vunpack.c.h.b16 %v3596
      %v3618 = vunpack.c.l.b16 %v3597
      %v3619 = vunpack.c.h.b16 %v3597
      %v3620 = vunpack.c.l.b16 %v3598
      %v3621 = vunpack.c.h.b16 %v3598
      %v3622 = vunpack.c.l.b16 %v3599
      %v3623 = vunpack.c.h.b16 %v3599
      %v3624 = vpack.c.b16 %v3608, %v3608
      %v3625 = vpack.c.b16 %v3609, %v3609
      %v3626 = vpack.c.b16 %v3610, %v3610
      %v3627 = vpack.c.b16 %v3611, %v3611
      %v3628 = vpack.c.b16 %v3612, %v3612
      %v3629 = vpack.c.b16 %v3613, %v3613
      %v3630 = vpack.c.b16 %v3614, %v3614
      %v3631 = vpack.c.b16 %v3615, %v3615
      %v3632 = vpack.c.b16 %v3616, %v3616
      %v3633 = vpack.c.b16 %v3617, %v3617
      %v3634 = vpack.c.b16 %v3618, %v3618
      %v3635 = vpack.c.b16 %v3619, %v3619
      %v3636 = vpack.c.b16 %v3620, %v3620
      %v3637 = vpack.c.b16 %v3621, %v3621
      %v3638 = vpack.c.b16 %v3622, %v3622
      %v3639 = vpack.c.b16 %v3623, %v3623
      %3656 = vst.msk [vmem:[%s353] sm:$0xf] %vm2039, %v3624
      %3657 = vst.msk [vmem:[%s353 + $0x4] sm:$0xf] %vm2039, %v3625
      %3658 = vst.msk [vmem:[%s353 + $0x8] sm:$0xf] %vm2039, %v3626
      %3659 = vst.msk [vmem:[%s353 + $0xc] sm:$0xf] %vm2039, %v3627
      %3660 = vst.msk [vmem:[%s353 + $0x10] sm:$0xf] %vm2039, %v3628
      %3661 = vst.msk [vmem:[%s353 + $0x14] sm:$0xf] %vm2039, %v3629
      %3662 = vst.msk [vmem:[%s353 + $0x18] sm:$0xf] %vm2039, %v3630
      %3663 = vst.msk [vmem:[%s353 + $0x1c] sm:$0xf] %vm2039, %v3631
      %3664 = vst.msk [vmem:[%s353 + $0x20] sm:$0xf] %vm2039, %v3632
      %3665 = vst.msk [vmem:[%s353 + $0x24] sm:$0xf] %vm2039, %v3633
      %3666 = vst.msk [vmem:[%s353 + $0x28] sm:$0xf] %vm2039, %v3634
      %3667 = vst.msk [vmem:[%s353 + $0x2c] sm:$0xf] %vm2039, %v3635
      %3668 = vst.msk [vmem:[%s353 + $0x30] sm:$0xf] %vm2039, %v3636
      %3669 = vst.msk [vmem:[%s353 + $0x34] sm:$0xf] %vm2039, %v3637
      %3670 = vst.msk [vmem:[%s353 + $0x38] sm:$0xf] %vm2039, %v3638
      %3671 = vst.msk [vmem:[%s353 + $0x3c] sm:$0xf] %vm2039, %v3639
      %3672 = vst.msk [vmem:[%s331] sm:$0xff] %vm2349, %v3576
      %3673 = vst.msk [vmem:[%s331 + $0x8] sm:$0xff] %vm2349, %v3577
      %3674 = vst.msk [vmem:[%s331 + $0x10] sm:$0xff] %vm2349, %v3578
      %3675 = vst.msk [vmem:[%s331 + $0x18] sm:$0xff] %vm2349, %v3579
      %3676 = vst.msk [vmem:[%s331 + $0x20] sm:$0xff] %vm2349, %v3580
      %3677 = vst.msk [vmem:[%s331 + $0x28] sm:$0xff] %vm2349, %v3581
      %3678 = vst.msk [vmem:[%s331 + $0x30] sm:$0xff] %vm2349, %v3582
      %3679 = vst.msk [vmem:[%s331 + $0x38] sm:$0xff] %vm2349, %v3583
      %3680 = vst.msk [vmem:[%s331 + $0x40] sm:$0xff] %vm2349, %v3584
      %3681 = vst.msk [vmem:[%s331 + $0x48] sm:$0xff] %vm2349, %v3585
      %3682 = vst.msk [vmem:[%s331 + $0x50] sm:$0xff] %vm2349, %v3586
      %3683 = vst.msk [vmem:[%s331 + $0x58] sm:$0xff] %vm2349, %v3587
      %3684 = vst.msk [vmem:[%s331 + $0x60] sm:$0xff] %vm2349, %v3588
      %3685 = vst.msk [vmem:[%s331 + $0x68] sm:$0xff] %vm2349, %v3589
      %3686 = vst.msk [vmem:[%s331 + $0x70] sm:$0xff] %vm2349, %v3590
      %3687 = vst.msk [vmem:[%s331 + $0x78] sm:$0xff] %vm2349, %v3591
      %s3688 = smul.u32 8, %s24
      %p3689 = scmp.lt.s32.totalorder %s23, 1
      %s3690 = scalar_select %p3689, %s23, 1
      %p3691 = scmp.lt.s32.totalorder %s3688, 15
      %s3692 = scalar_select %p3691, %s3688, 15
      %s3693 = smul.addr %s3692, 2
      %s3694 = smul.addr %s3690, 32
      %s3695 = sadd.s32 %s3693, %s3694
      %s3696 = smul.addr %s3695, 8
      %s3697 = scalar_lea.vmem %s5, %s3696
      %s3698 = smul.u32 8, %s24
      %p3699 = scmp.lt.s32.totalorder %s23, 1
      %s3700 = scalar_select %p3699, %s23, 1
      %p3701 = scmp.lt.s32.totalorder %s3698, 15
      %s3702 = scalar_select %p3701, %s3698, 15
      %s3703 = smul.addr %s3702, 2
      %s3704 = smul.addr %s3700, 32
      %s3705 = sadd.s32 %s3703, %s3704
      %s3706 = smul.addr %s3705, 4
      %s3707 = scalar_lea.vmem %s6, %s3706
      %s3708 = smul.u32 8, %s24
      %p3709 = scmp.lt.s32.totalorder %s23, 1
      %s3710 = scalar_select %p3709, %s23, 1
      %p3711 = scmp.lt.s32.totalorder %s3708, 15
      %s3712 = scalar_select %p3711, %s3708, 15
      %s3713 = smul.addr %s3712, 2
      %s3714 = smul.addr %s3710, 32
      %s3715 = sadd.s32 %s3713, %s3714
      %s3716 = smul.addr %s3715, 4
      %s3717 = scalar_lea.vmem %s7, %s3716
      // Predicated region
      $region41: #{_record_forward.1} parent=39 // pred_check
        %p3718 = pneg %p161
      $region42: #{_record_forward.1} parent=39 // pred_check_branch
        %3720 = sbr.rel (%p3718) target = $region44
      $region43: #{_record_forward.1} parent=39 // pred_region
        %s3721 = smul.u32 8, %s24
      $region44: #{_record_forward.1} parent=39 // pred_fallthru
        _
      // Predicated region
      $region45: #{_record_forward.1} parent=39 // pred_check
        %p3722 = pneg %p189
      $region46: #{_record_forward.1} parent=39 // pred_check_branch
        %3724 = sbr.rel (%p3722) target = $region48
      $region47: #{_record_forward.1} parent=39 // pred_region
        %s3725 = smul.u32 8, %s24
      $region48: #{_record_forward.1} parent=39 // pred_fallthru
        _
      // Predicated region
      $region49: #{_record_forward.1} parent=39 // pred_check
        %p3726 = pneg %p217
      $region50: #{_record_forward.1} parent=39 // pred_check_branch
        %3728 = sbr.rel (%p3726) target = $region52
      $region51: #{_record_forward.1} parent=39 // pred_region
        %s3729 = smul.u32 8, %s24
      $region52: #{_record_forward.1} parent=39 // pred_fallthru
        _
    $region40: #{_record_forward.1} parent=5 // pred_fallthru
      _
    %p3730 = scmp.le.s32.totalorder 2, %s14
    // Predicated region
    $region53: #{_record_forward.1} parent=5 // pred_check
      %p3731 = pneg %p3730
    $region54: #{_record_forward.1} parent=5 // pred_check_branch
      %3733 = sbr.rel (%p3731) target = $region56
    $region55: #{_record_forward.1} parent=5 // pred_region
      %s3734 = ssub.s32 %s14, 2
      // Predicated region
      $region57: #{_record_forward.1} parent=55 // pred_check
        %p3735 = pneg %p167
      $region58: #{_record_forward.1} parent=55 // pred_check_branch
        %3737 = sbr.rel (%p3735) target = $region60
      $region59: #{_record_forward.1} parent=55 // pred_region
        %s3738 = smul.u32 8, %s26
        %p3739 = scmp.lt.s32.totalorder %s25, 1
        %s3740 = scalar_select %p3739, %s25, 1
        %p3741 = scmp.lt.s32.totalorder %s3738, 15
        %s3742 = scalar_select %p3741, %s3738, 15
        %s3743 = smul.addr %s3742, 2
        %s3744 = smul.addr %s3740, 32
        %s3745 = sadd.s32 %s3743, %s3744
        %s3746 = smul.addr %s3745, 8
        %s3747 = scalar_lea.vmem %s5, %s3746
      $region60: #{_record_forward.1} parent=55 // pred_fallthru
        _
      // Predicated region
      $region61: #{_record_forward.1} parent=55 // pred_check
        %p3748 = pneg %p195
      $region62: #{_record_forward.1} parent=55 // pred_check_branch
        %3750 = sbr.rel (%p3748) target = $region64
      $region63: #{_record_forward.1} parent=55 // pred_region
        %s3751 = smul.u32 8, %s26
        %p3752 = scmp.lt.s32.totalorder %s25, 1
        %s3753 = scalar_select %p3752, %s25, 1
        %p3754 = scmp.lt.s32.totalorder %s3751, 15
        %s3755 = scalar_select %p3754, %s3751, 15
        %s3756 = smul.addr %s3755, 2
        %s3757 = smul.addr %s3753, 32
        %s3758 = sadd.s32 %s3756, %s3757
        %s3759 = smul.addr %s3758, 4
        %s3760 = scalar_lea.vmem %s6, %s3759
      $region64: #{_record_forward.1} parent=55 // pred_fallthru
        _
      // Predicated region
      $region65: #{_record_forward.1} parent=55 // pred_check
        %p3761 = pneg %p223
      $region66: #{_record_forward.1} parent=55 // pred_check_branch
        %3763 = sbr.rel (%p3761) target = $region68
      $region67: #{_record_forward.1} parent=55 // pred_region
        %s3764 = smul.u32 8, %s26
        %p3765 = scmp.lt.s32.totalorder %s25, 1
        %s3766 = scalar_select %p3765, %s25, 1
        %p3767 = scmp.lt.s32.totalorder %s3764, 15
        %s3768 = scalar_select %p3767, %s3764, 15
        %s3769 = smul.addr %s3768, 2
        %s3770 = smul.addr %s3766, 32
        %s3771 = sadd.s32 %s3769, %s3770
        %s3772 = smul.addr %s3771, 4
        %s3773 = scalar_lea.vmem %s7, %s3772
      $region68: #{_record_forward.1} parent=55 // pred_fallthru
        _
    $region56: #{_record_forward.1} parent=5 // pred_fallthru
      _
  $region6: #{_record_forward.1} parent=0 // loop_footer
    %s18 = sadd.s32 1, %s14
  $region7: #{_record_forward.1} parent=0 // loop_footer_branch
    %13 = sbr.rel target = $region3
  $region8: #{_record_forward.1} parent=0 // loop_exit
    _

</llo_original>
